<compile_context>
chip_gen: v7x
topology: tpu7x:2x2x1
jax: 0.10.0
libtpu: 0.0.40
codegen_flags: <defaults>
</compile_context>

<pallas_src>
import functools

import jax
import jax.numpy as jnp
from jax.experimental import pallas as pl
from jax.experimental.pallas import tpu as pltpu

# ----------------------------- tiny-BERT config ------------------------------
VOCAB = 100
VOCAB_PAD = 104            # vocab rows padded to a multiple of 8 (sublane aligned)
TYPE_VOCAB = 2
MAX_POS = 32
HIDDEN = 32
HEADS = 4
HEAD_DIM = HIDDEN // HEADS
INTERMEDIATE = 64
LAYERS = 2
N_CLASSES = 3
LN_EPS = 1e-12

# --- "vector table" row layout: one padded 128-lane row per small vector -----
VEC_W = 128
ROW_EMB_G, ROW_EMB_B = 0, 1
ROWS_PER_LAYER = 8
R_BQKV, R_BO, R_LN1G, R_LN1B, R_BI, R_BF, R_LN2G, R_LN2B = range(ROWS_PER_LAYER)
ROW_BP = 2 + LAYERS * ROWS_PER_LAYER
ROW_BOUT = ROW_BP + 1
N_VEC_ROWS = ROW_BOUT + 1

# --- per-layer 32-row weight slab lane layout: [ wqkv | wo | wi ] -------------
W32_QKV = 0
W32_WO = 3 * HIDDEN
W32_WI = 4 * HIDDEN
W32_LANES = 4 * HIDDEN + INTERMEDIATE            # 192


# ------------------------------ fused Pallas kernel --------------------------
def _layernorm(x, g, b):
    mu = jnp.mean(x, axis=-1, keepdims=True)
    var = jnp.mean((x - mu) ** 2, axis=-1, keepdims=True)
    return (x - mu) * jax.lax.rsqrt(var + LN_EPS) * g + b


def _fused_classifier_kernel(ids_ref, mask_ref, tab_ref, w32_ref, wf_ref,
                             whead_ref, vec_ref, o_ref, *, batch, seq):
    """Whole SentimentClassifier forward (embeddings -> 2 encoder layers -> pooler ->
    classifier) in one VMEM-resident kernel invocation."""
    B, S = batch, seq
    N = B * S
    f32 = jnp.float32
    scale = 1.0 / (HEAD_DIM ** 0.5)

    def vrow(l, r, width):                       # per-layer small vector
        return vec_ref[2 + l * ROWS_PER_LAYER + r, :, 0:width]      # (1, width)

    def vglob(row, width):                       # global small vector
        return vec_ref[row, :, 0:width]

    # ---- embeddings: one_hot(ids) @ word_emb (single MXU op) + (pos + type0) ----
    ids = ids_ref[...]                                              # (N, 1) int32
    onehot = (ids == jax.lax.broadcasted_iota(jnp.int32, (N, VOCAB_PAD), 1)).astype(f32)
    word = jnp.dot(onehot, tab_ref[0:VOCAB_PAD, :], preferred_element_type=f32)  # (N, H)
    pos_type = tab_ref[VOCAB_PAD:VOCAB_PAD + S, :]                  # (S, HIDDEN)
    emb = (word.reshape(B, S, HIDDEN) + pos_type).reshape(N, HIDDEN)
    x = _layernorm(emb, vglob(ROW_EMB_G, HIDDEN), vglob(ROW_EMB_B, HIDDEN))

    # ---- attention-mask bias, built once for all layers/heads: (HEADS*B, S, S) ----
    bias = (1.0 - mask_ref[...].astype(f32)) * -10000.0             # (B, S)
    bias_hb = jnp.broadcast_to(bias[None, :, None, :],
                               (HEADS, B, S, S)).reshape(HEADS * B, S, S)

    for l in range(LAYERS):                                         # static unroll
        # ---- fused QKV projection: one (N,32)@(32,96) matmul + one bias add ----
        qkv = (jnp.dot(x, w32_ref[l, :, W32_QKV:W32_QKV + 3 * HIDDEN],
                       preferred_element_type=f32)
               + vrow(l, R_BQKV, 3 * HIDDEN))                        # (N, 96)

        def split_heads(off):
            # lane block at `off` of qkv -> (HEADS*B, S, HEAD_DIM), head-major batch
            return jnp.concatenate(
                [qkv[:, off + h * HEAD_DIM: off + (h + 1) * HEAD_DIM]
                 for h in range(HEADS)], axis=0).reshape(HEADS * B, S, HEAD_DIM)

        q = split_heads(0)
        k = split_heads(HIDDEN)
        v = split_heads(2 * HIDDEN)

        # ---- attention, heads folded into the batch dim (two batched einsums) ----
        s = jnp.einsum("nqd,nkd->nqk", q, k, preferred_element_type=f32) * scale
        s = s + bias_hb
        m = jnp.max(s, axis=-1, keepdims=True)
        e = jnp.exp(s - m)
        p = e * pl.reciprocal(jnp.sum(e, axis=-1, keepdims=True), approx=True)
        ctx = jnp.einsum("nqk,nkd->nqd", p, v, preferred_element_type=f32)  # (H*B,S,Dh)

        # merge heads back onto lanes -> (N, HIDDEN), then ONE Wo matmul
        ctx_h = ctx.reshape(HEADS, N, HEAD_DIM)
        ctx_m = jnp.concatenate([ctx_h[h] for h in range(HEADS)], axis=-1)
        attn = (jnp.dot(ctx_m, w32_ref[l, :, W32_WO:W32_WO + HIDDEN],
                        preferred_element_type=f32) + vrow(l, R_BO, HIDDEN))
        x = _layernorm(attn + x, vrow(l, R_LN1G, HIDDEN), vrow(l, R_LN1B, HIDDEN))

        # ---- feed-forward ----
        inter = (jnp.dot(x, w32_ref[l, :, W32_WI:W32_WI + INTERMEDIATE],
                         preferred_element_type=f32) + vrow(l, R_BI, INTERMEDIATE))
        # TODO(synk): HF BERT uses exact erf-GELU; tanh approximation used here.
        inter = jax.nn.gelu(inter, approximate=True)
        ffn = jnp.dot(inter, wf_ref[l], preferred_element_type=f32) + vrow(l, R_BF, HIDDEN)
        x = _layernorm(ffn + x, vrow(l, R_LN2G, HIDDEN), vrow(l, R_LN2B, HIDDEN))

    # ---- pooler -> dropout(identity, eval) -> classifier ----
    cls = x.reshape(B, S, HIDDEN)[:, 0, :]                           # [CLS] rows, (B, H)
    pooled = jnp.tanh(jnp.dot(cls, whead_ref[:, 0:HIDDEN],
                              preferred_element_type=f32) + vglob(ROW_BP, HIDDEN))
    # nn.Dropout(p=0.3) is identity in eval-mode inference.
    logits = (jnp.dot(pooled, whead_ref[:, HIDDEN:HIDDEN + N_CLASSES],
                      preferred_element_type=f32) + vglob(ROW_BOUT, N_CLASSES))
    o_ref[...] = logits.astype(o_ref.dtype)


# --------------------- one-time host-side weight packing ----------------------
def pack_params(params):
    """Runs ONCE at model setup (outside the jitted per-call path)."""
    layers = params["layers"]

    # Embedding tables: padded word table stacked with (pos_emb + type_emb[segment 0]).
    word = jnp.pad(params["word_emb"], ((0, VOCAB_PAD - VOCAB), (0, 0)))
    pos_type = params["pos_emb"] + params["type_emb"][0][None, :]
    tab = jnp.concatenate([word, pos_type], axis=0)          # (VOCAB_PAD + MAX_POS, H)

    def layer_w32(lyr):                                      # (HIDDEN, 192)
        return jnp.concatenate([lyr["wq"], lyr["wk"], lyr["wv"], lyr["wo"], lyr["wi"]],
                               axis=1)

    w32 = jnp.stack([layer_w32(lyr) for lyr in layers])      # (L, HIDDEN, 192)
    wf = jnp.stack([lyr["wf"] for lyr in layers])            # (L, INTERMEDIATE, HIDDEN)
    whead = jnp.concatenate([params["wp"], params["w_out"]], axis=1)  # (H, H + n_cls)

    def row(v):
        return jnp.pad(v.astype(jnp.float32), (0, VEC_W - v.shape[0]))

    rows = [row(params["emb_ln_g"]), row(params["emb_ln_b"])]
    for lyr in layers:
        rows += [row(jnp.concatenate([lyr["bq"], lyr["bk"], lyr["bv"]])),
                 row(lyr["bo"]), row(lyr["ln1_g"]), row(lyr["ln1_b"]),
                 row(lyr["bi"]), row(lyr["bf"]), row(lyr["ln2_g"]), row(lyr["ln2_b"])]
    rows += [row(params["bp"]), row(params["b_out"])]
    vec = jnp.stack(rows).reshape(N_VEC_ROWS, 1, VEC_W)      # (20, 1, 128)

    return dict(tab=tab, w32=w32, wf=wf, whead=whead, vec=vec)


# ------------------------------- model forward --------------------------------
def sentiment_classifier_forward(packed, input_ids, attention_mask):
    B, S = input_ids.shape
    ids = input_ids.reshape(B * S, 1).astype(jnp.int32)      # tiny layout prep only
    mask = attention_mask.astype(jnp.int32)

    kernel = functools.partial(_fused_classifier_kernel, batch=B, seq=S)
    return pl.pallas_call(
        kernel,
        out_shape=jax.ShapeDtypeStruct((B, N_CLASSES), jnp.float32),
        in_specs=[pl.BlockSpec(memory_space=pltpu.MemorySpace.VMEM)] * 7,
        out_specs=pl.BlockSpec(memory_space=pltpu.MemorySpace.VMEM),
    )(ids, mask, packed["tab"], packed["w32"], packed["wf"],
      packed["whead"], packed["vec"])


# ------------------------------ deterministic init ----------------------------
def init_params(key):
    keys = iter(jax.random.split(key, 64))

    def nrm(shape, scale=0.02):
        return (scale * jax.random.normal(next(keys), shape)).astype(jnp.float32)

    def zeros(shape):
        return jnp.zeros(shape, jnp.float32)

    def ones(shape):
        return jnp.ones(shape, jnp.float32)

    params = {
        "word_emb": nrm((VOCAB, HIDDEN)),
        "pos_emb": nrm((MAX_POS, HIDDEN)),
        "type_emb": nrm((TYPE_VOCAB, HIDDEN)),
        "emb_ln_g": ones((HIDDEN,)),
        "emb_ln_b": zeros((HIDDEN,)),
        "layers": [],
        "wp": nrm((HIDDEN, HIDDEN)),
        "bp": zeros((HIDDEN,)),
        "w_out": nrm((HIDDEN, N_CLASSES)),
        "b_out": zeros((N_CLASSES,)),
    }
    for _ in range(LAYERS):
        params["layers"].append({
            "wq": nrm((HIDDEN, HIDDEN)), "bq": zeros((HIDDEN,)),
            "wk": nrm((HIDDEN, HIDDEN)), "bk": zeros((HIDDEN,)),
            "wv": nrm((HIDDEN, HIDDEN)), "bv": zeros((HIDDEN,)),
            "wo": nrm((HIDDEN, HIDDEN)), "bo": zeros((HIDDEN,)),
            "ln1_g": ones((HIDDEN,)), "ln1_b": zeros((HIDDEN,)),
            "wi": nrm((HIDDEN, INTERMEDIATE)), "bi": zeros((INTERMEDIATE,)),
            "wf": nrm((INTERMEDIATE, HIDDEN)), "bf": zeros((HIDDEN,)),
            "ln2_g": ones((HIDDEN,)), "ln2_b": zeros((HIDDEN,)),
        })
    return params


# ------------------------------------ main ------------------------------------
if __name__ == "__main__":
    root = jax.random.PRNGKey(0)
    k_param, k_ids = jax.random.split(root)

    params = init_params(k_param)
    packed = pack_params(params)          # one-time packing, outside the jitted path

    B, S = 2, 8
    input_ids = jax.random.randint(k_ids, (B, S), 0, VOCAB, dtype=jnp.int32)
    attention_mask = jnp.array(
        [[1, 1, 1, 1, 1, 1, 1, 1],
         [1, 1, 1, 1, 1, 0, 0, 0]], dtype=jnp.int32
    )

    fwd = jax.jit(sentiment_classifier_forward)
    logits = jax.block_until_ready(fwd(packed, input_ids, attention_mask))
    assert logits.shape == (B, N_CLASSES) and logits.dtype == jnp.float32
    print("KERNEL_OK")
</pallas_src>

<mosaic_0001>
module attributes {stable_mosaic.version = 11 : i64} {
  func.func @_fused_classifier_kernel(%arg0: memref<16x1xi32, #tpu.memory_space<vmem>>, %arg1: memref<2x8xi32, #tpu.memory_space<vmem>>, %arg2: memref<136x32xf32, #tpu.memory_space<vmem>>, %arg3: memref<2x32x192xf32, #tpu.memory_space<vmem>>, %arg4: memref<2x64x32xf32, #tpu.memory_space<vmem>>, %arg5: memref<32x35xf32, #tpu.memory_space<vmem>>, %arg6: memref<20x1x128xf32, #tpu.memory_space<vmem>>, %arg7: memref<2x3xf32, #tpu.memory_space<vmem>>) attributes {dimension_semantics = [], scalar_prefetch = 0 : i64, scratch_operands = 0 : i64, tpu.core_type = #tpu.core_type<tc>} {
    %c0 = arith.constant 0 : index
    %c0_0 = arith.constant 0 : index
    %0 = vector.load %arg0[%c0, %c0_0] : memref<16x1xi32, #tpu.memory_space<vmem>>, vector<16x1xi32>
    %1 = tpu.iota {dimensions = array<i32: 1>} : vector<16x104xi32>
    %2 = vector.broadcast %0 : vector<16x1xi32> to vector<16x104xi32>
    %3 = arith.cmpi eq, %2, %1 : vector<16x104xi32>
    %4 = arith.extui %3 : vector<16x104xi1> to vector<16x104xi32>
    %5 = arith.sitofp %4 : vector<16x104xi32> to vector<16x104xf32>
    %c0_1 = arith.constant 0 : index
    %c0_2 = arith.constant 0 : index
    %6 = vector.load %arg2[%c0_1, %c0_2] : memref<136x32xf32, #tpu.memory_space<vmem>>, vector<104x32xf32>
    %cst = arith.constant dense<0.000000e+00> : vector<16x32xf32>
    %7 = tpu.matmul %5, %6, %cst {dimension_numbers = #tpu.dot_dimension_numbers<[1], [0], [0], [1], [0, 0, 1, 1], [], []>} : vector<16x104xf32>, vector<104x32xf32>, vector<16x32xf32> -> vector<16x32xf32>
    %c104 = arith.constant 104 : index
    %c0_3 = arith.constant 0 : index
    %8 = vector.load %arg2[%c104, %c0_3] : memref<136x32xf32, #tpu.memory_space<vmem>>, vector<8x32xf32>
    %9 = vector.shape_cast %7 : vector<16x32xf32> to vector<2x8x32xf32>
    %10 = vector.shape_cast %8 : vector<8x32xf32> to vector<1x8x32xf32>
    %11 = vector.broadcast %10 : vector<1x8x32xf32> to vector<2x8x32xf32>
    %12 = arith.addf %9, %11 : vector<2x8x32xf32>
    %13 = vector.shape_cast %12 : vector<2x8x32xf32> to vector<16x32xf32>
    %c0_4 = arith.constant 0 : index
    %c0_5 = arith.constant 0 : index
    %c0_6 = arith.constant 0 : index
    %14 = vector.load %arg6[%c0_4, %c0_5, %c0_6] : memref<20x1x128xf32, #tpu.memory_space<vmem>>, vector<1x1x32xf32>
    %15 = vector.shape_cast %14 : vector<1x1x32xf32> to vector<1x32xf32>
    %c1 = arith.constant 1 : index
    %c0_7 = arith.constant 0 : index
    %c0_8 = arith.constant 0 : index
    %16 = vector.load %arg6[%c1, %c0_7, %c0_8] : memref<20x1x128xf32, #tpu.memory_space<vmem>>, vector<1x1x32xf32>
    %17 = vector.shape_cast %16 : vector<1x1x32xf32> to vector<1x32xf32>
    %cst_9 = arith.constant dense<0.000000e+00> : vector<16xf32>
    %18 = vector.multi_reduction <add>, %13, %cst_9 [1] : vector<16x32xf32> to vector<16xf32>
    %19 = vector.shape_cast %18 : vector<16xf32> to vector<16x1xf32>
    %cst_10 = arith.constant 3.200000e+01 : f32
    %20 = vector.broadcast %cst_10 : f32 to vector<16x1xf32>
    %21 = arith.divf %19, %20 : vector<16x1xf32>
    %22 = vector.broadcast %21 : vector<16x1xf32> to vector<16x32xf32>
    %23 = arith.subf %13, %22 : vector<16x32xf32>
    %24 = arith.mulf %23, %23 : vector<16x32xf32>
    %cst_11 = arith.constant dense<0.000000e+00> : vector<16xf32>
    %25 = vector.multi_reduction <add>, %24, %cst_11 [1] : vector<16x32xf32> to vector<16xf32>
    %26 = vector.shape_cast %25 : vector<16xf32> to vector<16x1xf32>
    %cst_12 = arith.constant 3.200000e+01 : f32
    %27 = vector.broadcast %cst_12 : f32 to vector<16x1xf32>
    %28 = arith.divf %26, %27 : vector<16x1xf32>
    %29 = vector.broadcast %21 : vector<16x1xf32> to vector<16x32xf32>
    %30 = arith.subf %13, %29 : vector<16x32xf32>
    %cst_13 = arith.constant 9.99999996E-13 : f32
    %31 = vector.broadcast %cst_13 : f32 to vector<16x1xf32>
    %32 = arith.addf %28, %31 : vector<16x1xf32>
    %33 = math.rsqrt %32 : vector<16x1xf32>
    %34 = vector.broadcast %33 : vector<16x1xf32> to vector<16x32xf32>
    %35 = arith.mulf %30, %34 : vector<16x32xf32>
    %36 = vector.broadcast %15 : vector<1x32xf32> to vector<16x32xf32>
    %37 = arith.mulf %35, %36 : vector<16x32xf32>
    %38 = vector.broadcast %17 : vector<1x32xf32> to vector<16x32xf32>
    %39 = arith.addf %37, %38 : vector<16x32xf32>
    %c0_14 = arith.constant 0 : index
    %c0_15 = arith.constant 0 : index
    %40 = vector.load %arg1[%c0_14, %c0_15] : memref<2x8xi32, #tpu.memory_space<vmem>>, vector<2x8xi32>
    %41 = arith.sitofp %40 : vector<2x8xi32> to vector<2x8xf32>
    %cst_16 = arith.constant 1.000000e+00 : f32
    %42 = vector.broadcast %cst_16 : f32 to vector<2x8xf32>
    %43 = arith.subf %42, %41 : vector<2x8xf32>
    %cst_17 = arith.constant -1.000000e+04 : f32
    %44 = vector.broadcast %cst_17 : f32 to vector<2x8xf32>
    %45 = arith.mulf %43, %44 : vector<2x8xf32>
    %46 = vector.shape_cast %45 : vector<2x8xf32> to vector<1x2x1x8xf32>
    %47 = vector.shape_cast %46 : vector<1x2x1x8xf32> to vector<1x2x1x8xf32>
    %48 = vector.broadcast %47 : vector<1x2x1x8xf32> to vector<4x2x8x8xf32>
    %49 = vector.shape_cast %48 : vector<4x2x8x8xf32> to vector<8x8x8xf32>
    %c0_18 = arith.constant 0 : index
    %c0_19 = arith.constant 0 : index
    %c0_20 = arith.constant 0 : index
    %50 = vector.load %arg3[%c0_18, %c0_19, %c0_20] : memref<2x32x192xf32, #tpu.memory_space<vmem>>, vector<1x32x96xf32>
    %51 = vector.shape_cast %50 : vector<1x32x96xf32> to vector<32x96xf32>
    %cst_21 = arith.constant dense<0.000000e+00> : vector<16x96xf32>
    %52 = tpu.matmul %39, %51, %cst_21 {dimension_numbers = #tpu.dot_dimension_numbers<[1], [0], [0], [1], [0, 0, 1, 1], [], []>} : vector<16x32xf32>, vector<32x96xf32>, vector<16x96xf32> -> vector<16x96xf32>
    %c2 = arith.constant 2 : index
    %c0_22 = arith.constant 0 : index
    %c0_23 = arith.constant 0 : index
    %53 = vector.load %arg6[%c2, %c0_22, %c0_23] : memref<20x1x128xf32, #tpu.memory_space<vmem>>, vector<1x1x96xf32>
    %54 = vector.shape_cast %53 : vector<1x1x96xf32> to vector<1x96xf32>
    %55 = vector.broadcast %54 : vector<1x96xf32> to vector<16x96xf32>
    %56 = arith.addf %52, %55 : vector<16x96xf32>
    %57 = vector.extract_strided_slice %56 {offsets = [0, 0], sizes = [16, 8], strides = [1, 1]} : vector<16x96xf32> to vector<16x8xf32>
    %58 = vector.extract_strided_slice %56 {offsets = [0, 8], sizes = [16, 8], strides = [1, 1]} : vector<16x96xf32> to vector<16x8xf32>
    %59 = vector.extract_strided_slice %56 {offsets = [0, 16], sizes = [16, 8], strides = [1, 1]} : vector<16x96xf32> to vector<16x8xf32>
    %60 = vector.extract_strided_slice %56 {offsets = [0, 24], sizes = [16, 8], strides = [1, 1]} : vector<16x96xf32> to vector<16x8xf32>
    %61 = tpu.concatenate %57, %58, %59, %60 in 0 : vector<16x8xf32>, vector<16x8xf32>, vector<16x8xf32>, vector<16x8xf32> -> vector<64x8xf32>
    %62 = vector.shape_cast %61 : vector<64x8xf32> to vector<8x8x8xf32>
    %63 = vector.extract_strided_slice %56 {offsets = [0, 32], sizes = [16, 8], strides = [1, 1]} : vector<16x96xf32> to vector<16x8xf32>
    %64 = vector.extract_strided_slice %56 {offsets = [0, 40], sizes = [16, 8], strides = [1, 1]} : vector<16x96xf32> to vector<16x8xf32>
    %65 = vector.extract_strided_slice %56 {offsets = [0, 48], sizes = [16, 8], strides = [1, 1]} : vector<16x96xf32> to vector<16x8xf32>
    %66 = vector.extract_strided_slice %56 {offsets = [0, 56], sizes = [16, 8], strides = [1, 1]} : vector<16x96xf32> to vector<16x8xf32>
    %67 = tpu.concatenate %63, %64, %65, %66 in 0 : vector<16x8xf32>, vector<16x8xf32>, vector<16x8xf32>, vector<16x8xf32> -> vector<64x8xf32>
    %68 = vector.shape_cast %67 : vector<64x8xf32> to vector<8x8x8xf32>
    %69 = vector.extract_strided_slice %56 {offsets = [0, 64], sizes = [16, 8], strides = [1, 1]} : vector<16x96xf32> to vector<16x8xf32>
    %70 = vector.extract_strided_slice %56 {offsets = [0, 72], sizes = [16, 8], strides = [1, 1]} : vector<16x96xf32> to vector<16x8xf32>
    %71 = vector.extract_strided_slice %56 {offsets = [0, 80], sizes = [16, 8], strides = [1, 1]} : vector<16x96xf32> to vector<16x8xf32>
    %72 = vector.extract_strided_slice %56 {offsets = [0, 88], sizes = [16, 8], strides = [1, 1]} : vector<16x96xf32> to vector<16x8xf32>
    %73 = tpu.concatenate %69, %70, %71, %72 in 0 : vector<16x8xf32>, vector<16x8xf32>, vector<16x8xf32>, vector<16x8xf32> -> vector<64x8xf32>
    %74 = vector.shape_cast %73 : vector<64x8xf32> to vector<8x8x8xf32>
    "tpu.trace_start"() <{level = 10 : i32, message = "nqd,nkd->nqk"}> : () -> ()
    %cst_24 = arith.constant dense<0.000000e+00> : vector<8x8x8xf32>
    %75 = tpu.matmul %62, %68, %cst_24 {dimension_numbers = #tpu.dot_dimension_numbers<[2], [2], [1], [1], [0, 0, 0, 1, 1, 1], [0], [0]>} : vector<8x8x8xf32>, vector<8x8x8xf32>, vector<8x8x8xf32> -> vector<8x8x8xf32>
    "tpu.trace_stop"() : () -> ()
    %cst_25 = arith.constant 0.353553385 : f32
    %76 = vector.broadcast %cst_25 : f32 to vector<8x8x8xf32>
    %77 = arith.mulf %75, %76 : vector<8x8x8xf32>
    %78 = arith.addf %77, %49 : vector<8x8x8xf32>
    %cst_26 = arith.constant dense<0xFF800000> : vector<8x8xf32>
    %79 = vector.multi_reduction <maximumf>, %78, %cst_26 [2] : vector<8x8x8xf32> to vector<8x8xf32>
    %80 = vector.shape_cast %79 : vector<8x8xf32> to vector<8x8x1xf32>
    %81 = vector.broadcast %80 : vector<8x8x1xf32> to vector<8x8x8xf32>
    %82 = arith.subf %78, %81 : vector<8x8x8xf32>
    %83 = math.exp %82 : vector<8x8x8xf32>
    %cst_27 = arith.constant dense<0.000000e+00> : vector<8x8xf32>
    %84 = vector.multi_reduction <add>, %83, %cst_27 [2] : vector<8x8x8xf32> to vector<8x8xf32>
    %85 = vector.shape_cast %84 : vector<8x8xf32> to vector<8x8x1xf32>
    %86 = tpu.reciprocal %85 {approx = true} : vector<8x8x1xf32> -> vector<8x8x1xf32>
    %87 = vector.broadcast %86 : vector<8x8x1xf32> to vector<8x8x8xf32>
    %88 = arith.mulf %83, %87 : vector<8x8x8xf32>
    "tpu.trace_start"() <{level = 10 : i32, message = "nqk,nkd->nqd"}> : () -> ()
    %cst_28 = arith.constant dense<0.000000e+00> : vector<8x8x8xf32>
    %89 = tpu.matmul %88, %74, %cst_28 {dimension_numbers = #tpu.dot_dimension_numbers<[2], [1], [1], [2], [0, 0, 0, 1, 1, 2], [0], [0]>} : vector<8x8x8xf32>, vector<8x8x8xf32>, vector<8x8x8xf32> -> vector<8x8x8xf32>
    "tpu.trace_stop"() : () -> ()
    %90 = vector.shape_cast %89 : vector<8x8x8xf32> to vector<4x16x8xf32>
    %91 = vector.extract_strided_slice %90 {offsets = [0, 0, 0], sizes = [1, 16, 8], strides = [1, 1, 1]} : vector<4x16x8xf32> to vector<1x16x8xf32>
    %92 = vector.shape_cast %91 : vector<1x16x8xf32> to vector<16x8xf32>
    %93 = vector.extract_strided_slice %90 {offsets = [1, 0, 0], sizes = [1, 16, 8], strides = [1, 1, 1]} : vector<4x16x8xf32> to vector<1x16x8xf32>
    %94 = vector.shape_cast %93 : vector<1x16x8xf32> to vector<16x8xf32>
    %95 = vector.extract_strided_slice %90 {offsets = [2, 0, 0], sizes = [1, 16, 8], strides = [1, 1, 1]} : vector<4x16x8xf32> to vector<1x16x8xf32>
    %96 = vector.shape_cast %95 : vector<1x16x8xf32> to vector<16x8xf32>
    %97 = vector.extract_strided_slice %90 {offsets = [3, 0, 0], sizes = [1, 16, 8], strides = [1, 1, 1]} : vector<4x16x8xf32> to vector<1x16x8xf32>
    %98 = vector.shape_cast %97 : vector<1x16x8xf32> to vector<16x8xf32>
    %99 = tpu.concatenate %92, %94, %96, %98 in 1 : vector<16x8xf32>, vector<16x8xf32>, vector<16x8xf32>, vector<16x8xf32> -> vector<16x32xf32>
    %c0_29 = arith.constant 0 : index
    %c0_30 = arith.constant 0 : index
    %c96 = arith.constant 96 : index
    %100 = vector.load %arg3[%c0_29, %c0_30, %c96] : memref<2x32x192xf32, #tpu.memory_space<vmem>>, vector<1x32x32xf32>
    %101 = vector.shape_cast %100 : vector<1x32x32xf32> to vector<32x32xf32>
    %cst_31 = arith.constant dense<0.000000e+00> : vector<16x32xf32>
    %102 = tpu.matmul %99, %101, %cst_31 {dimension_numbers = #tpu.dot_dimension_numbers<[1], [0], [0], [1], [0, 0, 1, 1], [], []>} : vector<16x32xf32>, vector<32x32xf32>, vector<16x32xf32> -> vector<16x32xf32>
    %c3 = arith.constant 3 : index
    %c0_32 = arith.constant 0 : index
    %c0_33 = arith.constant 0 : index
    %103 = vector.load %arg6[%c3, %c0_32, %c0_33] : memref<20x1x128xf32, #tpu.memory_space<vmem>>, vector<1x1x32xf32>
    %104 = vector.shape_cast %103 : vector<1x1x32xf32> to vector<1x32xf32>
    %105 = vector.broadcast %104 : vector<1x32xf32> to vector<16x32xf32>
    %106 = arith.addf %102, %105 : vector<16x32xf32>
    %107 = arith.addf %106, %39 : vector<16x32xf32>
    %c4 = arith.constant 4 : index
    %c0_34 = arith.constant 0 : index
    %c0_35 = arith.constant 0 : index
    %108 = vector.load %arg6[%c4, %c0_34, %c0_35] : memref<20x1x128xf32, #tpu.memory_space<vmem>>, vector<1x1x32xf32>
    %109 = vector.shape_cast %108 : vector<1x1x32xf32> to vector<1x32xf32>
    %c5 = arith.constant 5 : index
    %c0_36 = arith.constant 0 : index
    %c0_37 = arith.constant 0 : index
    %110 = vector.load %arg6[%c5, %c0_36, %c0_37] : memref<20x1x128xf32, #tpu.memory_space<vmem>>, vector<1x1x32xf32>
    %111 = vector.shape_cast %110 : vector<1x1x32xf32> to vector<1x32xf32>
    %cst_38 = arith.constant dense<0.000000e+00> : vector<16xf32>
    %112 = vector.multi_reduction <add>, %107, %cst_38 [1] : vector<16x32xf32> to vector<16xf32>
    %113 = vector.shape_cast %112 : vector<16xf32> to vector<16x1xf32>
    %cst_39 = arith.constant 3.200000e+01 : f32
    %114 = vector.broadcast %cst_39 : f32 to vector<16x1xf32>
    %115 = arith.divf %113, %114 : vector<16x1xf32>
    %116 = vector.broadcast %115 : vector<16x1xf32> to vector<16x32xf32>
    %117 = arith.subf %107, %116 : vector<16x32xf32>
    %118 = arith.mulf %117, %117 : vector<16x32xf32>
    %cst_40 = arith.constant dense<0.000000e+00> : vector<16xf32>
    %119 = vector.multi_reduction <add>, %118, %cst_40 [1] : vector<16x32xf32> to vector<16xf32>
    %120 = vector.shape_cast %119 : vector<16xf32> to vector<16x1xf32>
    %cst_41 = arith.constant 3.200000e+01 : f32
    %121 = vector.broadcast %cst_41 : f32 to vector<16x1xf32>
    %122 = arith.divf %120, %121 : vector<16x1xf32>
    %123 = vector.broadcast %115 : vector<16x1xf32> to vector<16x32xf32>
    %124 = arith.subf %107, %123 : vector<16x32xf32>
    %cst_42 = arith.constant 9.99999996E-13 : f32
    %125 = vector.broadcast %cst_42 : f32 to vector<16x1xf32>
    %126 = arith.addf %122, %125 : vector<16x1xf32>
    %127 = math.rsqrt %126 : vector<16x1xf32>
    %128 = vector.broadcast %127 : vector<16x1xf32> to vector<16x32xf32>
    %129 = arith.mulf %124, %128 : vector<16x32xf32>
    %130 = vector.broadcast %109 : vector<1x32xf32> to vector<16x32xf32>
    %131 = arith.mulf %129, %130 : vector<16x32xf32>
    %132 = vector.broadcast %111 : vector<1x32xf32> to vector<16x32xf32>
    %133 = arith.addf %131, %132 : vector<16x32xf32>
    %c0_43 = arith.constant 0 : index
    %c0_44 = arith.constant 0 : index
    %c128 = arith.constant 128 : index
    %134 = vector.load %arg3[%c0_43, %c0_44, %c128] : memref<2x32x192xf32, #tpu.memory_space<vmem>>, vector<1x32x64xf32>
    %135 = vector.shape_cast %134 : vector<1x32x64xf32> to vector<32x64xf32>
    %cst_45 = arith.constant dense<0.000000e+00> : vector<16x64xf32>
    %136 = tpu.matmul %133, %135, %cst_45 {dimension_numbers = #tpu.dot_dimension_numbers<[1], [0], [0], [1], [0, 0, 1, 1], [], []>} : vector<16x32xf32>, vector<32x64xf32>, vector<16x64xf32> -> vector<16x64xf32>
    %c6 = arith.constant 6 : index
    %c0_46 = arith.constant 0 : index
    %c0_47 = arith.constant 0 : index
    %137 = vector.load %arg6[%c6, %c0_46, %c0_47] : memref<20x1x128xf32, #tpu.memory_space<vmem>>, vector<1x1x64xf32>
    %138 = vector.shape_cast %137 : vector<1x1x64xf32> to vector<1x64xf32>
    %139 = vector.broadcast %138 : vector<1x64xf32> to vector<16x64xf32>
    %140 = arith.addf %136, %139 : vector<16x64xf32>
    %141 = arith.mulf %140, %140 : vector<16x64xf32>
    %142 = arith.mulf %140, %141 : vector<16x64xf32>
    %cst_48 = arith.constant 4.471500e-02 : f32
    %143 = vector.broadcast %cst_48 : f32 to vector<16x64xf32>
    %144 = arith.mulf %143, %142 : vector<16x64xf32>
    %145 = arith.addf %140, %144 : vector<16x64xf32>
    %cst_49 = arith.constant 0.797884583 : f32
    %146 = vector.broadcast %cst_49 : f32 to vector<16x64xf32>
    %147 = arith.mulf %146, %145 : vector<16x64xf32>
    %148 = math.tanh %147 : vector<16x64xf32>
    %cst_50 = arith.constant 1.000000e+00 : f32
    %149 = vector.broadcast %cst_50 : f32 to vector<16x64xf32>
    %150 = arith.addf %149, %148 : vector<16x64xf32>
    %cst_51 = arith.constant 5.000000e-01 : f32
    %151 = vector.broadcast %cst_51 : f32 to vector<16x64xf32>
    %152 = arith.mulf %151, %150 : vector<16x64xf32>
    %153 = arith.mulf %140, %152 : vector<16x64xf32>
    %c0_52 = arith.constant 0 : index
    %c0_53 = arith.constant 0 : index
    %c0_54 = arith.constant 0 : index
    %154 = vector.load %arg4[%c0_52, %c0_53, %c0_54] : memref<2x64x32xf32, #tpu.memory_space<vmem>>, vector<1x64x32xf32>
    %155 = vector.shape_cast %154 : vector<1x64x32xf32> to vector<64x32xf32>
    %cst_55 = arith.constant dense<0.000000e+00> : vector<16x32xf32>
    %156 = tpu.matmul %153, %155, %cst_55 {dimension_numbers = #tpu.dot_dimension_numbers<[1], [0], [0], [1], [0, 0, 1, 1], [], []>} : vector<16x64xf32>, vector<64x32xf32>, vector<16x32xf32> -> vector<16x32xf32>
    %c7 = arith.constant 7 : index
    %c0_56 = arith.constant 0 : index
    %c0_57 = arith.constant 0 : index
    %157 = vector.load %arg6[%c7, %c0_56, %c0_57] : memref<20x1x128xf32, #tpu.memory_space<vmem>>, vector<1x1x32xf32>
    %158 = vector.shape_cast %157 : vector<1x1x32xf32> to vector<1x32xf32>
    %159 = vector.broadcast %158 : vector<1x32xf32> to vector<16x32xf32>
    %160 = arith.addf %156, %159 : vector<16x32xf32>
    %161 = arith.addf %160, %133 : vector<16x32xf32>
    %c8 = arith.constant 8 : index
    %c0_58 = arith.constant 0 : index
    %c0_59 = arith.constant 0 : index
    %162 = vector.load %arg6[%c8, %c0_58, %c0_59] : memref<20x1x128xf32, #tpu.memory_space<vmem>>, vector<1x1x32xf32>
    %163 = vector.shape_cast %162 : vector<1x1x32xf32> to vector<1x32xf32>
    %c9 = arith.constant 9 : index
    %c0_60 = arith.constant 0 : index
    %c0_61 = arith.constant 0 : index
    %164 = vector.load %arg6[%c9, %c0_60, %c0_61] : memref<20x1x128xf32, #tpu.memory_space<vmem>>, vector<1x1x32xf32>
    %165 = vector.shape_cast %164 : vector<1x1x32xf32> to vector<1x32xf32>
    %cst_62 = arith.constant dense<0.000000e+00> : vector<16xf32>
    %166 = vector.multi_reduction <add>, %161, %cst_62 [1] : vector<16x32xf32> to vector<16xf32>
    %167 = vector.shape_cast %166 : vector<16xf32> to vector<16x1xf32>
    %cst_63 = arith.constant 3.200000e+01 : f32
    %168 = vector.broadcast %cst_63 : f32 to vector<16x1xf32>
    %169 = arith.divf %167, %168 : vector<16x1xf32>
    %170 = vector.broadcast %169 : vector<16x1xf32> to vector<16x32xf32>
    %171 = arith.subf %161, %170 : vector<16x32xf32>
    %172 = arith.mulf %171, %171 : vector<16x32xf32>
    %cst_64 = arith.constant dense<0.000000e+00> : vector<16xf32>
    %173 = vector.multi_reduction <add>, %172, %cst_64 [1] : vector<16x32xf32> to vector<16xf32>
    %174 = vector.shape_cast %173 : vector<16xf32> to vector<16x1xf32>
    %cst_65 = arith.constant 3.200000e+01 : f32
    %175 = vector.broadcast %cst_65 : f32 to vector<16x1xf32>
    %176 = arith.divf %174, %175 : vector<16x1xf32>
    %177 = vector.broadcast %169 : vector<16x1xf32> to vector<16x32xf32>
    %178 = arith.subf %161, %177 : vector<16x32xf32>
    %cst_66 = arith.constant 9.99999996E-13 : f32
    %179 = vector.broadcast %cst_66 : f32 to vector<16x1xf32>
    %180 = arith.addf %176, %179 : vector<16x1xf32>
    %181 = math.rsqrt %180 : vector<16x1xf32>
    %182 = vector.broadcast %181 : vector<16x1xf32> to vector<16x32xf32>
    %183 = arith.mulf %178, %182 : vector<16x32xf32>
    %184 = vector.broadcast %163 : vector<1x32xf32> to vector<16x32xf32>
    %185 = arith.mulf %183, %184 : vector<16x32xf32>
    %186 = vector.broadcast %165 : vector<1x32xf32> to vector<16x32xf32>
    %187 = arith.addf %185, %186 : vector<16x32xf32>
    %c1_67 = arith.constant 1 : index
    %c0_68 = arith.constant 0 : index
    %c0_69 = arith.constant 0 : index
    %188 = vector.load %arg3[%c1_67, %c0_68, %c0_69] : memref<2x32x192xf32, #tpu.memory_space<vmem>>, vector<1x32x96xf32>
    %189 = vector.shape_cast %188 : vector<1x32x96xf32> to vector<32x96xf32>
    %cst_70 = arith.constant dense<0.000000e+00> : vector<16x96xf32>
    %190 = tpu.matmul %187, %189, %cst_70 {dimension_numbers = #tpu.dot_dimension_numbers<[1], [0], [0], [1], [0, 0, 1, 1], [], []>} : vector<16x32xf32>, vector<32x96xf32>, vector<16x96xf32> -> vector<16x96xf32>
    %c10 = arith.constant 10 : index
    %c0_71 = arith.constant 0 : index
    %c0_72 = arith.constant 0 : index
    %191 = vector.load %arg6[%c10, %c0_71, %c0_72] : memref<20x1x128xf32, #tpu.memory_space<vmem>>, vector<1x1x96xf32>
    %192 = vector.shape_cast %191 : vector<1x1x96xf32> to vector<1x96xf32>
    %193 = vector.broadcast %192 : vector<1x96xf32> to vector<16x96xf32>
    %194 = arith.addf %190, %193 : vector<16x96xf32>
    %195 = vector.extract_strided_slice %194 {offsets = [0, 0], sizes = [16, 8], strides = [1, 1]} : vector<16x96xf32> to vector<16x8xf32>
    %196 = vector.extract_strided_slice %194 {offsets = [0, 8], sizes = [16, 8], strides = [1, 1]} : vector<16x96xf32> to vector<16x8xf32>
    %197 = vector.extract_strided_slice %194 {offsets = [0, 16], sizes = [16, 8], strides = [1, 1]} : vector<16x96xf32> to vector<16x8xf32>
    %198 = vector.extract_strided_slice %194 {offsets = [0, 24], sizes = [16, 8], strides = [1, 1]} : vector<16x96xf32> to vector<16x8xf32>
    %199 = tpu.concatenate %195, %196, %197, %198 in 0 : vector<16x8xf32>, vector<16x8xf32>, vector<16x8xf32>, vector<16x8xf32> -> vector<64x8xf32>
    %200 = vector.shape_cast %199 : vector<64x8xf32> to vector<8x8x8xf32>
    %201 = vector.extract_strided_slice %194 {offsets = [0, 32], sizes = [16, 8], strides = [1, 1]} : vector<16x96xf32> to vector<16x8xf32>
    %202 = vector.extract_strided_slice %194 {offsets = [0, 40], sizes = [16, 8], strides = [1, 1]} : vector<16x96xf32> to vector<16x8xf32>
    %203 = vector.extract_strided_slice %194 {offsets = [0, 48], sizes = [16, 8], strides = [1, 1]} : vector<16x96xf32> to vector<16x8xf32>
    %204 = vector.extract_strided_slice %194 {offsets = [0, 56], sizes = [16, 8], strides = [1, 1]} : vector<16x96xf32> to vector<16x8xf32>
    %205 = tpu.concatenate %201, %202, %203, %204 in 0 : vector<16x8xf32>, vector<16x8xf32>, vector<16x8xf32>, vector<16x8xf32> -> vector<64x8xf32>
    %206 = vector.shape_cast %205 : vector<64x8xf32> to vector<8x8x8xf32>
    %207 = vector.extract_strided_slice %194 {offsets = [0, 64], sizes = [16, 8], strides = [1, 1]} : vector<16x96xf32> to vector<16x8xf32>
    %208 = vector.extract_strided_slice %194 {offsets = [0, 72], sizes = [16, 8], strides = [1, 1]} : vector<16x96xf32> to vector<16x8xf32>
    %209 = vector.extract_strided_slice %194 {offsets = [0, 80], sizes = [16, 8], strides = [1, 1]} : vector<16x96xf32> to vector<16x8xf32>
    %210 = vector.extract_strided_slice %194 {offsets = [0, 88], sizes = [16, 8], strides = [1, 1]} : vector<16x96xf32> to vector<16x8xf32>
    %211 = tpu.concatenate %207, %208, %209, %210 in 0 : vector<16x8xf32>, vector<16x8xf32>, vector<16x8xf32>, vector<16x8xf32> -> vector<64x8xf32>
    %212 = vector.shape_cast %211 : vector<64x8xf32> to vector<8x8x8xf32>
    "tpu.trace_start"() <{level = 10 : i32, message = "nqd,nkd->nqk"}> : () -> ()
    %cst_73 = arith.constant dense<0.000000e+00> : vector<8x8x8xf32>
    %213 = tpu.matmul %200, %206, %cst_73 {dimension_numbers = #tpu.dot_dimension_numbers<[2], [2], [1], [1], [0, 0, 0, 1, 1, 1], [0], [0]>} : vector<8x8x8xf32>, vector<8x8x8xf32>, vector<8x8x8xf32> -> vector<8x8x8xf32>
    "tpu.trace_stop"() : () -> ()
    %cst_74 = arith.constant 0.353553385 : f32
    %214 = vector.broadcast %cst_74 : f32 to vector<8x8x8xf32>
    %215 = arith.mulf %213, %214 : vector<8x8x8xf32>
    %216 = arith.addf %215, %49 : vector<8x8x8xf32>
    %cst_75 = arith.constant dense<0xFF800000> : vector<8x8xf32>
    %217 = vector.multi_reduction <maximumf>, %216, %cst_75 [2] : vector<8x8x8xf32> to vector<8x8xf32>
    %218 = vector.shape_cast %217 : vector<8x8xf32> to vector<8x8x1xf32>
    %219 = vector.broadcast %218 : vector<8x8x1xf32> to vector<8x8x8xf32>
    %220 = arith.subf %216, %219 : vector<8x8x8xf32>
    %221 = math.exp %220 : vector<8x8x8xf32>
    %cst_76 = arith.constant dense<0.000000e+00> : vector<8x8xf32>
    %222 = vector.multi_reduction <add>, %221, %cst_76 [2] : vector<8x8x8xf32> to vector<8x8xf32>
    %223 = vector.shape_cast %222 : vector<8x8xf32> to vector<8x8x1xf32>
    %224 = tpu.reciprocal %223 {approx = true} : vector<8x8x1xf32> -> vector<8x8x1xf32>
    %225 = vector.broadcast %224 : vector<8x8x1xf32> to vector<8x8x8xf32>
    %226 = arith.mulf %221, %225 : vector<8x8x8xf32>
    "tpu.trace_start"() <{level = 10 : i32, message = "nqk,nkd->nqd"}> : () -> ()
    %cst_77 = arith.constant dense<0.000000e+00> : vector<8x8x8xf32>
    %227 = tpu.matmul %226, %212, %cst_77 {dimension_numbers = #tpu.dot_dimension_numbers<[2], [1], [1], [2], [0, 0, 0, 1, 1, 2], [0], [0]>} : vector<8x8x8xf32>, vector<8x8x8xf32>, vector<8x8x8xf32> -> vector<8x8x8xf32>
    "tpu.trace_stop"() : () -> ()
    %228 = vector.shape_cast %227 : vector<8x8x8xf32> to vector<4x16x8xf32>
    %229 = vector.extract_strided_slice %228 {offsets = [0, 0, 0], sizes = [1, 16, 8], strides = [1, 1, 1]} : vector<4x16x8xf32> to vector<1x16x8xf32>
    %230 = vector.shape_cast %229 : vector<1x16x8xf32> to vector<16x8xf32>
    %231 = vector.extract_strided_slice %228 {offsets = [1, 0, 0], sizes = [1, 16, 8], strides = [1, 1, 1]} : vector<4x16x8xf32> to vector<1x16x8xf32>
    %232 = vector.shape_cast %231 : vector<1x16x8xf32> to vector<16x8xf32>
    %233 = vector.extract_strided_slice %228 {offsets = [2, 0, 0], sizes = [1, 16, 8], strides = [1, 1, 1]} : vector<4x16x8xf32> to vector<1x16x8xf32>
    %234 = vector.shape_cast %233 : vector<1x16x8xf32> to vector<16x8xf32>
    %235 = vector.extract_strided_slice %228 {offsets = [3, 0, 0], sizes = [1, 16, 8], strides = [1, 1, 1]} : vector<4x16x8xf32> to vector<1x16x8xf32>
    %236 = vector.shape_cast %235 : vector<1x16x8xf32> to vector<16x8xf32>
    %237 = tpu.concatenate %230, %232, %234, %236 in 1 : vector<16x8xf32>, vector<16x8xf32>, vector<16x8xf32>, vector<16x8xf32> -> vector<16x32xf32>
    %c1_78 = arith.constant 1 : index
    %c0_79 = arith.constant 0 : index
    %c96_80 = arith.constant 96 : index
    %238 = vector.load %arg3[%c1_78, %c0_79, %c96_80] : memref<2x32x192xf32, #tpu.memory_space<vmem>>, vector<1x32x32xf32>
    %239 = vector.shape_cast %238 : vector<1x32x32xf32> to vector<32x32xf32>
    %cst_81 = arith.constant dense<0.000000e+00> : vector<16x32xf32>
    %240 = tpu.matmul %237, %239, %cst_81 {dimension_numbers = #tpu.dot_dimension_numbers<[1], [0], [0], [1], [0, 0, 1, 1], [], []>} : vector<16x32xf32>, vector<32x32xf32>, vector<16x32xf32> -> vector<16x32xf32>
    %c11 = arith.constant 11 : index
    %c0_82 = arith.constant 0 : index
    %c0_83 = arith.constant 0 : index
    %241 = vector.load %arg6[%c11, %c0_82, %c0_83] : memref<20x1x128xf32, #tpu.memory_space<vmem>>, vector<1x1x32xf32>
    %242 = vector.shape_cast %241 : vector<1x1x32xf32> to vector<1x32xf32>
    %243 = vector.broadcast %242 : vector<1x32xf32> to vector<16x32xf32>
    %244 = arith.addf %240, %243 : vector<16x32xf32>
    %245 = arith.addf %244, %187 : vector<16x32xf32>
    %c12 = arith.constant 12 : index
    %c0_84 = arith.constant 0 : index
    %c0_85 = arith.constant 0 : index
    %246 = vector.load %arg6[%c12, %c0_84, %c0_85] : memref<20x1x128xf32, #tpu.memory_space<vmem>>, vector<1x1x32xf32>
    %247 = vector.shape_cast %246 : vector<1x1x32xf32> to vector<1x32xf32>
    %c13 = arith.constant 13 : index
    %c0_86 = arith.constant 0 : index
    %c0_87 = arith.constant 0 : index
    %248 = vector.load %arg6[%c13, %c0_86, %c0_87] : memref<20x1x128xf32, #tpu.memory_space<vmem>>, vector<1x1x32xf32>
    %249 = vector.shape_cast %248 : vector<1x1x32xf32> to vector<1x32xf32>
    %cst_88 = arith.constant dense<0.000000e+00> : vector<16xf32>
    %250 = vector.multi_reduction <add>, %245, %cst_88 [1] : vector<16x32xf32> to vector<16xf32>
    %251 = vector.shape_cast %250 : vector<16xf32> to vector<16x1xf32>
    %cst_89 = arith.constant 3.200000e+01 : f32
    %252 = vector.broadcast %cst_89 : f32 to vector<16x1xf32>
    %253 = arith.divf %251, %252 : vector<16x1xf32>
    %254 = vector.broadcast %253 : vector<16x1xf32> to vector<16x32xf32>
    %255 = arith.subf %245, %254 : vector<16x32xf32>
    %256 = arith.mulf %255, %255 : vector<16x32xf32>
    %cst_90 = arith.constant dense<0.000000e+00> : vector<16xf32>
    %257 = vector.multi_reduction <add>, %256, %cst_90 [1] : vector<16x32xf32> to vector<16xf32>
    %258 = vector.shape_cast %257 : vector<16xf32> to vector<16x1xf32>
    %cst_91 = arith.constant 3.200000e+01 : f32
    %259 = vector.broadcast %cst_91 : f32 to vector<16x1xf32>
    %260 = arith.divf %258, %259 : vector<16x1xf32>
    %261 = vector.broadcast %253 : vector<16x1xf32> to vector<16x32xf32>
    %262 = arith.subf %245, %261 : vector<16x32xf32>
    %cst_92 = arith.constant 9.99999996E-13 : f32
    %263 = vector.broadcast %cst_92 : f32 to vector<16x1xf32>
    %264 = arith.addf %260, %263 : vector<16x1xf32>
    %265 = math.rsqrt %264 : vector<16x1xf32>
    %266 = vector.broadcast %265 : vector<16x1xf32> to vector<16x32xf32>
    %267 = arith.mulf %262, %266 : vector<16x32xf32>
    %268 = vector.broadcast %247 : vector<1x32xf32> to vector<16x32xf32>
    %269 = arith.mulf %267, %268 : vector<16x32xf32>
    %270 = vector.broadcast %249 : vector<1x32xf32> to vector<16x32xf32>
    %271 = arith.addf %269, %270 : vector<16x32xf32>
    %c1_93 = arith.constant 1 : index
    %c0_94 = arith.constant 0 : index
    %c128_95 = arith.constant 128 : index
    %272 = vector.load %arg3[%c1_93, %c0_94, %c128_95] : memref<2x32x192xf32, #tpu.memory_space<vmem>>, vector<1x32x64xf32>
    %273 = vector.shape_cast %272 : vector<1x32x64xf32> to vector<32x64xf32>
    %cst_96 = arith.constant dense<0.000000e+00> : vector<16x64xf32>
    %274 = tpu.matmul %271, %273, %cst_96 {dimension_numbers = #tpu.dot_dimension_numbers<[1], [0], [0], [1], [0, 0, 1, 1], [], []>} : vector<16x32xf32>, vector<32x64xf32>, vector<16x64xf32> -> vector<16x64xf32>
    %c14 = arith.constant 14 : index
    %c0_97 = arith.constant 0 : index
    %c0_98 = arith.constant 0 : index
    %275 = vector.load %arg6[%c14, %c0_97, %c0_98] : memref<20x1x128xf32, #tpu.memory_space<vmem>>, vector<1x1x64xf32>
    %276 = vector.shape_cast %275 : vector<1x1x64xf32> to vector<1x64xf32>
    %277 = vector.broadcast %276 : vector<1x64xf32> to vector<16x64xf32>
    %278 = arith.addf %274, %277 : vector<16x64xf32>
    %279 = arith.mulf %278, %278 : vector<16x64xf32>
    %280 = arith.mulf %278, %279 : vector<16x64xf32>
    %cst_99 = arith.constant 4.471500e-02 : f32
    %281 = vector.broadcast %cst_99 : f32 to vector<16x64xf32>
    %282 = arith.mulf %281, %280 : vector<16x64xf32>
    %283 = arith.addf %278, %282 : vector<16x64xf32>
    %cst_100 = arith.constant 0.797884583 : f32
    %284 = vector.broadcast %cst_100 : f32 to vector<16x64xf32>
    %285 = arith.mulf %284, %283 : vector<16x64xf32>
    %286 = math.tanh %285 : vector<16x64xf32>
    %cst_101 = arith.constant 1.000000e+00 : f32
    %287 = vector.broadcast %cst_101 : f32 to vector<16x64xf32>
    %288 = arith.addf %287, %286 : vector<16x64xf32>
    %cst_102 = arith.constant 5.000000e-01 : f32
    %289 = vector.broadcast %cst_102 : f32 to vector<16x64xf32>
    %290 = arith.mulf %289, %288 : vector<16x64xf32>
    %291 = arith.mulf %278, %290 : vector<16x64xf32>
    %c1_103 = arith.constant 1 : index
    %c0_104 = arith.constant 0 : index
    %c0_105 = arith.constant 0 : index
    %292 = vector.load %arg4[%c1_103, %c0_104, %c0_105] : memref<2x64x32xf32, #tpu.memory_space<vmem>>, vector<1x64x32xf32>
    %293 = vector.shape_cast %292 : vector<1x64x32xf32> to vector<64x32xf32>
    %cst_106 = arith.constant dense<0.000000e+00> : vector<16x32xf32>
    %294 = tpu.matmul %291, %293, %cst_106 {dimension_numbers = #tpu.dot_dimension_numbers<[1], [0], [0], [1], [0, 0, 1, 1], [], []>} : vector<16x64xf32>, vector<64x32xf32>, vector<16x32xf32> -> vector<16x32xf32>
    %c15 = arith.constant 15 : index
    %c0_107 = arith.constant 0 : index
    %c0_108 = arith.constant 0 : index
    %295 = vector.load %arg6[%c15, %c0_107, %c0_108] : memref<20x1x128xf32, #tpu.memory_space<vmem>>, vector<1x1x32xf32>
    %296 = vector.shape_cast %295 : vector<1x1x32xf32> to vector<1x32xf32>
    %297 = vector.broadcast %296 : vector<1x32xf32> to vector<16x32xf32>
    %298 = arith.addf %294, %297 : vector<16x32xf32>
    %299 = arith.addf %298, %271 : vector<16x32xf32>
    %c16 = arith.constant 16 : index
    %c0_109 = arith.constant 0 : index
    %c0_110 = arith.constant 0 : index
    %300 = vector.load %arg6[%c16, %c0_109, %c0_110] : memref<20x1x128xf32, #tpu.memory_space<vmem>>, vector<1x1x32xf32>
    %301 = vector.shape_cast %300 : vector<1x1x32xf32> to vector<1x32xf32>
    %c17 = arith.constant 17 : index
    %c0_111 = arith.constant 0 : index
    %c0_112 = arith.constant 0 : index
    %302 = vector.load %arg6[%c17, %c0_111, %c0_112] : memref<20x1x128xf32, #tpu.memory_space<vmem>>, vector<1x1x32xf32>
    %303 = vector.shape_cast %302 : vector<1x1x32xf32> to vector<1x32xf32>
    %cst_113 = arith.constant dense<0.000000e+00> : vector<16xf32>
    %304 = vector.multi_reduction <add>, %299, %cst_113 [1] : vector<16x32xf32> to vector<16xf32>
    %305 = vector.shape_cast %304 : vector<16xf32> to vector<16x1xf32>
    %cst_114 = arith.constant 3.200000e+01 : f32
    %306 = vector.broadcast %cst_114 : f32 to vector<16x1xf32>
    %307 = arith.divf %305, %306 : vector<16x1xf32>
    %308 = vector.broadcast %307 : vector<16x1xf32> to vector<16x32xf32>
    %309 = arith.subf %299, %308 : vector<16x32xf32>
    %310 = arith.mulf %309, %309 : vector<16x32xf32>
    %cst_115 = arith.constant dense<0.000000e+00> : vector<16xf32>
    %311 = vector.multi_reduction <add>, %310, %cst_115 [1] : vector<16x32xf32> to vector<16xf32>
    %312 = vector.shape_cast %311 : vector<16xf32> to vector<16x1xf32>
    %cst_116 = arith.constant 3.200000e+01 : f32
    %313 = vector.broadcast %cst_116 : f32 to vector<16x1xf32>
    %314 = arith.divf %312, %313 : vector<16x1xf32>
    %315 = vector.broadcast %307 : vector<16x1xf32> to vector<16x32xf32>
    %316 = arith.subf %299, %315 : vector<16x32xf32>
    %cst_117 = arith.constant 9.99999996E-13 : f32
    %317 = vector.broadcast %cst_117 : f32 to vector<16x1xf32>
    %318 = arith.addf %314, %317 : vector<16x1xf32>
    %319 = math.rsqrt %318 : vector<16x1xf32>
    %320 = vector.broadcast %319 : vector<16x1xf32> to vector<16x32xf32>
    %321 = arith.mulf %316, %320 : vector<16x32xf32>
    %322 = vector.broadcast %301 : vector<1x32xf32> to vector<16x32xf32>
    %323 = arith.mulf %321, %322 : vector<16x32xf32>
    %324 = vector.broadcast %303 : vector<1x32xf32> to vector<16x32xf32>
    %325 = arith.addf %323, %324 : vector<16x32xf32>
    %326 = vector.shape_cast %325 : vector<16x32xf32> to vector<2x8x32xf32>
    %327 = vector.extract_strided_slice %326 {offsets = [0, 0, 0], sizes = [2, 1, 32], strides = [1, 1, 1]} : vector<2x8x32xf32> to vector<2x1x32xf32>
    %328 = vector.shape_cast %327 : vector<2x1x32xf32> to vector<2x32xf32>
    %c0_118 = arith.constant 0 : index
    %c0_119 = arith.constant 0 : index
    %329 = vector.load %arg5[%c0_118, %c0_119] : memref<32x35xf32, #tpu.memory_space<vmem>>, vector<32x32xf32>
    %cst_120 = arith.constant dense<0.000000e+00> : vector<2x32xf32>
    %330 = tpu.matmul %328, %329, %cst_120 {dimension_numbers = #tpu.dot_dimension_numbers<[1], [0], [0], [1], [0, 0, 1, 1], [], []>} : vector<2x32xf32>, vector<32x32xf32>, vector<2x32xf32> -> vector<2x32xf32>
    %c18 = arith.constant 18 : index
    %c0_121 = arith.constant 0 : index
    %c0_122 = arith.constant 0 : index
    %331 = vector.load %arg6[%c18, %c0_121, %c0_122] : memref<20x1x128xf32, #tpu.memory_space<vmem>>, vector<1x1x32xf32>
    %332 = vector.shape_cast %331 : vector<1x1x32xf32> to vector<1x32xf32>
    %333 = vector.broadcast %332 : vector<1x32xf32> to vector<2x32xf32>
    %334 = arith.addf %330, %333 : vector<2x32xf32>
    %335 = math.tanh %334 : vector<2x32xf32>
    %c0_123 = arith.constant 0 : index
    %c32 = arith.constant 32 : index
    %336 = vector.load %arg5[%c0_123, %c32] : memref<32x35xf32, #tpu.memory_space<vmem>>, vector<32x3xf32>
    %cst_124 = arith.constant dense<0.000000e+00> : vector<2x3xf32>
    %337 = tpu.matmul %335, %336, %cst_124 {dimension_numbers = #tpu.dot_dimension_numbers<[1], [0], [0], [1], [0, 0, 1, 1], [], []>} : vector<2x32xf32>, vector<32x3xf32>, vector<2x3xf32> -> vector<2x3xf32>
    %c19 = arith.constant 19 : index
    %c0_125 = arith.constant 0 : index
    %c0_126 = arith.constant 0 : index
    %338 = vector.load %arg6[%c19, %c0_125, %c0_126] : memref<20x1x128xf32, #tpu.memory_space<vmem>>, vector<1x1x3xf32>
    %339 = vector.shape_cast %338 : vector<1x1x3xf32> to vector<1x3xf32>
    %340 = vector.broadcast %339 : vector<1x3xf32> to vector<2x3xf32>
    %341 = arith.addf %337, %340 : vector<2x3xf32>
    %c0_127 = arith.constant 0 : index
    %c0_128 = arith.constant 0 : index
    %342 = vector.load %arg7[%c0_127, %c0_128] : memref<2x3xf32, #tpu.memory_space<vmem>>, vector<2x3xf32>
    tpu.vector_store %arg7[%c0_127, %c0_128], %341 {strides = array<i32>} : memref<2x3xf32, #tpu.memory_space<vmem>>, vector<2x3xf32>,
    return
  }
}

</mosaic_0001>

<llo_original>
// kernel: sentiment_classifier_forward.1
$region0: #{sentiment_classifier_forward.1}
  #allocation0 [shape = 'u32[]', space=smem, size = 0x4, offset = 0x4, fixed_abs, tag = 'smem constant byte address 0x4 - core index']
  #allocation1 [shape = 'u32[144,128]{1,0:T(1,128)}', space=vmem, size = 0x12000, scoped, tag = 'internal scratch']
  %s0 = inlined_call_operand.vmem [shape: s32[16,1], index: 0, kind: input, shape index: {}]
  %s1 = inlined_call_operand.vmem [shape: s32[2,8], index: 1, kind: input, shape index: {}]
  %s2 = inlined_call_operand.vmem [shape: f32[136,32], index: 2, kind: input, shape index: {}]
  %s3 = inlined_call_operand.vmem [shape: f32[2,32,192], index: 3, kind: input, shape index: {}]
  %s4 = inlined_call_operand.vmem [shape: f32[2,64,32], index: 4, kind: input, shape index: {}]
  %s5 = inlined_call_operand.vmem [shape: f32[32,35], index: 5, kind: input, shape index: {}]
  %s6 = inlined_call_operand.vmem [shape: f32[20,1,128], index: 6, kind: input, shape index: {}]
  %s7 = inlined_call_operand.hbm [shape: f32[2,3], index: 7, kind: output, shape index: {}]
  %s8 = sld [smem:[#allocation0]]
  $region38: #{sentiment_classifier_forward.1} parent=0
    _
  %s10 = ssub.s32 1, %s8
  %s11 = scalar_select 0, %s10, %s8
  $region1: #{sentiment_classifier_forward.1} parent=0
    #allocation2 [shape = 'u8[1024]{0}', space=vmem, size = 0x400, scoped, tag = 'output window, operand 0, single buffered']
    #allocation3 [shape = 's32[1]{0}', space=sflag, size = 0x4, scoped, tag = 'scoped memory for sentiment_classifier_forward.1']
    %12 = vsyncpa [#allocation3], 0
    // Predicated region
    $region2: #{sentiment_classifier_forward.1} parent=1 // pred_check
      _
    $region3: #{sentiment_classifier_forward.1} parent=1 // pred_check_branch
      %14 = sbr.rel (0) target = $region5
    $region4: #{sentiment_classifier_forward.1} parent=1 // pred_region
      _
    $region5: #{sentiment_classifier_forward.1} parent=1 // pred_fallthru
      _
    // Predicated region
    $region6: #{sentiment_classifier_forward.1} parent=1 // pred_check
      _
    $region7: #{sentiment_classifier_forward.1} parent=1 // pred_check_branch
      %16 = sbr.rel (0) target = $region9
    $region8: #{sentiment_classifier_forward.1} parent=1 // pred_region
      _
    $region9: #{sentiment_classifier_forward.1} parent=1 // pred_fallthru
      _
    // Predicated region
    $region10: #{sentiment_classifier_forward.1} parent=1 // pred_check
      _
    $region11: #{sentiment_classifier_forward.1} parent=1 // pred_check_branch
      %18 = sbr.rel (0) target = $region13
    $region12: #{sentiment_classifier_forward.1} parent=1 // pred_region
      _
    $region13: #{sentiment_classifier_forward.1} parent=1 // pred_fallthru
      _
    // Predicated region
    $region14: #{sentiment_classifier_forward.1} parent=1 // pred_check
      _
    $region15: #{sentiment_classifier_forward.1} parent=1 // pred_check_branch
      %20 = sbr.rel (0) target = $region17
    $region16: #{sentiment_classifier_forward.1} parent=1 // pred_region
      _
    $region17: #{sentiment_classifier_forward.1} parent=1 // pred_fallthru
      _
    // Predicated region
    $region18: #{sentiment_classifier_forward.1} parent=1 // pred_check
      _
    $region19: #{sentiment_classifier_forward.1} parent=1 // pred_check_branch
      %22 = sbr.rel (0) target = $region21
    $region20: #{sentiment_classifier_forward.1} parent=1 // pred_region
      _
    $region21: #{sentiment_classifier_forward.1} parent=1 // pred_fallthru
      _
    // Predicated region
    $region22: #{sentiment_classifier_forward.1} parent=1 // pred_check
      _
    $region23: #{sentiment_classifier_forward.1} parent=1 // pred_check_branch
      %24 = sbr.rel (0) target = $region25
    $region24: #{sentiment_classifier_forward.1} parent=1 // pred_region
      _
    $region25: #{sentiment_classifier_forward.1} parent=1 // pred_fallthru
      _
    // Predicated region
    $region26: #{sentiment_classifier_forward.1} parent=1 // pred_check
      _
    $region27: #{sentiment_classifier_forward.1} parent=1 // pred_check_branch
      %26 = sbr.rel (0) target = $region29
    $region28: #{sentiment_classifier_forward.1} parent=1 // pred_region
      _
    $region29: #{sentiment_classifier_forward.1} parent=1 // pred_fallthru
      _
    %v27 = vld [vmem:[%s0] sm:$0xff]
    %v28 = vld [vmem:[%s0 + $0x8] sm:$0xff]
    %v29 = vlaneseq
    %v30 = vand.u32 %v29, 127
    %31 = vset.pattern.permute.xlu0 0
    %32 = vperm.xlu0 %31, %v27
    %v33 = vpop.permute.xlu0 %32
    %34 = vset.pattern.permute.xlu0 0
    %35 = vperm.xlu0 %34, %v28
    %v36 = vpop.permute.xlu0 %35
    %vm37 = vcmp.eq.s32.totalorder %v33, %v30
    %vm38 = vcmp.eq.s32.totalorder %v36, %v30
    %v39 = vsel %vm37, 1, 0
    %v40 = vsel %vm38, 1, 0
    %v41 = vcvt.s32.f32 %v39
    %v42 = vcvt.s32.f32 %v40
    %v43 = vld [vmem:[%s2] sm:$0xff]
    %v44 = vld [vmem:[%s2 + $0x8] sm:$0xff]
    %v45 = vld [vmem:[%s2 + $0x10] sm:$0xff]
    %v46 = vld [vmem:[%s2 + $0x18] sm:$0xff]
    %v47 = vld [vmem:[%s2 + $0x20] sm:$0xff]
    %v48 = vld [vmem:[%s2 + $0x28] sm:$0xff]
    %v49 = vld [vmem:[%s2 + $0x30] sm:$0xff]
    %v50 = vld [vmem:[%s2 + $0x38] sm:$0xff]
    %v51 = vld [vmem:[%s2 + $0x40] sm:$0xff]
    %v52 = vld [vmem:[%s2 + $0x48] sm:$0xff]
    %v53 = vld [vmem:[%s2 + $0x50] sm:$0xff]
    %v54 = vld [vmem:[%s2 + $0x58] sm:$0xff]
    %v55 = vld [vmem:[%s2 + $0x60] sm:$0xff]
    %vm56 = vcmask 850944
    %v58 = vsel %vm56, %v41, 0
    %v61 = vsel %vm56, %v42, 0
    %63 = vmatprep.subr.mxu0 0.0
    %64 = vmatpush1.msra.mxu0 %v43
    %65 = vmatprep.subr.mxu0 0.0
    %66 = vmatpush1.msra.mxu0 %v44
    %67 = vmatprep.subr.mxu0 0.0
    %68 = vmatpush1.msra.mxu0 %v45
    %69 = vmatprep.subr.mxu0 0.0
    %70 = vmatpush1.msra.mxu0 %v46
    %71 = vmatprep.subr.mxu0 0.0
    %72 = vmatpush1.msra.mxu0 %v47
    %73 = vmatprep.subr.mxu0 0.0
    %74 = vmatpush1.msra.mxu0 %v48
    %75 = vmatprep.subr.mxu0 0.0
    %76 = vmatpush1.msra.mxu0 %v49
    %77 = vmatprep.subr.mxu0 0.0
    %78 = vmatpush1.msra.mxu0 %v50
    %79 = vmatprep.subr.mxu0 0.0
    %80 = vmatpush1.msra.mxu0 %v51
    %81 = vmatprep.subr.mxu0 0.0
    %82 = vmatpush1.msra.mxu0 %v52
    %83 = vmatprep.subr.mxu0 0.0
    %84 = vmatpush1.msra.mxu0 %v53
    %85 = vmatprep.subr.mxu0 0.0
    %86 = vmatpush1.msra.mxu0 %v54
    %87 = vmatprep.subr.mxu0 0.0
    %88 = vmatpush1.msra.mxu0 %v55
    %89 = vmatprep.subr.mxu0 0.0
    %90 = vmatpush1.msra.mxu0 0.0
    %91 = vmatprep.subr.mxu0 0.0
    %92 = vmatpush1.msra.mxu0 0.0
    %93 = vmatprep.subr.mxu0 0.0
    %94 = vmatpush1.msra.mxu0 0.0
    %95 = vmatprep.subr.mxu0 0.0
    %96 = vmatpush1.msra.mxu0 0.0
    %97 = vmatprep.subr.mxu0 0.0
    %98 = vmatpush1.msra.mxu0 0.0
    %99 = vmatprep.subr.mxu0 0.0
    %100 = vmatpush1.msra.mxu0 0.0
    %101 = vmatprep.subr.mxu0 0.0
    %102 = vmatpush1.msra.mxu0 0.0
    %103 = vmatprep.subr.mxu0 0.0
    %104 = vmatpush1.msra.mxu0 0.0
    %105 = vmatprep.subr.mxu0 0.0
    %106 = vmatpush1.msra.mxu0 0.0
    %107 = vmatprep.subr.mxu0 0.0
    %108 = vmatpush1.msra.mxu0 0.0
    %109 = vmatprep.subr.mxu0 0.0
    %110 = vmatpush1.msra.mxu0 0.0
    %111 = vmatprep.subr.mxu0 0.0
    %112 = vmatpush1.msra.mxu0 0.0
    %113 = vmatprep.subr.mxu0 0.0
    %114 = vmatpush1.msra.mxu0 0.0
    %115 = vmatprep.subr.mxu0 0.0
    %116 = vmatpush1.msra.mxu0 0.0
    %117 = vmatprep.subr.mxu0 0.0
    %118 = vmatpush1.msra.mxu0 0.0
    %119 = vmatprep.subr.mxu0 0.0
    %120 = vmatpush1.msra.mxu0 0.0
    %121 = vmatprep.subr.mxu0 0.0
    %122 = vmatpush1.msra.mxu0 0.0
    %123 = vmatprep.subr.mxu0 0.0
    %124 = vmatpush1.msra.mxu0 0.0
    %125 = vmatprep.subr.mxu0 0.0
    %126 = vmatpush1.msra.mxu0 0.0
    %127 = vmatprep.mubr.f32.mxu0 0.0
    %128 = vmatmul.mubr.f32.gmra.mrb[0].mxu0 %v58
    %v129 = vpop.f32.mrb[0].mxu0
    %v130 = vadd.f32 0.0, %v129
    %v131 = vpop.f32.mrb[0].mxu0
    %132 = vmatprep.mubr.f32.mxu0 0.0
    %133 = vmatmul.mubr.f32.gmra.mrb[0].mxu0 %v61
    %v134 = vpop.f32.mrb[0].mxu0
    %v135 = vadd.f32 0.0, %v134
    %v136 = vpop.f32.mrb[0].mxu0
    %137 = vdwg.mxu0
    %v138 = vld [vmem:[%s2 + $0x68] sm:$0xff]
    %v139 = vadd.f32 %v130, %v138
    %v140 = vadd.f32 %v135, %v138
    %v141 = vld [vmem:[%s6] sm:$0x1]
    %s142 = scalar_lea.vmem %s6, 1
    %v143 = vld [vmem:[%s142] sm:$0x1]
    %vm144 = vcmask 261120
    %v145 = vsel %vm144, %v139, 0.0
    %146 = vadd.xlane.f32.xlu0 %v145
    %v147 = vpop.xlane.xlu0 %146
    %v148 = vsel %vm144, %v140, 0.0
    %149 = vadd.xlane.f32.xlu0 %v148
    %v150 = vpop.xlane.xlu0 %149
    %v151 = vrcp.pop 32.0
    %v152 = vmul.f32 %v147, %v151
    %v153 = vmul.f32 %v150, %v151
    %v154 = vsub.f32 %v139, %v152
    %v155 = vsub.f32 %v140, %v153
    %v156 = vmul.f32 %v154, %v154
    %v157 = vmul.f32 %v155, %v155
    %v158 = vsel %vm144, %v156, 0.0
    %159 = vadd.xlane.f32.xlu0 %v158
    %v160 = vpop.xlane.xlu0 %159
    %v161 = vsel %vm144, %v157, 0.0
    %162 = vadd.xlane.f32.xlu0 %v161
    %v163 = vpop.xlane.xlu0 %162
    %v164 = vmul.f32 %v160, %v151
    %v165 = vmul.f32 %v163, %v151
    %v166 = vadd.f32 %v164, 1e-12
    %v167 = vadd.f32 %v165, 1e-12
    %v168 = vrsqrt.pop %v166
    %v169 = vrsqrt.pop %v167
    %v170 = vmul.f32 %v154, %v168
    %v171 = vmul.f32 %v155, %v169
    %v173 = vlaneseq
    %v174 = vshrl.u32 %v173, 7
    %v175 = vsub.s32 0, %v174
    %v176 = vrot.slane %v141, %v175
    %v178 = vmul.f32 %v170, %v176
    %v179 = vmul.f32 %v171, %v176
    %v181 = vlaneseq
    %v182 = vshrl.u32 %v181, 7
    %v183 = vsub.s32 0, %v182
    %v184 = vrot.slane %v143, %v183
    %v186 = vadd.f32 %v178, %v184
    %v187 = vadd.f32 %v179, %v184
    %v188 = vld [vmem:[%s1] sm:$0x3]
    %v189 = vcvt.s32.f32 %v188
    %v190 = vsub.f32 1.0, %v189
    %v191 = vmul.f32 %v190, -10000.0
    %v194 = vunpack.c.l.s4 1966171168
    %v195 = vunpack.c.0.s8 %v194
    %v196 = vlaneseq
    %v197 = vshrl.u32 %v196, 7
    %v198 = vsub.s32 %v195, %v197
    %v199 = vrot.slane %v191, %v198
    %v200 = vcombine.high %v199, %v199
    %v202 = vunpack.c.l.s4 1966171168
    %v203 = vunpack.c.0.s8 %v202
    %v204 = vlaneseq
    %v205 = vshrl.u32 %v204, 7
    %v206 = vsub.s32 %v203, %v205
    %v207 = vrot.slane %v199, %v206
    %v209 = vunpack.c.l.s4 1966171168
    %v210 = vunpack.c.0.s8 %v209
    %v211 = vlaneseq
    %v212 = vshrl.u32 %v211, 7
    %v213 = vsub.s32 %v210, %v212
    %v214 = vrot.slane %v200, %v213
    %v215 = vlaneseq
    %v216 = vshrl.u32 %v215, 7
    %v217 = vsub.s32 0, %v216
    %v218 = vrot.slane %v207, %v217
    %v219 = vlaneseq
    %v220 = vshrl.u32 %v219, 7
    %v221 = vsub.s32 0, %v220
    %v222 = vrot.slane %v214, %v221
    %v225 = vld [vmem:[%s3] sm:$0xff]
    %v226 = vld [vmem:[%s3 + $0x10] sm:$0xff]
    %v227 = vld [vmem:[%s3 + $0x20] sm:$0xff]
    %v228 = vld [vmem:[%s3 + $0x30] sm:$0xff]
    %s229 = scalar_lea.vmem %s6, 2
    %v230 = vld [vmem:[%s229] sm:$0x1]
    %v232 = vlaneseq
    %v233 = vshrl.u32 %v232, 7
    %v234 = vsub.s32 0, %v233
    %v235 = vrot.slane %v230, %v234
    %v238 = vsel %vm144, %v186, 0
    %v241 = vsel %vm144, %v187, 0
    %243 = vmatprep.subr.mxu0 0.0
    %244 = vmatpush1.msra.mxu0 %v225
    %245 = vmatprep.subr.mxu0 0.0
    %246 = vmatpush1.msra.mxu0 %v226
    %247 = vmatprep.subr.mxu0 0.0
    %248 = vmatpush1.msra.mxu0 %v227
    %249 = vmatprep.subr.mxu0 0.0
    %250 = vmatpush1.msra.mxu0 %v228
    %251 = vmatprep.subr.mxu0 0.0
    %252 = vmatpush1.msra.mxu0 0.0
    %253 = vmatprep.subr.mxu0 0.0
    %254 = vmatpush1.msra.mxu0 0.0
    %255 = vmatprep.subr.mxu0 0.0
    %256 = vmatpush1.msra.mxu0 0.0
    %257 = vmatprep.subr.mxu0 0.0
    %258 = vmatpush1.msra.mxu0 0.0
    %259 = vmatprep.subr.mxu0 0.0
    %260 = vmatpush1.msra.mxu0 0.0
    %261 = vmatprep.subr.mxu0 0.0
    %262 = vmatpush1.msra.mxu0 0.0
    %263 = vmatprep.subr.mxu0 0.0
    %264 = vmatpush1.msra.mxu0 0.0
    %265 = vmatprep.subr.mxu0 0.0
    %266 = vmatpush1.msra.mxu0 0.0
    %267 = vmatprep.subr.mxu0 0.0
    %268 = vmatpush1.msra.mxu0 0.0
    %269 = vmatprep.subr.mxu0 0.0
    %270 = vmatpush1.msra.mxu0 0.0
    %271 = vmatprep.subr.mxu0 0.0
    %272 = vmatpush1.msra.mxu0 0.0
    %273 = vmatprep.subr.mxu0 0.0
    %274 = vmatpush1.msra.mxu0 0.0
    %275 = vmatprep.subr.mxu0 0.0
    %276 = vmatpush1.msra.mxu0 0.0
    %277 = vmatprep.subr.mxu0 0.0
    %278 = vmatpush1.msra.mxu0 0.0
    %279 = vmatprep.subr.mxu0 0.0
    %280 = vmatpush1.msra.mxu0 0.0
    %281 = vmatprep.subr.mxu0 0.0
    %282 = vmatpush1.msra.mxu0 0.0
    %283 = vmatprep.subr.mxu0 0.0
    %284 = vmatpush1.msra.mxu0 0.0
    %285 = vmatprep.subr.mxu0 0.0
    %286 = vmatpush1.msra.mxu0 0.0
    %287 = vmatprep.subr.mxu0 0.0
    %288 = vmatpush1.msra.mxu0 0.0
    %289 = vmatprep.subr.mxu0 0.0
    %290 = vmatpush1.msra.mxu0 0.0
    %291 = vmatprep.subr.mxu0 0.0
    %292 = vmatpush1.msra.mxu0 0.0
    %293 = vmatprep.subr.mxu0 0.0
    %294 = vmatpush1.msra.mxu0 0.0
    %295 = vmatprep.subr.mxu0 0.0
    %296 = vmatpush1.msra.mxu0 0.0
    %297 = vmatprep.subr.mxu0 0.0
    %298 = vmatpush1.msra.mxu0 0.0
    %299 = vmatprep.subr.mxu0 0.0
    %300 = vmatpush1.msra.mxu0 0.0
    %301 = vmatprep.subr.mxu0 0.0
    %302 = vmatpush1.msra.mxu0 0.0
    %303 = vmatprep.subr.mxu0 0.0
    %304 = vmatpush1.msra.mxu0 0.0
    %305 = vmatprep.subr.mxu0 0.0
    %306 = vmatpush1.msra.mxu0 0.0
    %307 = vmatprep.mubr.f32.mxu0 0.0
    %308 = vmatmul.mubr.f32.gmra.mrb[0].mxu0 %v238
    %v309 = vpop.f32.mrb[0].mxu0
    %v310 = vadd.f32 %v235, %v309
    %v311 = vpop.f32.mrb[0].mxu0
    %312 = vmatprep.mubr.f32.mxu0 0.0
    %313 = vmatmul.mubr.f32.gmra.mrb[0].mxu0 %v241
    %v314 = vpop.f32.mrb[0].mxu0
    %v315 = vadd.f32 %v235, %v314
    %v316 = vpop.f32.mrb[0].mxu0
    %317 = vdwg.mxu0
    %320 = vrot.lane.b32.xlu0 %v310, 120
    %v321 = vpop.permute.xlu0 %320
    %322 = vrot.lane.b32.xlu0 %v315, 120
    %v323 = vpop.permute.xlu0 %322
    %324 = vrot.lane.b32.xlu0 %v310, 112
    %v325 = vpop.permute.xlu0 %324
    %326 = vrot.lane.b32.xlu0 %v315, 112
    %v327 = vpop.permute.xlu0 %326
    %328 = vrot.lane.b32.xlu0 %v310, 104
    %v329 = vpop.permute.xlu0 %328
    %330 = vrot.lane.b32.xlu0 %v315, 104
    %v331 = vpop.permute.xlu0 %330
    %332 = vrot.lane.b32.xlu0 %v310, 96
    %v333 = vpop.permute.xlu0 %332
    %vm334 = vcmask 64512
    %v335 = vsel %vm334, %v310, 0
    %v337 = vsel %vm334, %v333, 0
    %339 = vmatprep.subr.mxu0 0.0
    %340 = vmatpush1.xpose.msra.mxu0 %v337
    %341 = vmatprep.subr.mxu0 0.0
    %342 = vmatpush1.xpose.msra.mxu0 0.0
    %343 = vmatprep.subr.mxu0 0.0
    %344 = vmatpush1.xpose.msra.mxu0 0.0
    %345 = vmatprep.subr.mxu0 0.0
    %346 = vmatpush1.xpose.msra.mxu0 0.0
    %347 = vmatprep.subr.mxu0 0.0
    %348 = vmatpush1.xpose.msra.mxu0 0.0
    %349 = vmatprep.subr.mxu0 0.0
    %350 = vmatpush1.xpose.msra.mxu0 0.0
    %351 = vmatprep.subr.mxu0 0.0
    %352 = vmatpush1.xpose.msra.mxu0 0.0
    %353 = vmatprep.subr.mxu0 0.0
    %354 = vmatpush1.xpose.msra.mxu0 0.0
    %355 = vmatprep.subr.mxu0 0.0
    %356 = vmatpush1.xpose.msra.mxu0 0.0
    %357 = vmatprep.subr.mxu0 0.0
    %358 = vmatpush1.xpose.msra.mxu0 0.0
    %359 = vmatprep.subr.mxu0 0.0
    %360 = vmatpush1.xpose.msra.mxu0 0.0
    %361 = vmatprep.subr.mxu0 0.0
    %362 = vmatpush1.xpose.msra.mxu0 0.0
    %363 = vmatprep.subr.mxu0 0.0
    %364 = vmatpush1.xpose.msra.mxu0 0.0
    %365 = vmatprep.subr.mxu0 0.0
    %366 = vmatpush1.xpose.msra.mxu0 0.0
    %367 = vmatprep.subr.mxu0 0.0
    %368 = vmatpush1.xpose.msra.mxu0 0.0
    %369 = vmatprep.subr.mxu0 0.0
    %370 = vmatpush1.xpose.msra.mxu0 0.0
    %371 = vmatprep.subr.mxu0 0.0
    %372 = vmatpush1.xpose.msra.mxu0 0.0
    %373 = vmatprep.subr.mxu0 0.0
    %374 = vmatpush1.xpose.msra.mxu0 0.0
    %375 = vmatprep.subr.mxu0 0.0
    %376 = vmatpush1.xpose.msra.mxu0 0.0
    %377 = vmatprep.subr.mxu0 0.0
    %378 = vmatpush1.xpose.msra.mxu0 0.0
    %379 = vmatprep.subr.mxu0 0.0
    %380 = vmatpush1.xpose.msra.mxu0 0.0
    %381 = vmatprep.subr.mxu0 0.0
    %382 = vmatpush1.xpose.msra.mxu0 0.0
    %383 = vmatprep.subr.mxu0 0.0
    %384 = vmatpush1.xpose.msra.mxu0 0.0
    %385 = vmatprep.subr.mxu0 0.0
    %386 = vmatpush1.xpose.msra.mxu0 0.0
    %387 = vmatprep.subr.mxu0 0.0
    %388 = vmatpush1.xpose.msra.mxu0 0.0
    %389 = vmatprep.subr.mxu0 0.0
    %390 = vmatpush1.xpose.msra.mxu0 0.0
    %391 = vmatprep.subr.mxu0 0.0
    %392 = vmatpush1.xpose.msra.mxu0 0.0
    %393 = vmatprep.subr.mxu0 0.0
    %394 = vmatpush1.xpose.msra.mxu0 0.0
    %395 = vmatprep.subr.mxu0 0.0
    %396 = vmatpush1.xpose.msra.mxu0 0.0
    %397 = vmatprep.subr.mxu0 0.0
    %398 = vmatpush1.xpose.msra.mxu0 0.0
    %399 = vmatprep.subr.mxu0 0.0
    %400 = vmatpush1.xpose.msra.mxu0 0.0
    %401 = vmatprep.subr.mxu0 0.0
    %402 = vmatpush1.xpose.msra.mxu0 0.0
    %403 = vmatprep.mubr.f32.mxu0 0.0
    %404 = vmatmul.mubr.f32.gmra.mrb[0].mxu0 %v335
    %v405 = vpop.f32.mrb[0].mxu0
    %v406 = vadd.f32 0.0, %v405
    %v407 = vpop.f32.mrb[0].mxu0
    %408 = vdwg.mxu0
    %409 = vrot.lane.b32.xlu0 %v315, 96
    %v410 = vpop.permute.xlu0 %409
    %v411 = vsel %vm334, %v315, 0
    %v413 = vsel %vm334, %v410, 0
    %415 = vmatprep.subr.mxu0 0.0
    %416 = vmatpush1.xpose.msra.mxu0 %v413
    %417 = vmatprep.subr.mxu0 0.0
    %418 = vmatpush1.xpose.msra.mxu0 0.0
    %419 = vmatprep.subr.mxu0 0.0
    %420 = vmatpush1.xpose.msra.mxu0 0.0
    %421 = vmatprep.subr.mxu0 0.0
    %422 = vmatpush1.xpose.msra.mxu0 0.0
    %423 = vmatprep.subr.mxu0 0.0
    %424 = vmatpush1.xpose.msra.mxu0 0.0
    %425 = vmatprep.subr.mxu0 0.0
    %426 = vmatpush1.xpose.msra.mxu0 0.0
    %427 = vmatprep.subr.mxu0 0.0
    %428 = vmatpush1.xpose.msra.mxu0 0.0
    %429 = vmatprep.subr.mxu0 0.0
    %430 = vmatpush1.xpose.msra.mxu0 0.0
    %431 = vmatprep.subr.mxu0 0.0
    %432 = vmatpush1.xpose.msra.mxu0 0.0
    %433 = vmatprep.subr.mxu0 0.0
    %434 = vmatpush1.xpose.msra.mxu0 0.0
    %435 = vmatprep.subr.mxu0 0.0
    %436 = vmatpush1.xpose.msra.mxu0 0.0
    %437 = vmatprep.subr.mxu0 0.0
    %438 = vmatpush1.xpose.msra.mxu0 0.0
    %439 = vmatprep.subr.mxu0 0.0
    %440 = vmatpush1.xpose.msra.mxu0 0.0
    %441 = vmatprep.subr.mxu0 0.0
    %442 = vmatpush1.xpose.msra.mxu0 0.0
    %443 = vmatprep.subr.mxu0 0.0
    %444 = vmatpush1.xpose.msra.mxu0 0.0
    %445 = vmatprep.subr.mxu0 0.0
    %446 = vmatpush1.xpose.msra.mxu0 0.0
    %447 = vmatprep.subr.mxu0 0.0
    %448 = vmatpush1.xpose.msra.mxu0 0.0
    %449 = vmatprep.subr.mxu0 0.0
    %450 = vmatpush1.xpose.msra.mxu0 0.0
    %451 = vmatprep.subr.mxu0 0.0
    %452 = vmatpush1.xpose.msra.mxu0 0.0
    %453 = vmatprep.subr.mxu0 0.0
    %454 = vmatpush1.xpose.msra.mxu0 0.0
    %455 = vmatprep.subr.mxu0 0.0
    %456 = vmatpush1.xpose.msra.mxu0 0.0
    %457 = vmatprep.subr.mxu0 0.0
    %458 = vmatpush1.xpose.msra.mxu0 0.0
    %459 = vmatprep.subr.mxu0 0.0
    %460 = vmatpush1.xpose.msra.mxu0 0.0
    %461 = vmatprep.subr.mxu0 0.0
    %462 = vmatpush1.xpose.msra.mxu0 0.0
    %463 = vmatprep.subr.mxu0 0.0
    %464 = vmatpush1.xpose.msra.mxu0 0.0
    %465 = vmatprep.subr.mxu0 0.0
    %466 = vmatpush1.xpose.msra.mxu0 0.0
    %467 = vmatprep.subr.mxu0 0.0
    %468 = vmatpush1.xpose.msra.mxu0 0.0
    %469 = vmatprep.subr.mxu0 0.0
    %470 = vmatpush1.xpose.msra.mxu0 0.0
    %471 = vmatprep.subr.mxu0 0.0
    %472 = vmatpush1.xpose.msra.mxu0 0.0
    %473 = vmatprep.subr.mxu0 0.0
    %474 = vmatpush1.xpose.msra.mxu0 0.0
    %475 = vmatprep.subr.mxu0 0.0
    %476 = vmatpush1.xpose.msra.mxu0 0.0
    %477 = vmatprep.subr.mxu0 0.0
    %478 = vmatpush1.xpose.msra.mxu0 0.0
    %479 = vmatprep.mubr.f32.mxu0 0.0
    %480 = vmatmul.mubr.f32.gmra.mrb[0].mxu0 %v411
    %v481 = vpop.f32.mrb[0].mxu0
    %v482 = vadd.f32 0.0, %v481
    %v483 = vpop.f32.mrb[0].mxu0
    %484 = vdwg.mxu0
    %485 = vrot.lane.b32.xlu0 %v321, 96
    %v486 = vpop.permute.xlu0 %485
    %v487 = vsel %vm334, %v321, 0
    %v489 = vsel %vm334, %v486, 0
    %491 = vmatprep.subr.mxu0 0.0
    %492 = vmatpush1.xpose.msra.mxu0 %v489
    %493 = vmatprep.subr.mxu0 0.0
    %494 = vmatpush1.xpose.msra.mxu0 0.0
    %495 = vmatprep.subr.mxu0 0.0
    %496 = vmatpush1.xpose.msra.mxu0 0.0
    %497 = vmatprep.subr.mxu0 0.0
    %498 = vmatpush1.xpose.msra.mxu0 0.0
    %499 = vmatprep.subr.mxu0 0.0
    %500 = vmatpush1.xpose.msra.mxu0 0.0
    %501 = vmatprep.subr.mxu0 0.0
    %502 = vmatpush1.xpose.msra.mxu0 0.0
    %503 = vmatprep.subr.mxu0 0.0
    %504 = vmatpush1.xpose.msra.mxu0 0.0
    %505 = vmatprep.subr.mxu0 0.0
    %506 = vmatpush1.xpose.msra.mxu0 0.0
    %507 = vmatprep.subr.mxu0 0.0
    %508 = vmatpush1.xpose.msra.mxu0 0.0
    %509 = vmatprep.subr.mxu0 0.0
    %510 = vmatpush1.xpose.msra.mxu0 0.0
    %511 = vmatprep.subr.mxu0 0.0
    %512 = vmatpush1.xpose.msra.mxu0 0.0
    %513 = vmatprep.subr.mxu0 0.0
    %514 = vmatpush1.xpose.msra.mxu0 0.0
    %515 = vmatprep.subr.mxu0 0.0
    %516 = vmatpush1.xpose.msra.mxu0 0.0
    %517 = vmatprep.subr.mxu0 0.0
    %518 = vmatpush1.xpose.msra.mxu0 0.0
    %519 = vmatprep.subr.mxu0 0.0
    %520 = vmatpush1.xpose.msra.mxu0 0.0
    %521 = vmatprep.subr.mxu0 0.0
    %522 = vmatpush1.xpose.msra.mxu0 0.0
    %523 = vmatprep.subr.mxu0 0.0
    %524 = vmatpush1.xpose.msra.mxu0 0.0
    %525 = vmatprep.subr.mxu0 0.0
    %526 = vmatpush1.xpose.msra.mxu0 0.0
    %527 = vmatprep.subr.mxu0 0.0
    %528 = vmatpush1.xpose.msra.mxu0 0.0
    %529 = vmatprep.subr.mxu0 0.0
    %530 = vmatpush1.xpose.msra.mxu0 0.0
    %531 = vmatprep.subr.mxu0 0.0
    %532 = vmatpush1.xpose.msra.mxu0 0.0
    %533 = vmatprep.subr.mxu0 0.0
    %534 = vmatpush1.xpose.msra.mxu0 0.0
    %535 = vmatprep.subr.mxu0 0.0
    %536 = vmatpush1.xpose.msra.mxu0 0.0
    %537 = vmatprep.subr.mxu0 0.0
    %538 = vmatpush1.xpose.msra.mxu0 0.0
    %539 = vmatprep.subr.mxu0 0.0
    %540 = vmatpush1.xpose.msra.mxu0 0.0
    %541 = vmatprep.subr.mxu0 0.0
    %542 = vmatpush1.xpose.msra.mxu0 0.0
    %543 = vmatprep.subr.mxu0 0.0
    %544 = vmatpush1.xpose.msra.mxu0 0.0
    %545 = vmatprep.subr.mxu0 0.0
    %546 = vmatpush1.xpose.msra.mxu0 0.0
    %547 = vmatprep.subr.mxu0 0.0
    %548 = vmatpush1.xpose.msra.mxu0 0.0
    %549 = vmatprep.subr.mxu0 0.0
    %550 = vmatpush1.xpose.msra.mxu0 0.0
    %551 = vmatprep.subr.mxu0 0.0
    %552 = vmatpush1.xpose.msra.mxu0 0.0
    %553 = vmatprep.subr.mxu0 0.0
    %554 = vmatpush1.xpose.msra.mxu0 0.0
    %555 = vmatprep.mubr.f32.mxu0 0.0
    %556 = vmatmul.mubr.f32.gmra.mrb[0].mxu0 %v487
    %v557 = vpop.f32.mrb[0].mxu0
    %v558 = vadd.f32 0.0, %v557
    %v559 = vpop.f32.mrb[0].mxu0
    %560 = vdwg.mxu0
    %561 = vrot.lane.b32.xlu0 %v323, 96
    %v562 = vpop.permute.xlu0 %561
    %v563 = vsel %vm334, %v323, 0
    %v565 = vsel %vm334, %v562, 0
    %567 = vmatprep.subr.mxu0 0.0
    %568 = vmatpush1.xpose.msra.mxu0 %v565
    %569 = vmatprep.subr.mxu0 0.0
    %570 = vmatpush1.xpose.msra.mxu0 0.0
    %571 = vmatprep.subr.mxu0 0.0
    %572 = vmatpush1.xpose.msra.mxu0 0.0
    %573 = vmatprep.subr.mxu0 0.0
    %574 = vmatpush1.xpose.msra.mxu0 0.0
    %575 = vmatprep.subr.mxu0 0.0
    %576 = vmatpush1.xpose.msra.mxu0 0.0
    %577 = vmatprep.subr.mxu0 0.0
    %578 = vmatpush1.xpose.msra.mxu0 0.0
    %579 = vmatprep.subr.mxu0 0.0
    %580 = vmatpush1.xpose.msra.mxu0 0.0
    %581 = vmatprep.subr.mxu0 0.0
    %582 = vmatpush1.xpose.msra.mxu0 0.0
    %583 = vmatprep.subr.mxu0 0.0
    %584 = vmatpush1.xpose.msra.mxu0 0.0
    %585 = vmatprep.subr.mxu0 0.0
    %586 = vmatpush1.xpose.msra.mxu0 0.0
    %587 = vmatprep.subr.mxu0 0.0
    %588 = vmatpush1.xpose.msra.mxu0 0.0
    %589 = vmatprep.subr.mxu0 0.0
    %590 = vmatpush1.xpose.msra.mxu0 0.0
    %591 = vmatprep.subr.mxu0 0.0
    %592 = vmatpush1.xpose.msra.mxu0 0.0
    %593 = vmatprep.subr.mxu0 0.0
    %594 = vmatpush1.xpose.msra.mxu0 0.0
    %595 = vmatprep.subr.mxu0 0.0
    %596 = vmatpush1.xpose.msra.mxu0 0.0
    %597 = vmatprep.subr.mxu0 0.0
    %598 = vmatpush1.xpose.msra.mxu0 0.0
    %599 = vmatprep.subr.mxu0 0.0
    %600 = vmatpush1.xpose.msra.mxu0 0.0
    %601 = vmatprep.subr.mxu0 0.0
    %602 = vmatpush1.xpose.msra.mxu0 0.0
    %603 = vmatprep.subr.mxu0 0.0
    %604 = vmatpush1.xpose.msra.mxu0 0.0
    %605 = vmatprep.subr.mxu0 0.0
    %606 = vmatpush1.xpose.msra.mxu0 0.0
    %607 = vmatprep.subr.mxu0 0.0
    %608 = vmatpush1.xpose.msra.mxu0 0.0
    %609 = vmatprep.subr.mxu0 0.0
    %610 = vmatpush1.xpose.msra.mxu0 0.0
    %611 = vmatprep.subr.mxu0 0.0
    %612 = vmatpush1.xpose.msra.mxu0 0.0
    %613 = vmatprep.subr.mxu0 0.0
    %614 = vmatpush1.xpose.msra.mxu0 0.0
    %615 = vmatprep.subr.mxu0 0.0
    %616 = vmatpush1.xpose.msra.mxu0 0.0
    %617 = vmatprep.subr.mxu0 0.0
    %618 = vmatpush1.xpose.msra.mxu0 0.0
    %619 = vmatprep.subr.mxu0 0.0
    %620 = vmatpush1.xpose.msra.mxu0 0.0
    %621 = vmatprep.subr.mxu0 0.0
    %622 = vmatpush1.xpose.msra.mxu0 0.0
    %623 = vmatprep.subr.mxu0 0.0
    %624 = vmatpush1.xpose.msra.mxu0 0.0
    %625 = vmatprep.subr.mxu0 0.0
    %626 = vmatpush1.xpose.msra.mxu0 0.0
    %627 = vmatprep.subr.mxu0 0.0
    %628 = vmatpush1.xpose.msra.mxu0 0.0
    %629 = vmatprep.subr.mxu0 0.0
    %630 = vmatpush1.xpose.msra.mxu0 0.0
    %631 = vmatprep.mubr.f32.mxu0 0.0
    %632 = vmatmul.mubr.f32.gmra.mrb[0].mxu0 %v563
    %v633 = vpop.f32.mrb[0].mxu0
    %v634 = vadd.f32 0.0, %v633
    %v635 = vpop.f32.mrb[0].mxu0
    %636 = vdwg.mxu0
    %637 = vrot.lane.b32.xlu0 %v325, 96
    %v638 = vpop.permute.xlu0 %637
    %v639 = vsel %vm334, %v325, 0
    %v641 = vsel %vm334, %v638, 0
    %643 = vmatprep.subr.mxu0 0.0
    %644 = vmatpush1.xpose.msra.mxu0 %v641
    %645 = vmatprep.subr.mxu0 0.0
    %646 = vmatpush1.xpose.msra.mxu0 0.0
    %647 = vmatprep.subr.mxu0 0.0
    %648 = vmatpush1.xpose.msra.mxu0 0.0
    %649 = vmatprep.subr.mxu0 0.0
    %650 = vmatpush1.xpose.msra.mxu0 0.0
    %651 = vmatprep.subr.mxu0 0.0
    %652 = vmatpush1.xpose.msra.mxu0 0.0
    %653 = vmatprep.subr.mxu0 0.0
    %654 = vmatpush1.xpose.msra.mxu0 0.0
    %655 = vmatprep.subr.mxu0 0.0
    %656 = vmatpush1.xpose.msra.mxu0 0.0
    %657 = vmatprep.subr.mxu0 0.0
    %658 = vmatpush1.xpose.msra.mxu0 0.0
    %659 = vmatprep.subr.mxu0 0.0
    %660 = vmatpush1.xpose.msra.mxu0 0.0
    %661 = vmatprep.subr.mxu0 0.0
    %662 = vmatpush1.xpose.msra.mxu0 0.0
    %663 = vmatprep.subr.mxu0 0.0
    %664 = vmatpush1.xpose.msra.mxu0 0.0
    %665 = vmatprep.subr.mxu0 0.0
    %666 = vmatpush1.xpose.msra.mxu0 0.0
    %667 = vmatprep.subr.mxu0 0.0
    %668 = vmatpush1.xpose.msra.mxu0 0.0
    %669 = vmatprep.subr.mxu0 0.0
    %670 = vmatpush1.xpose.msra.mxu0 0.0
    %671 = vmatprep.subr.mxu0 0.0
    %672 = vmatpush1.xpose.msra.mxu0 0.0
    %673 = vmatprep.subr.mxu0 0.0
    %674 = vmatpush1.xpose.msra.mxu0 0.0
    %675 = vmatprep.subr.mxu0 0.0
    %676 = vmatpush1.xpose.msra.mxu0 0.0
    %677 = vmatprep.subr.mxu0 0.0
    %678 = vmatpush1.xpose.msra.mxu0 0.0
    %679 = vmatprep.subr.mxu0 0.0
    %680 = vmatpush1.xpose.msra.mxu0 0.0
    %681 = vmatprep.subr.mxu0 0.0
    %682 = vmatpush1.xpose.msra.mxu0 0.0
    %683 = vmatprep.subr.mxu0 0.0
    %684 = vmatpush1.xpose.msra.mxu0 0.0
    %685 = vmatprep.subr.mxu0 0.0
    %686 = vmatpush1.xpose.msra.mxu0 0.0
    %687 = vmatprep.subr.mxu0 0.0
    %688 = vmatpush1.xpose.msra.mxu0 0.0
    %689 = vmatprep.subr.mxu0 0.0
    %690 = vmatpush1.xpose.msra.mxu0 0.0
    %691 = vmatprep.subr.mxu0 0.0
    %692 = vmatpush1.xpose.msra.mxu0 0.0
    %693 = vmatprep.subr.mxu0 0.0
    %694 = vmatpush1.xpose.msra.mxu0 0.0
    %695 = vmatprep.subr.mxu0 0.0
    %696 = vmatpush1.xpose.msra.mxu0 0.0
    %697 = vmatprep.subr.mxu0 0.0
    %698 = vmatpush1.xpose.msra.mxu0 0.0
    %699 = vmatprep.subr.mxu0 0.0
    %700 = vmatpush1.xpose.msra.mxu0 0.0
    %701 = vmatprep.subr.mxu0 0.0
    %702 = vmatpush1.xpose.msra.mxu0 0.0
    %703 = vmatprep.subr.mxu0 0.0
    %704 = vmatpush1.xpose.msra.mxu0 0.0
    %705 = vmatprep.subr.mxu0 0.0
    %706 = vmatpush1.xpose.msra.mxu0 0.0
    %707 = vmatprep.mubr.f32.mxu0 0.0
    %708 = vmatmul.mubr.f32.gmra.mrb[0].mxu0 %v639
    %v709 = vpop.f32.mrb[0].mxu0
    %v710 = vadd.f32 0.0, %v709
    %v711 = vpop.f32.mrb[0].mxu0
    %712 = vdwg.mxu0
    %713 = vrot.lane.b32.xlu0 %v327, 96
    %v714 = vpop.permute.xlu0 %713
    %v715 = vsel %vm334, %v327, 0
    %v717 = vsel %vm334, %v714, 0
    %719 = vmatprep.subr.mxu0 0.0
    %720 = vmatpush1.xpose.msra.mxu0 %v717
    %721 = vmatprep.subr.mxu0 0.0
    %722 = vmatpush1.xpose.msra.mxu0 0.0
    %723 = vmatprep.subr.mxu0 0.0
    %724 = vmatpush1.xpose.msra.mxu0 0.0
    %725 = vmatprep.subr.mxu0 0.0
    %726 = vmatpush1.xpose.msra.mxu0 0.0
    %727 = vmatprep.subr.mxu0 0.0
    %728 = vmatpush1.xpose.msra.mxu0 0.0
    %729 = vmatprep.subr.mxu0 0.0
    %730 = vmatpush1.xpose.msra.mxu0 0.0
    %731 = vmatprep.subr.mxu0 0.0
    %732 = vmatpush1.xpose.msra.mxu0 0.0
    %733 = vmatprep.subr.mxu0 0.0
    %734 = vmatpush1.xpose.msra.mxu0 0.0
    %735 = vmatprep.subr.mxu0 0.0
    %736 = vmatpush1.xpose.msra.mxu0 0.0
    %737 = vmatprep.subr.mxu0 0.0
    %738 = vmatpush1.xpose.msra.mxu0 0.0
    %739 = vmatprep.subr.mxu0 0.0
    %740 = vmatpush1.xpose.msra.mxu0 0.0
    %741 = vmatprep.subr.mxu0 0.0
    %742 = vmatpush1.xpose.msra.mxu0 0.0
    %743 = vmatprep.subr.mxu0 0.0
    %744 = vmatpush1.xpose.msra.mxu0 0.0
    %745 = vmatprep.subr.mxu0 0.0
    %746 = vmatpush1.xpose.msra.mxu0 0.0
    %747 = vmatprep.subr.mxu0 0.0
    %748 = vmatpush1.xpose.msra.mxu0 0.0
    %749 = vmatprep.subr.mxu0 0.0
    %750 = vmatpush1.xpose.msra.mxu0 0.0
    %751 = vmatprep.subr.mxu0 0.0
    %752 = vmatpush1.xpose.msra.mxu0 0.0
    %753 = vmatprep.subr.mxu0 0.0
    %754 = vmatpush1.xpose.msra.mxu0 0.0
    %755 = vmatprep.subr.mxu0 0.0
    %756 = vmatpush1.xpose.msra.mxu0 0.0
    %757 = vmatprep.subr.mxu0 0.0
    %758 = vmatpush1.xpose.msra.mxu0 0.0
    %759 = vmatprep.subr.mxu0 0.0
    %760 = vmatpush1.xpose.msra.mxu0 0.0
    %761 = vmatprep.subr.mxu0 0.0
    %762 = vmatpush1.xpose.msra.mxu0 0.0
    %763 = vmatprep.subr.mxu0 0.0
    %764 = vmatpush1.xpose.msra.mxu0 0.0
    %765 = vmatprep.subr.mxu0 0.0
    %766 = vmatpush1.xpose.msra.mxu0 0.0
    %767 = vmatprep.subr.mxu0 0.0
    %768 = vmatpush1.xpose.msra.mxu0 0.0
    %769 = vmatprep.subr.mxu0 0.0
    %770 = vmatpush1.xpose.msra.mxu0 0.0
    %771 = vmatprep.subr.mxu0 0.0
    %772 = vmatpush1.xpose.msra.mxu0 0.0
    %773 = vmatprep.subr.mxu0 0.0
    %774 = vmatpush1.xpose.msra.mxu0 0.0
    %775 = vmatprep.subr.mxu0 0.0
    %776 = vmatpush1.xpose.msra.mxu0 0.0
    %777 = vmatprep.subr.mxu0 0.0
    %778 = vmatpush1.xpose.msra.mxu0 0.0
    %779 = vmatprep.subr.mxu0 0.0
    %780 = vmatpush1.xpose.msra.mxu0 0.0
    %781 = vmatprep.subr.mxu0 0.0
    %782 = vmatpush1.xpose.msra.mxu0 0.0
    %783 = vmatprep.mubr.f32.mxu0 0.0
    %784 = vmatmul.mubr.f32.gmra.mrb[0].mxu0 %v715
    %v785 = vpop.f32.mrb[0].mxu0
    %v786 = vadd.f32 0.0, %v785
    %v787 = vpop.f32.mrb[0].mxu0
    %788 = vdwg.mxu0
    %789 = vrot.lane.b32.xlu0 %v329, 96
    %v790 = vpop.permute.xlu0 %789
    %v791 = vsel %vm334, %v329, 0
    %v793 = vsel %vm334, %v790, 0
    %795 = vmatprep.subr.mxu0 0.0
    %796 = vmatpush1.xpose.msra.mxu0 %v793
    %797 = vmatprep.subr.mxu0 0.0
    %798 = vmatpush1.xpose.msra.mxu0 0.0
    %799 = vmatprep.subr.mxu0 0.0
    %800 = vmatpush1.xpose.msra.mxu0 0.0
    %801 = vmatprep.subr.mxu0 0.0
    %802 = vmatpush1.xpose.msra.mxu0 0.0
    %803 = vmatprep.subr.mxu0 0.0
    %804 = vmatpush1.xpose.msra.mxu0 0.0
    %805 = vmatprep.subr.mxu0 0.0
    %806 = vmatpush1.xpose.msra.mxu0 0.0
    %807 = vmatprep.subr.mxu0 0.0
    %808 = vmatpush1.xpose.msra.mxu0 0.0
    %809 = vmatprep.subr.mxu0 0.0
    %810 = vmatpush1.xpose.msra.mxu0 0.0
    %811 = vmatprep.subr.mxu0 0.0
    %812 = vmatpush1.xpose.msra.mxu0 0.0
    %813 = vmatprep.subr.mxu0 0.0
    %814 = vmatpush1.xpose.msra.mxu0 0.0
    %815 = vmatprep.subr.mxu0 0.0
    %816 = vmatpush1.xpose.msra.mxu0 0.0
    %817 = vmatprep.subr.mxu0 0.0
    %818 = vmatpush1.xpose.msra.mxu0 0.0
    %819 = vmatprep.subr.mxu0 0.0
    %820 = vmatpush1.xpose.msra.mxu0 0.0
    %821 = vmatprep.subr.mxu0 0.0
    %822 = vmatpush1.xpose.msra.mxu0 0.0
    %823 = vmatprep.subr.mxu0 0.0
    %824 = vmatpush1.xpose.msra.mxu0 0.0
    %825 = vmatprep.subr.mxu0 0.0
    %826 = vmatpush1.xpose.msra.mxu0 0.0
    %827 = vmatprep.subr.mxu0 0.0
    %828 = vmatpush1.xpose.msra.mxu0 0.0
    %829 = vmatprep.subr.mxu0 0.0
    %830 = vmatpush1.xpose.msra.mxu0 0.0
    %831 = vmatprep.subr.mxu0 0.0
    %832 = vmatpush1.xpose.msra.mxu0 0.0
    %833 = vmatprep.subr.mxu0 0.0
    %834 = vmatpush1.xpose.msra.mxu0 0.0
    %835 = vmatprep.subr.mxu0 0.0
    %836 = vmatpush1.xpose.msra.mxu0 0.0
    %837 = vmatprep.subr.mxu0 0.0
    %838 = vmatpush1.xpose.msra.mxu0 0.0
    %839 = vmatprep.subr.mxu0 0.0
    %840 = vmatpush1.xpose.msra.mxu0 0.0
    %841 = vmatprep.subr.mxu0 0.0
    %842 = vmatpush1.xpose.msra.mxu0 0.0
    %843 = vmatprep.subr.mxu0 0.0
    %844 = vmatpush1.xpose.msra.mxu0 0.0
    %845 = vmatprep.subr.mxu0 0.0
    %846 = vmatpush1.xpose.msra.mxu0 0.0
    %847 = vmatprep.subr.mxu0 0.0
    %848 = vmatpush1.xpose.msra.mxu0 0.0
    %849 = vmatprep.subr.mxu0 0.0
    %850 = vmatpush1.xpose.msra.mxu0 0.0
    %851 = vmatprep.subr.mxu0 0.0
    %852 = vmatpush1.xpose.msra.mxu0 0.0
    %853 = vmatprep.subr.mxu0 0.0
    %854 = vmatpush1.xpose.msra.mxu0 0.0
    %855 = vmatprep.subr.mxu0 0.0
    %856 = vmatpush1.xpose.msra.mxu0 0.0
    %857 = vmatprep.subr.mxu0 0.0
    %858 = vmatpush1.xpose.msra.mxu0 0.0
    %859 = vmatprep.mubr.f32.mxu0 0.0
    %860 = vmatmul.mubr.f32.gmra.mrb[0].mxu0 %v791
    %v861 = vpop.f32.mrb[0].mxu0
    %v862 = vadd.f32 0.0, %v861
    %v863 = vpop.f32.mrb[0].mxu0
    %864 = vdwg.mxu0
    %865 = vrot.lane.b32.xlu0 %v331, 96
    %v866 = vpop.permute.xlu0 %865
    %v867 = vsel %vm334, %v331, 0
    %v869 = vsel %vm334, %v866, 0
    %871 = vmatprep.subr.mxu0 0.0
    %872 = vmatpush1.xpose.msra.mxu0 %v869
    %873 = vmatprep.subr.mxu0 0.0
    %874 = vmatpush1.xpose.msra.mxu0 0.0
    %875 = vmatprep.subr.mxu0 0.0
    %876 = vmatpush1.xpose.msra.mxu0 0.0
    %877 = vmatprep.subr.mxu0 0.0
    %878 = vmatpush1.xpose.msra.mxu0 0.0
    %879 = vmatprep.subr.mxu0 0.0
    %880 = vmatpush1.xpose.msra.mxu0 0.0
    %881 = vmatprep.subr.mxu0 0.0
    %882 = vmatpush1.xpose.msra.mxu0 0.0
    %883 = vmatprep.subr.mxu0 0.0
    %884 = vmatpush1.xpose.msra.mxu0 0.0
    %885 = vmatprep.subr.mxu0 0.0
    %886 = vmatpush1.xpose.msra.mxu0 0.0
    %887 = vmatprep.subr.mxu0 0.0
    %888 = vmatpush1.xpose.msra.mxu0 0.0
    %889 = vmatprep.subr.mxu0 0.0
    %890 = vmatpush1.xpose.msra.mxu0 0.0
    %891 = vmatprep.subr.mxu0 0.0
    %892 = vmatpush1.xpose.msra.mxu0 0.0
    %893 = vmatprep.subr.mxu0 0.0
    %894 = vmatpush1.xpose.msra.mxu0 0.0
    %895 = vmatprep.subr.mxu0 0.0
    %896 = vmatpush1.xpose.msra.mxu0 0.0
    %897 = vmatprep.subr.mxu0 0.0
    %898 = vmatpush1.xpose.msra.mxu0 0.0
    %899 = vmatprep.subr.mxu0 0.0
    %900 = vmatpush1.xpose.msra.mxu0 0.0
    %901 = vmatprep.subr.mxu0 0.0
    %902 = vmatpush1.xpose.msra.mxu0 0.0
    %903 = vmatprep.subr.mxu0 0.0
    %904 = vmatpush1.xpose.msra.mxu0 0.0
    %905 = vmatprep.subr.mxu0 0.0
    %906 = vmatpush1.xpose.msra.mxu0 0.0
    %907 = vmatprep.subr.mxu0 0.0
    %908 = vmatpush1.xpose.msra.mxu0 0.0
    %909 = vmatprep.subr.mxu0 0.0
    %910 = vmatpush1.xpose.msra.mxu0 0.0
    %911 = vmatprep.subr.mxu0 0.0
    %912 = vmatpush1.xpose.msra.mxu0 0.0
    %913 = vmatprep.subr.mxu0 0.0
    %914 = vmatpush1.xpose.msra.mxu0 0.0
    %915 = vmatprep.subr.mxu0 0.0
    %916 = vmatpush1.xpose.msra.mxu0 0.0
    %917 = vmatprep.subr.mxu0 0.0
    %918 = vmatpush1.xpose.msra.mxu0 0.0
    %919 = vmatprep.subr.mxu0 0.0
    %920 = vmatpush1.xpose.msra.mxu0 0.0
    %921 = vmatprep.subr.mxu0 0.0
    %922 = vmatpush1.xpose.msra.mxu0 0.0
    %923 = vmatprep.subr.mxu0 0.0
    %924 = vmatpush1.xpose.msra.mxu0 0.0
    %925 = vmatprep.subr.mxu0 0.0
    %926 = vmatpush1.xpose.msra.mxu0 0.0
    %927 = vmatprep.subr.mxu0 0.0
    %928 = vmatpush1.xpose.msra.mxu0 0.0
    %929 = vmatprep.subr.mxu0 0.0
    %930 = vmatpush1.xpose.msra.mxu0 0.0
    %931 = vmatprep.subr.mxu0 0.0
    %932 = vmatpush1.xpose.msra.mxu0 0.0
    %933 = vmatprep.subr.mxu0 0.0
    %934 = vmatpush1.xpose.msra.mxu0 0.0
    %935 = vmatprep.mubr.f32.mxu0 0.0
    %936 = vmatmul.mubr.f32.gmra.mrb[0].mxu0 %v867
    %v937 = vpop.f32.mrb[0].mxu0
    %v938 = vadd.f32 0.0, %v937
    %v939 = vpop.f32.mrb[0].mxu0
    %940 = vdwg.mxu0
    %v941 = vmul.f32 %v406, 0.35355338
    %v942 = vmul.f32 %v482, 0.35355338
    %v943 = vmul.f32 %v558, 0.35355338
    %v944 = vmul.f32 %v634, 0.35355338
    %v945 = vmul.f32 %v710, 0.35355338
    %v946 = vmul.f32 %v786, 0.35355338
    %v947 = vmul.f32 %v862, 0.35355338
    %v948 = vmul.f32 %v938, 0.35355338
    %v949 = vadd.f32 %v941, %v218
    %v950 = vadd.f32 %v942, %v222
    %v951 = vadd.f32 %v943, %v218
    %v952 = vadd.f32 %v944, %v222
    %v953 = vadd.f32 %v945, %v218
    %v954 = vadd.f32 %v946, %v222
    %v955 = vadd.f32 %v947, %v218
    %v956 = vadd.f32 %v948, %v222
    %v957 = vsel %vm334, %v949, -inf
    %958 = vmax.xlane.f32.xlu0 %v957
    %v959 = vpop.xlane.xlu0 %958
    %v960 = vsel %vm334, %v950, -inf
    %961 = vmax.xlane.f32.xlu0 %v960
    %v962 = vpop.xlane.xlu0 %961
    %v963 = vsel %vm334, %v951, -inf
    %964 = vmax.xlane.f32.xlu0 %v963
    %v965 = vpop.xlane.xlu0 %964
    %v966 = vsel %vm334, %v952, -inf
    %967 = vmax.xlane.f32.xlu0 %v966
    %v968 = vpop.xlane.xlu0 %967
    %v969 = vsel %vm334, %v953, -inf
    %970 = vmax.xlane.f32.xlu0 %v969
    %v971 = vpop.xlane.xlu0 %970
    %v972 = vsel %vm334, %v954, -inf
    %973 = vmax.xlane.f32.xlu0 %v972
    %v974 = vpop.xlane.xlu0 %973
    %v975 = vsel %vm334, %v955, -inf
    %976 = vmax.xlane.f32.xlu0 %v975
    %v977 = vpop.xlane.xlu0 %976
    %v978 = vsel %vm334, %v956, -inf
    %979 = vmax.xlane.f32.xlu0 %v978
    %v980 = vpop.xlane.xlu0 %979
    %v981 = vsub.f32 %v949, %v959
    %v982 = vsub.f32 %v950, %v962
    %v983 = vsub.f32 %v951, %v965
    %v984 = vsub.f32 %v952, %v968
    %v985 = vsub.f32 %v953, %v971
    %v986 = vsub.f32 %v954, %v974
    %v987 = vsub.f32 %v955, %v977
    %v988 = vsub.f32 %v956, %v980
    %v989 = vmul.f32 %v981, 1.442695
    %v990 = vpow.pop %v989
    %v991 = vmul.f32 %v982, 1.442695
    %v992 = vpow.pop %v991
    %v993 = vmul.f32 %v983, 1.442695
    %v994 = vpow.pop %v993
    %v995 = vmul.f32 %v984, 1.442695
    %v996 = vpow.pop %v995
    %v997 = vmul.f32 %v985, 1.442695
    %v998 = vpow.pop %v997
    %v999 = vmul.f32 %v986, 1.442695
    %v1000 = vpow.pop %v999
    %v1001 = vmul.f32 %v987, 1.442695
    %v1002 = vpow.pop %v1001
    %v1003 = vmul.f32 %v988, 1.442695
    %v1004 = vpow.pop %v1003
    %v1005 = vsel %vm334, %v990, 0.0
    %1006 = vadd.xlane.f32.xlu0 %v1005
    %v1007 = vpop.xlane.xlu0 %1006
    %v1008 = vsel %vm334, %v992, 0.0
    %1009 = vadd.xlane.f32.xlu0 %v1008
    %v1010 = vpop.xlane.xlu0 %1009
    %v1011 = vsel %vm334, %v994, 0.0
    %1012 = vadd.xlane.f32.xlu0 %v1011
    %v1013 = vpop.xlane.xlu0 %1012
    %v1014 = vsel %vm334, %v996, 0.0
    %1015 = vadd.xlane.f32.xlu0 %v1014
    %v1016 = vpop.xlane.xlu0 %1015
    %v1017 = vsel %vm334, %v998, 0.0
    %1018 = vadd.xlane.f32.xlu0 %v1017
    %v1019 = vpop.xlane.xlu0 %1018
    %v1020 = vsel %vm334, %v1000, 0.0
    %1021 = vadd.xlane.f32.xlu0 %v1020
    %v1022 = vpop.xlane.xlu0 %1021
    %v1023 = vsel %vm334, %v1002, 0.0
    %1024 = vadd.xlane.f32.xlu0 %v1023
    %v1025 = vpop.xlane.xlu0 %1024
    %v1026 = vsel %vm334, %v1004, 0.0
    %1027 = vadd.xlane.f32.xlu0 %v1026
    %v1028 = vpop.xlane.xlu0 %1027
    %v1029 = vrcp.pop %v1007
    %v1030 = vrcp.pop %v1010
    %v1031 = vrcp.pop %v1013
    %v1032 = vrcp.pop %v1016
    %v1033 = vrcp.pop %v1019
    %v1034 = vrcp.pop %v1022
    %v1035 = vrcp.pop %v1025
    %v1036 = vrcp.pop %v1028
    %v1037 = vmul.f32 %v990, %v1029
    %v1038 = vmul.f32 %v992, %v1030
    %v1039 = vmul.f32 %v994, %v1031
    %v1040 = vmul.f32 %v996, %v1032
    %v1041 = vmul.f32 %v998, %v1033
    %v1042 = vmul.f32 %v1000, %v1034
    %v1043 = vmul.f32 %v1002, %v1035
    %v1044 = vmul.f32 %v1004, %v1036
    %1045 = vrot.lane.b32.xlu0 %v310, 64
    %v1046 = vpop.permute.xlu0 %1045
    %v1049 = vsel %vm334, %v1037, 0
    %1051 = vmatprep.subr.mxu0 0.0
    %1052 = vmatpush1.msra.mxu0 %v1046
    %1053 = vmatprep.subr.mxu0 0.0
    %1054 = vmatpush1.msra.mxu0 0.0
    %1055 = vmatprep.subr.mxu0 0.0
    %1056 = vmatpush1.msra.mxu0 0.0
    %1057 = vmatprep.subr.mxu0 0.0
    %1058 = vmatpush1.msra.mxu0 0.0
    %1059 = vmatprep.subr.mxu0 0.0
    %1060 = vmatpush1.msra.mxu0 0.0
    %1061 = vmatprep.subr.mxu0 0.0
    %1062 = vmatpush1.msra.mxu0 0.0
    %1063 = vmatprep.subr.mxu0 0.0
    %1064 = vmatpush1.msra.mxu0 0.0
    %1065 = vmatprep.subr.mxu0 0.0
    %1066 = vmatpush1.msra.mxu0 0.0
    %1067 = vmatprep.subr.mxu0 0.0
    %1068 = vmatpush1.msra.mxu0 0.0
    %1069 = vmatprep.subr.mxu0 0.0
    %1070 = vmatpush1.msra.mxu0 0.0
    %1071 = vmatprep.subr.mxu0 0.0
    %1072 = vmatpush1.msra.mxu0 0.0
    %1073 = vmatprep.subr.mxu0 0.0
    %1074 = vmatpush1.msra.mxu0 0.0
    %1075 = vmatprep.subr.mxu0 0.0
    %1076 = vmatpush1.msra.mxu0 0.0
    %1077 = vmatprep.subr.mxu0 0.0
    %1078 = vmatpush1.msra.mxu0 0.0
    %1079 = vmatprep.subr.mxu0 0.0
    %1080 = vmatpush1.msra.mxu0 0.0
    %1081 = vmatprep.subr.mxu0 0.0
    %1082 = vmatpush1.msra.mxu0 0.0
    %1083 = vmatprep.subr.mxu0 0.0
    %1084 = vmatpush1.msra.mxu0 0.0
    %1085 = vmatprep.subr.mxu0 0.0
    %1086 = vmatpush1.msra.mxu0 0.0
    %1087 = vmatprep.subr.mxu0 0.0
    %1088 = vmatpush1.msra.mxu0 0.0
    %1089 = vmatprep.subr.mxu0 0.0
    %1090 = vmatpush1.msra.mxu0 0.0
    %1091 = vmatprep.subr.mxu0 0.0
    %1092 = vmatpush1.msra.mxu0 0.0
    %1093 = vmatprep.subr.mxu0 0.0
    %1094 = vmatpush1.msra.mxu0 0.0
    %1095 = vmatprep.subr.mxu0 0.0
    %1096 = vmatpush1.msra.mxu0 0.0
    %1097 = vmatprep.subr.mxu0 0.0
    %1098 = vmatpush1.msra.mxu0 0.0
    %1099 = vmatprep.subr.mxu0 0.0
    %1100 = vmatpush1.msra.mxu0 0.0
    %1101 = vmatprep.subr.mxu0 0.0
    %1102 = vmatpush1.msra.mxu0 0.0
    %1103 = vmatprep.subr.mxu0 0.0
    %1104 = vmatpush1.msra.mxu0 0.0
    %1105 = vmatprep.subr.mxu0 0.0
    %1106 = vmatpush1.msra.mxu0 0.0
    %1107 = vmatprep.subr.mxu0 0.0
    %1108 = vmatpush1.msra.mxu0 0.0
    %1109 = vmatprep.subr.mxu0 0.0
    %1110 = vmatpush1.msra.mxu0 0.0
    %1111 = vmatprep.subr.mxu0 0.0
    %1112 = vmatpush1.msra.mxu0 0.0
    %1113 = vmatprep.subr.mxu0 0.0
    %1114 = vmatpush1.msra.mxu0 0.0
    %1115 = vmatprep.mubr.f32.mxu0 0.0
    %1116 = vmatmul.mubr.f32.gmra.mrb[0].mxu0 %v1049
    %v1117 = vpop.f32.mrb[0].mxu0
    %v1118 = vadd.f32 0.0, %v1117
    %v1119 = vpop.f32.mrb[0].mxu0
    %1120 = vdwg.mxu0
    %1121 = vrot.lane.b32.xlu0 %v315, 64
    %v1122 = vpop.permute.xlu0 %1121
    %v1125 = vsel %vm334, %v1038, 0
    %1127 = vmatprep.subr.mxu0 0.0
    %1128 = vmatpush1.msra.mxu0 %v1122
    %1129 = vmatprep.subr.mxu0 0.0
    %1130 = vmatpush1.msra.mxu0 0.0
    %1131 = vmatprep.subr.mxu0 0.0
    %1132 = vmatpush1.msra.mxu0 0.0
    %1133 = vmatprep.subr.mxu0 0.0
    %1134 = vmatpush1.msra.mxu0 0.0
    %1135 = vmatprep.subr.mxu0 0.0
    %1136 = vmatpush1.msra.mxu0 0.0
    %1137 = vmatprep.subr.mxu0 0.0
    %1138 = vmatpush1.msra.mxu0 0.0
    %1139 = vmatprep.subr.mxu0 0.0
    %1140 = vmatpush1.msra.mxu0 0.0
    %1141 = vmatprep.subr.mxu0 0.0
    %1142 = vmatpush1.msra.mxu0 0.0
    %1143 = vmatprep.subr.mxu0 0.0
    %1144 = vmatpush1.msra.mxu0 0.0
    %1145 = vmatprep.subr.mxu0 0.0
    %1146 = vmatpush1.msra.mxu0 0.0
    %1147 = vmatprep.subr.mxu0 0.0
    %1148 = vmatpush1.msra.mxu0 0.0
    %1149 = vmatprep.subr.mxu0 0.0
    %1150 = vmatpush1.msra.mxu0 0.0
    %1151 = vmatprep.subr.mxu0 0.0
    %1152 = vmatpush1.msra.mxu0 0.0
    %1153 = vmatprep.subr.mxu0 0.0
    %1154 = vmatpush1.msra.mxu0 0.0
    %1155 = vmatprep.subr.mxu0 0.0
    %1156 = vmatpush1.msra.mxu0 0.0
    %1157 = vmatprep.subr.mxu0 0.0
    %1158 = vmatpush1.msra.mxu0 0.0
    %1159 = vmatprep.subr.mxu0 0.0
    %1160 = vmatpush1.msra.mxu0 0.0
    %1161 = vmatprep.subr.mxu0 0.0
    %1162 = vmatpush1.msra.mxu0 0.0
    %1163 = vmatprep.subr.mxu0 0.0
    %1164 = vmatpush1.msra.mxu0 0.0
    %1165 = vmatprep.subr.mxu0 0.0
    %1166 = vmatpush1.msra.mxu0 0.0
    %1167 = vmatprep.subr.mxu0 0.0
    %1168 = vmatpush1.msra.mxu0 0.0
    %1169 = vmatprep.subr.mxu0 0.0
    %1170 = vmatpush1.msra.mxu0 0.0
    %1171 = vmatprep.subr.mxu0 0.0
    %1172 = vmatpush1.msra.mxu0 0.0
    %1173 = vmatprep.subr.mxu0 0.0
    %1174 = vmatpush1.msra.mxu0 0.0
    %1175 = vmatprep.subr.mxu0 0.0
    %1176 = vmatpush1.msra.mxu0 0.0
    %1177 = vmatprep.subr.mxu0 0.0
    %1178 = vmatpush1.msra.mxu0 0.0
    %1179 = vmatprep.subr.mxu0 0.0
    %1180 = vmatpush1.msra.mxu0 0.0
    %1181 = vmatprep.subr.mxu0 0.0
    %1182 = vmatpush1.msra.mxu0 0.0
    %1183 = vmatprep.subr.mxu0 0.0
    %1184 = vmatpush1.msra.mxu0 0.0
    %1185 = vmatprep.subr.mxu0 0.0
    %1186 = vmatpush1.msra.mxu0 0.0
    %1187 = vmatprep.subr.mxu0 0.0
    %1188 = vmatpush1.msra.mxu0 0.0
    %1189 = vmatprep.subr.mxu0 0.0
    %1190 = vmatpush1.msra.mxu0 0.0
    %1191 = vmatprep.mubr.f32.mxu0 0.0
    %1192 = vmatmul.mubr.f32.gmra.mrb[0].mxu0 %v1125
    %v1193 = vpop.f32.mrb[0].mxu0
    %v1194 = vadd.f32 0.0, %v1193
    %v1195 = vpop.f32.mrb[0].mxu0
    %1196 = vdwg.mxu0
    %1197 = vrot.lane.b32.xlu0 %v321, 64
    %v1198 = vpop.permute.xlu0 %1197
    %v1201 = vsel %vm334, %v1039, 0
    %1203 = vmatprep.subr.mxu0 0.0
    %1204 = vmatpush1.msra.mxu0 %v1198
    %1205 = vmatprep.subr.mxu0 0.0
    %1206 = vmatpush1.msra.mxu0 0.0
    %1207 = vmatprep.subr.mxu0 0.0
    %1208 = vmatpush1.msra.mxu0 0.0
    %1209 = vmatprep.subr.mxu0 0.0
    %1210 = vmatpush1.msra.mxu0 0.0
    %1211 = vmatprep.subr.mxu0 0.0
    %1212 = vmatpush1.msra.mxu0 0.0
    %1213 = vmatprep.subr.mxu0 0.0
    %1214 = vmatpush1.msra.mxu0 0.0
    %1215 = vmatprep.subr.mxu0 0.0
    %1216 = vmatpush1.msra.mxu0 0.0
    %1217 = vmatprep.subr.mxu0 0.0
    %1218 = vmatpush1.msra.mxu0 0.0
    %1219 = vmatprep.subr.mxu0 0.0
    %1220 = vmatpush1.msra.mxu0 0.0
    %1221 = vmatprep.subr.mxu0 0.0
    %1222 = vmatpush1.msra.mxu0 0.0
    %1223 = vmatprep.subr.mxu0 0.0
    %1224 = vmatpush1.msra.mxu0 0.0
    %1225 = vmatprep.subr.mxu0 0.0
    %1226 = vmatpush1.msra.mxu0 0.0
    %1227 = vmatprep.subr.mxu0 0.0
    %1228 = vmatpush1.msra.mxu0 0.0
    %1229 = vmatprep.subr.mxu0 0.0
    %1230 = vmatpush1.msra.mxu0 0.0
    %1231 = vmatprep.subr.mxu0 0.0
    %1232 = vmatpush1.msra.mxu0 0.0
    %1233 = vmatprep.subr.mxu0 0.0
    %1234 = vmatpush1.msra.mxu0 0.0
    %1235 = vmatprep.subr.mxu0 0.0
    %1236 = vmatpush1.msra.mxu0 0.0
    %1237 = vmatprep.subr.mxu0 0.0
    %1238 = vmatpush1.msra.mxu0 0.0
    %1239 = vmatprep.subr.mxu0 0.0
    %1240 = vmatpush1.msra.mxu0 0.0
    %1241 = vmatprep.subr.mxu0 0.0
    %1242 = vmatpush1.msra.mxu0 0.0
    %1243 = vmatprep.subr.mxu0 0.0
    %1244 = vmatpush1.msra.mxu0 0.0
    %1245 = vmatprep.subr.mxu0 0.0
    %1246 = vmatpush1.msra.mxu0 0.0
    %1247 = vmatprep.subr.mxu0 0.0
    %1248 = vmatpush1.msra.mxu0 0.0
    %1249 = vmatprep.subr.mxu0 0.0
    %1250 = vmatpush1.msra.mxu0 0.0
    %1251 = vmatprep.subr.mxu0 0.0
    %1252 = vmatpush1.msra.mxu0 0.0
    %1253 = vmatprep.subr.mxu0 0.0
    %1254 = vmatpush1.msra.mxu0 0.0
    %1255 = vmatprep.subr.mxu0 0.0
    %1256 = vmatpush1.msra.mxu0 0.0
    %1257 = vmatprep.subr.mxu0 0.0
    %1258 = vmatpush1.msra.mxu0 0.0
    %1259 = vmatprep.subr.mxu0 0.0
    %1260 = vmatpush1.msra.mxu0 0.0
    %1261 = vmatprep.subr.mxu0 0.0
    %1262 = vmatpush1.msra.mxu0 0.0
    %1263 = vmatprep.subr.mxu0 0.0
    %1264 = vmatpush1.msra.mxu0 0.0
    %1265 = vmatprep.subr.mxu0 0.0
    %1266 = vmatpush1.msra.mxu0 0.0
    %1267 = vmatprep.mubr.f32.mxu0 0.0
    %1268 = vmatmul.mubr.f32.gmra.mrb[0].mxu0 %v1201
    %v1269 = vpop.f32.mrb[0].mxu0
    %v1270 = vadd.f32 0.0, %v1269
    %v1271 = vpop.f32.mrb[0].mxu0
    %1272 = vdwg.mxu0
    %1273 = vrot.lane.b32.xlu0 %v323, 64
    %v1274 = vpop.permute.xlu0 %1273
    %v1277 = vsel %vm334, %v1040, 0
    %1279 = vmatprep.subr.mxu0 0.0
    %1280 = vmatpush1.msra.mxu0 %v1274
    %1281 = vmatprep.subr.mxu0 0.0
    %1282 = vmatpush1.msra.mxu0 0.0
    %1283 = vmatprep.subr.mxu0 0.0
    %1284 = vmatpush1.msra.mxu0 0.0
    %1285 = vmatprep.subr.mxu0 0.0
    %1286 = vmatpush1.msra.mxu0 0.0
    %1287 = vmatprep.subr.mxu0 0.0
    %1288 = vmatpush1.msra.mxu0 0.0
    %1289 = vmatprep.subr.mxu0 0.0
    %1290 = vmatpush1.msra.mxu0 0.0
    %1291 = vmatprep.subr.mxu0 0.0
    %1292 = vmatpush1.msra.mxu0 0.0
    %1293 = vmatprep.subr.mxu0 0.0
    %1294 = vmatpush1.msra.mxu0 0.0
    %1295 = vmatprep.subr.mxu0 0.0
    %1296 = vmatpush1.msra.mxu0 0.0
    %1297 = vmatprep.subr.mxu0 0.0
    %1298 = vmatpush1.msra.mxu0 0.0
    %1299 = vmatprep.subr.mxu0 0.0
    %1300 = vmatpush1.msra.mxu0 0.0
    %1301 = vmatprep.subr.mxu0 0.0
    %1302 = vmatpush1.msra.mxu0 0.0
    %1303 = vmatprep.subr.mxu0 0.0
    %1304 = vmatpush1.msra.mxu0 0.0
    %1305 = vmatprep.subr.mxu0 0.0
    %1306 = vmatpush1.msra.mxu0 0.0
    %1307 = vmatprep.subr.mxu0 0.0
    %1308 = vmatpush1.msra.mxu0 0.0
    %1309 = vmatprep.subr.mxu0 0.0
    %1310 = vmatpush1.msra.mxu0 0.0
    %1311 = vmatprep.subr.mxu0 0.0
    %1312 = vmatpush1.msra.mxu0 0.0
    %1313 = vmatprep.subr.mxu0 0.0
    %1314 = vmatpush1.msra.mxu0 0.0
    %1315 = vmatprep.subr.mxu0 0.0
    %1316 = vmatpush1.msra.mxu0 0.0
    %1317 = vmatprep.subr.mxu0 0.0
    %1318 = vmatpush1.msra.mxu0 0.0
    %1319 = vmatprep.subr.mxu0 0.0
    %1320 = vmatpush1.msra.mxu0 0.0
    %1321 = vmatprep.subr.mxu0 0.0
    %1322 = vmatpush1.msra.mxu0 0.0
    %1323 = vmatprep.subr.mxu0 0.0
    %1324 = vmatpush1.msra.mxu0 0.0
    %1325 = vmatprep.subr.mxu0 0.0
    %1326 = vmatpush1.msra.mxu0 0.0
    %1327 = vmatprep.subr.mxu0 0.0
    %1328 = vmatpush1.msra.mxu0 0.0
    %1329 = vmatprep.subr.mxu0 0.0
    %1330 = vmatpush1.msra.mxu0 0.0
    %1331 = vmatprep.subr.mxu0 0.0
    %1332 = vmatpush1.msra.mxu0 0.0
    %1333 = vmatprep.subr.mxu0 0.0
    %1334 = vmatpush1.msra.mxu0 0.0
    %1335 = vmatprep.subr.mxu0 0.0
    %1336 = vmatpush1.msra.mxu0 0.0
    %1337 = vmatprep.subr.mxu0 0.0
    %1338 = vmatpush1.msra.mxu0 0.0
    %1339 = vmatprep.subr.mxu0 0.0
    %1340 = vmatpush1.msra.mxu0 0.0
    %1341 = vmatprep.subr.mxu0 0.0
    %1342 = vmatpush1.msra.mxu0 0.0
    %1343 = vmatprep.mubr.f32.mxu0 0.0
    %1344 = vmatmul.mubr.f32.gmra.mrb[0].mxu0 %v1277
    %v1345 = vpop.f32.mrb[0].mxu0
    %v1346 = vadd.f32 0.0, %v1345
    %v1347 = vpop.f32.mrb[0].mxu0
    %1348 = vdwg.mxu0
    %1349 = vrot.lane.b32.xlu0 %v325, 64
    %v1350 = vpop.permute.xlu0 %1349
    %v1353 = vsel %vm334, %v1041, 0
    %1355 = vmatprep.subr.mxu0 0.0
    %1356 = vmatpush1.msra.mxu0 %v1350
    %1357 = vmatprep.subr.mxu0 0.0
    %1358 = vmatpush1.msra.mxu0 0.0
    %1359 = vmatprep.subr.mxu0 0.0
    %1360 = vmatpush1.msra.mxu0 0.0
    %1361 = vmatprep.subr.mxu0 0.0
    %1362 = vmatpush1.msra.mxu0 0.0
    %1363 = vmatprep.subr.mxu0 0.0
    %1364 = vmatpush1.msra.mxu0 0.0
    %1365 = vmatprep.subr.mxu0 0.0
    %1366 = vmatpush1.msra.mxu0 0.0
    %1367 = vmatprep.subr.mxu0 0.0
    %1368 = vmatpush1.msra.mxu0 0.0
    %1369 = vmatprep.subr.mxu0 0.0
    %1370 = vmatpush1.msra.mxu0 0.0
    %1371 = vmatprep.subr.mxu0 0.0
    %1372 = vmatpush1.msra.mxu0 0.0
    %1373 = vmatprep.subr.mxu0 0.0
    %1374 = vmatpush1.msra.mxu0 0.0
    %1375 = vmatprep.subr.mxu0 0.0
    %1376 = vmatpush1.msra.mxu0 0.0
    %1377 = vmatprep.subr.mxu0 0.0
    %1378 = vmatpush1.msra.mxu0 0.0
    %1379 = vmatprep.subr.mxu0 0.0
    %1380 = vmatpush1.msra.mxu0 0.0
    %1381 = vmatprep.subr.mxu0 0.0
    %1382 = vmatpush1.msra.mxu0 0.0
    %1383 = vmatprep.subr.mxu0 0.0
    %1384 = vmatpush1.msra.mxu0 0.0
    %1385 = vmatprep.subr.mxu0 0.0
    %1386 = vmatpush1.msra.mxu0 0.0
    %1387 = vmatprep.subr.mxu0 0.0
    %1388 = vmatpush1.msra.mxu0 0.0
    %1389 = vmatprep.subr.mxu0 0.0
    %1390 = vmatpush1.msra.mxu0 0.0
    %1391 = vmatprep.subr.mxu0 0.0
    %1392 = vmatpush1.msra.mxu0 0.0
    %1393 = vmatprep.subr.mxu0 0.0
    %1394 = vmatpush1.msra.mxu0 0.0
    %1395 = vmatprep.subr.mxu0 0.0
    %1396 = vmatpush1.msra.mxu0 0.0
    %1397 = vmatprep.subr.mxu0 0.0
    %1398 = vmatpush1.msra.mxu0 0.0
    %1399 = vmatprep.subr.mxu0 0.0
    %1400 = vmatpush1.msra.mxu0 0.0
    %1401 = vmatprep.subr.mxu0 0.0
    %1402 = vmatpush1.msra.mxu0 0.0
    %1403 = vmatprep.subr.mxu0 0.0
    %1404 = vmatpush1.msra.mxu0 0.0
    %1405 = vmatprep.subr.mxu0 0.0
    %1406 = vmatpush1.msra.mxu0 0.0
    %1407 = vmatprep.subr.mxu0 0.0
    %1408 = vmatpush1.msra.mxu0 0.0
    %1409 = vmatprep.subr.mxu0 0.0
    %1410 = vmatpush1.msra.mxu0 0.0
    %1411 = vmatprep.subr.mxu0 0.0
    %1412 = vmatpush1.msra.mxu0 0.0
    %1413 = vmatprep.subr.mxu0 0.0
    %1414 = vmatpush1.msra.mxu0 0.0
    %1415 = vmatprep.subr.mxu0 0.0
    %1416 = vmatpush1.msra.mxu0 0.0
    %1417 = vmatprep.subr.mxu0 0.0
    %1418 = vmatpush1.msra.mxu0 0.0
    %1419 = vmatprep.mubr.f32.mxu0 0.0
    %1420 = vmatmul.mubr.f32.gmra.mrb[0].mxu0 %v1353
    %v1421 = vpop.f32.mrb[0].mxu0
    %v1422 = vadd.f32 0.0, %v1421
    %v1423 = vpop.f32.mrb[0].mxu0
    %1424 = vdwg.mxu0
    %1425 = vrot.lane.b32.xlu0 %v327, 64
    %v1426 = vpop.permute.xlu0 %1425
    %v1429 = vsel %vm334, %v1042, 0
    %1431 = vmatprep.subr.mxu0 0.0
    %1432 = vmatpush1.msra.mxu0 %v1426
    %1433 = vmatprep.subr.mxu0 0.0
    %1434 = vmatpush1.msra.mxu0 0.0
    %1435 = vmatprep.subr.mxu0 0.0
    %1436 = vmatpush1.msra.mxu0 0.0
    %1437 = vmatprep.subr.mxu0 0.0
    %1438 = vmatpush1.msra.mxu0 0.0
    %1439 = vmatprep.subr.mxu0 0.0
    %1440 = vmatpush1.msra.mxu0 0.0
    %1441 = vmatprep.subr.mxu0 0.0
    %1442 = vmatpush1.msra.mxu0 0.0
    %1443 = vmatprep.subr.mxu0 0.0
    %1444 = vmatpush1.msra.mxu0 0.0
    %1445 = vmatprep.subr.mxu0 0.0
    %1446 = vmatpush1.msra.mxu0 0.0
    %1447 = vmatprep.subr.mxu0 0.0
    %1448 = vmatpush1.msra.mxu0 0.0
    %1449 = vmatprep.subr.mxu0 0.0
    %1450 = vmatpush1.msra.mxu0 0.0
    %1451 = vmatprep.subr.mxu0 0.0
    %1452 = vmatpush1.msra.mxu0 0.0
    %1453 = vmatprep.subr.mxu0 0.0
    %1454 = vmatpush1.msra.mxu0 0.0
    %1455 = vmatprep.subr.mxu0 0.0
    %1456 = vmatpush1.msra.mxu0 0.0
    %1457 = vmatprep.subr.mxu0 0.0
    %1458 = vmatpush1.msra.mxu0 0.0
    %1459 = vmatprep.subr.mxu0 0.0
    %1460 = vmatpush1.msra.mxu0 0.0
    %1461 = vmatprep.subr.mxu0 0.0
    %1462 = vmatpush1.msra.mxu0 0.0
    %1463 = vmatprep.subr.mxu0 0.0
    %1464 = vmatpush1.msra.mxu0 0.0
    %1465 = vmatprep.subr.mxu0 0.0
    %1466 = vmatpush1.msra.mxu0 0.0
    %1467 = vmatprep.subr.mxu0 0.0
    %1468 = vmatpush1.msra.mxu0 0.0
    %1469 = vmatprep.subr.mxu0 0.0
    %1470 = vmatpush1.msra.mxu0 0.0
    %1471 = vmatprep.subr.mxu0 0.0
    %1472 = vmatpush1.msra.mxu0 0.0
    %1473 = vmatprep.subr.mxu0 0.0
    %1474 = vmatpush1.msra.mxu0 0.0
    %1475 = vmatprep.subr.mxu0 0.0
    %1476 = vmatpush1.msra.mxu0 0.0
    %1477 = vmatprep.subr.mxu0 0.0
    %1478 = vmatpush1.msra.mxu0 0.0
    %1479 = vmatprep.subr.mxu0 0.0
    %1480 = vmatpush1.msra.mxu0 0.0
    %1481 = vmatprep.subr.mxu0 0.0
    %1482 = vmatpush1.msra.mxu0 0.0
    %1483 = vmatprep.subr.mxu0 0.0
    %1484 = vmatpush1.msra.mxu0 0.0
    %1485 = vmatprep.subr.mxu0 0.0
    %1486 = vmatpush1.msra.mxu0 0.0
    %1487 = vmatprep.subr.mxu0 0.0
    %1488 = vmatpush1.msra.mxu0 0.0
    %1489 = vmatprep.subr.mxu0 0.0
    %1490 = vmatpush1.msra.mxu0 0.0
    %1491 = vmatprep.subr.mxu0 0.0
    %1492 = vmatpush1.msra.mxu0 0.0
    %1493 = vmatprep.subr.mxu0 0.0
    %1494 = vmatpush1.msra.mxu0 0.0
    %1495 = vmatprep.mubr.f32.mxu0 0.0
    %1496 = vmatmul.mubr.f32.gmra.mrb[0].mxu0 %v1429
    %v1497 = vpop.f32.mrb[0].mxu0
    %v1498 = vadd.f32 0.0, %v1497
    %v1499 = vpop.f32.mrb[0].mxu0
    %1500 = vdwg.mxu0
    %1501 = vrot.lane.b32.xlu0 %v329, 64
    %v1502 = vpop.permute.xlu0 %1501
    %v1505 = vsel %vm334, %v1043, 0
    %1507 = vmatprep.subr.mxu0 0.0
    %1508 = vmatpush1.msra.mxu0 %v1502
    %1509 = vmatprep.subr.mxu0 0.0
    %1510 = vmatpush1.msra.mxu0 0.0
    %1511 = vmatprep.subr.mxu0 0.0
    %1512 = vmatpush1.msra.mxu0 0.0
    %1513 = vmatprep.subr.mxu0 0.0
    %1514 = vmatpush1.msra.mxu0 0.0
    %1515 = vmatprep.subr.mxu0 0.0
    %1516 = vmatpush1.msra.mxu0 0.0
    %1517 = vmatprep.subr.mxu0 0.0
    %1518 = vmatpush1.msra.mxu0 0.0
    %1519 = vmatprep.subr.mxu0 0.0
    %1520 = vmatpush1.msra.mxu0 0.0
    %1521 = vmatprep.subr.mxu0 0.0
    %1522 = vmatpush1.msra.mxu0 0.0
    %1523 = vmatprep.subr.mxu0 0.0
    %1524 = vmatpush1.msra.mxu0 0.0
    %1525 = vmatprep.subr.mxu0 0.0
    %1526 = vmatpush1.msra.mxu0 0.0
    %1527 = vmatprep.subr.mxu0 0.0
    %1528 = vmatpush1.msra.mxu0 0.0
    %1529 = vmatprep.subr.mxu0 0.0
    %1530 = vmatpush1.msra.mxu0 0.0
    %1531 = vmatprep.subr.mxu0 0.0
    %1532 = vmatpush1.msra.mxu0 0.0
    %1533 = vmatprep.subr.mxu0 0.0
    %1534 = vmatpush1.msra.mxu0 0.0
    %1535 = vmatprep.subr.mxu0 0.0
    %1536 = vmatpush1.msra.mxu0 0.0
    %1537 = vmatprep.subr.mxu0 0.0
    %1538 = vmatpush1.msra.mxu0 0.0
    %1539 = vmatprep.subr.mxu0 0.0
    %1540 = vmatpush1.msra.mxu0 0.0
    %1541 = vmatprep.subr.mxu0 0.0
    %1542 = vmatpush1.msra.mxu0 0.0
    %1543 = vmatprep.subr.mxu0 0.0
    %1544 = vmatpush1.msra.mxu0 0.0
    %1545 = vmatprep.subr.mxu0 0.0
    %1546 = vmatpush1.msra.mxu0 0.0
    %1547 = vmatprep.subr.mxu0 0.0
    %1548 = vmatpush1.msra.mxu0 0.0
    %1549 = vmatprep.subr.mxu0 0.0
    %1550 = vmatpush1.msra.mxu0 0.0
    %1551 = vmatprep.subr.mxu0 0.0
    %1552 = vmatpush1.msra.mxu0 0.0
    %1553 = vmatprep.subr.mxu0 0.0
    %1554 = vmatpush1.msra.mxu0 0.0
    %1555 = vmatprep.subr.mxu0 0.0
    %1556 = vmatpush1.msra.mxu0 0.0
    %1557 = vmatprep.subr.mxu0 0.0
    %1558 = vmatpush1.msra.mxu0 0.0
    %1559 = vmatprep.subr.mxu0 0.0
    %1560 = vmatpush1.msra.mxu0 0.0
    %1561 = vmatprep.subr.mxu0 0.0
    %1562 = vmatpush1.msra.mxu0 0.0
    %1563 = vmatprep.subr.mxu0 0.0
    %1564 = vmatpush1.msra.mxu0 0.0
    %1565 = vmatprep.subr.mxu0 0.0
    %1566 = vmatpush1.msra.mxu0 0.0
    %1567 = vmatprep.subr.mxu0 0.0
    %1568 = vmatpush1.msra.mxu0 0.0
    %1569 = vmatprep.subr.mxu0 0.0
    %1570 = vmatpush1.msra.mxu0 0.0
    %1571 = vmatprep.mubr.f32.mxu0 0.0
    %1572 = vmatmul.mubr.f32.gmra.mrb[0].mxu0 %v1505
    %v1573 = vpop.f32.mrb[0].mxu0
    %v1574 = vadd.f32 0.0, %v1573
    %v1575 = vpop.f32.mrb[0].mxu0
    %1576 = vdwg.mxu0
    %1577 = vrot.lane.b32.xlu0 %v331, 64
    %v1578 = vpop.permute.xlu0 %1577
    %v1581 = vsel %vm334, %v1044, 0
    %1583 = vmatprep.subr.mxu0 0.0
    %1584 = vmatpush1.msra.mxu0 %v1578
    %1585 = vmatprep.subr.mxu0 0.0
    %1586 = vmatpush1.msra.mxu0 0.0
    %1587 = vmatprep.subr.mxu0 0.0
    %1588 = vmatpush1.msra.mxu0 0.0
    %1589 = vmatprep.subr.mxu0 0.0
    %1590 = vmatpush1.msra.mxu0 0.0
    %1591 = vmatprep.subr.mxu0 0.0
    %1592 = vmatpush1.msra.mxu0 0.0
    %1593 = vmatprep.subr.mxu0 0.0
    %1594 = vmatpush1.msra.mxu0 0.0
    %1595 = vmatprep.subr.mxu0 0.0
    %1596 = vmatpush1.msra.mxu0 0.0
    %1597 = vmatprep.subr.mxu0 0.0
    %1598 = vmatpush1.msra.mxu0 0.0
    %1599 = vmatprep.subr.mxu0 0.0
    %1600 = vmatpush1.msra.mxu0 0.0
    %1601 = vmatprep.subr.mxu0 0.0
    %1602 = vmatpush1.msra.mxu0 0.0
    %1603 = vmatprep.subr.mxu0 0.0
    %1604 = vmatpush1.msra.mxu0 0.0
    %1605 = vmatprep.subr.mxu0 0.0
    %1606 = vmatpush1.msra.mxu0 0.0
    %1607 = vmatprep.subr.mxu0 0.0
    %1608 = vmatpush1.msra.mxu0 0.0
    %1609 = vmatprep.subr.mxu0 0.0
    %1610 = vmatpush1.msra.mxu0 0.0
    %1611 = vmatprep.subr.mxu0 0.0
    %1612 = vmatpush1.msra.mxu0 0.0
    %1613 = vmatprep.subr.mxu0 0.0
    %1614 = vmatpush1.msra.mxu0 0.0
    %1615 = vmatprep.subr.mxu0 0.0
    %1616 = vmatpush1.msra.mxu0 0.0
    %1617 = vmatprep.subr.mxu0 0.0
    %1618 = vmatpush1.msra.mxu0 0.0
    %1619 = vmatprep.subr.mxu0 0.0
    %1620 = vmatpush1.msra.mxu0 0.0
    %1621 = vmatprep.subr.mxu0 0.0
    %1622 = vmatpush1.msra.mxu0 0.0
    %1623 = vmatprep.subr.mxu0 0.0
    %1624 = vmatpush1.msra.mxu0 0.0
    %1625 = vmatprep.subr.mxu0 0.0
    %1626 = vmatpush1.msra.mxu0 0.0
    %1627 = vmatprep.subr.mxu0 0.0
    %1628 = vmatpush1.msra.mxu0 0.0
    %1629 = vmatprep.subr.mxu0 0.0
    %1630 = vmatpush1.msra.mxu0 0.0
    %1631 = vmatprep.subr.mxu0 0.0
    %1632 = vmatpush1.msra.mxu0 0.0
    %1633 = vmatprep.subr.mxu0 0.0
    %1634 = vmatpush1.msra.mxu0 0.0
    %1635 = vmatprep.subr.mxu0 0.0
    %1636 = vmatpush1.msra.mxu0 0.0
    %1637 = vmatprep.subr.mxu0 0.0
    %1638 = vmatpush1.msra.mxu0 0.0
    %1639 = vmatprep.subr.mxu0 0.0
    %1640 = vmatpush1.msra.mxu0 0.0
    %1641 = vmatprep.subr.mxu0 0.0
    %1642 = vmatpush1.msra.mxu0 0.0
    %1643 = vmatprep.subr.mxu0 0.0
    %1644 = vmatpush1.msra.mxu0 0.0
    %1645 = vmatprep.subr.mxu0 0.0
    %1646 = vmatpush1.msra.mxu0 0.0
    %1647 = vmatprep.mubr.f32.mxu0 0.0
    %1648 = vmatmul.mubr.f32.gmra.mrb[0].mxu0 %v1581
    %v1649 = vpop.f32.mrb[0].mxu0
    %v1650 = vadd.f32 0.0, %v1649
    %v1651 = vpop.f32.mrb[0].mxu0
    %1652 = vdwg.mxu0
    %1655 = vrot.lane.b32.xlu0 %v1270, 8
    %v1656 = vpop.permute.xlu0 %1655
    %1657 = vrot.lane.b32.xlu0 %v1346, 8
    %v1658 = vpop.permute.xlu0 %1657
    %1663 = vrot.lane.b32.xlu0 %v1422, 16
    %v1664 = vpop.permute.xlu0 %1663
    %1665 = vrot.lane.b32.xlu0 %v1498, 16
    %v1666 = vpop.permute.xlu0 %1665
    %1671 = vrot.lane.b32.xlu0 %v1574, 24
    %v1672 = vpop.permute.xlu0 %1671
    %1673 = vrot.lane.b32.xlu0 %v1650, 24
    %v1674 = vpop.permute.xlu0 %1673
    %v1677 = vsel %vm334, %v1118, %v1656
    %v1678 = vsel %vm334, %v1194, %v1658
    %vm1679 = vcmask 130048
    %v1680 = vsel %vm1679, %v1677, %v1664
    %v1681 = vsel %vm1679, %v1678, %v1666
    %vm1682 = vcmask 195584
    %v1683 = vsel %vm1682, %v1680, %v1672
    %v1684 = vsel %vm1682, %v1681, %v1674
    %v1685 = vld [vmem:[%s3] sm:$0xff]
    %v1686 = vld [vmem:[%s3 + $0x10] sm:$0xff]
    %v1687 = vld [vmem:[%s3 + $0x20] sm:$0xff]
    %v1688 = vld [vmem:[%s3 + $0x30] sm:$0xff]
    %s1689 = scalar_lea.vmem %s6, 3
    %v1690 = vld [vmem:[%s1689] sm:$0x1]
    %v1692 = vlaneseq
    %v1693 = vshrl.u32 %v1692, 7
    %v1694 = vsub.s32 0, %v1693
    %v1695 = vrot.slane %v1690, %v1694
    %1701 = vrot.lane.b32.xlu0 %v1685, 32
    %v1702 = vpop.permute.xlu0 %1701
    %1703 = vrot.lane.b32.xlu0 %v1686, 32
    %v1704 = vpop.permute.xlu0 %1703
    %1705 = vrot.lane.b32.xlu0 %v1687, 32
    %v1706 = vpop.permute.xlu0 %1705
    %1707 = vrot.lane.b32.xlu0 %v1688, 32
    %v1708 = vpop.permute.xlu0 %1707
    %v1714 = vsel %vm144, %v1683, 0
    %v1717 = vsel %vm144, %v1684, 0
    %1719 = vmatprep.subr.mxu0 0.0
    %1720 = vmatpush1.msra.mxu0 %v1702
    %1721 = vmatprep.subr.mxu0 0.0
    %1722 = vmatpush1.msra.mxu0 %v1704
    %1723 = vmatprep.subr.mxu0 0.0
    %1724 = vmatpush1.msra.mxu0 %v1706
    %1725 = vmatprep.subr.mxu0 0.0
    %1726 = vmatpush1.msra.mxu0 %v1708
    %1727 = vmatprep.subr.mxu0 0.0
    %1728 = vmatpush1.msra.mxu0 0.0
    %1729 = vmatprep.subr.mxu0 0.0
    %1730 = vmatpush1.msra.mxu0 0.0
    %1731 = vmatprep.subr.mxu0 0.0
    %1732 = vmatpush1.msra.mxu0 0.0
    %1733 = vmatprep.subr.mxu0 0.0
    %1734 = vmatpush1.msra.mxu0 0.0
    %1735 = vmatprep.subr.mxu0 0.0
    %1736 = vmatpush1.msra.mxu0 0.0
    %1737 = vmatprep.subr.mxu0 0.0
    %1738 = vmatpush1.msra.mxu0 0.0
    %1739 = vmatprep.subr.mxu0 0.0
    %1740 = vmatpush1.msra.mxu0 0.0
    %1741 = vmatprep.subr.mxu0 0.0
    %1742 = vmatpush1.msra.mxu0 0.0
    %1743 = vmatprep.subr.mxu0 0.0
    %1744 = vmatpush1.msra.mxu0 0.0
    %1745 = vmatprep.subr.mxu0 0.0
    %1746 = vmatpush1.msra.mxu0 0.0
    %1747 = vmatprep.subr.mxu0 0.0
    %1748 = vmatpush1.msra.mxu0 0.0
    %1749 = vmatprep.subr.mxu0 0.0
    %1750 = vmatpush1.msra.mxu0 0.0
    %1751 = vmatprep.subr.mxu0 0.0
    %1752 = vmatpush1.msra.mxu0 0.0
    %1753 = vmatprep.subr.mxu0 0.0
    %1754 = vmatpush1.msra.mxu0 0.0
    %1755 = vmatprep.subr.mxu0 0.0
    %1756 = vmatpush1.msra.mxu0 0.0
    %1757 = vmatprep.subr.mxu0 0.0
    %1758 = vmatpush1.msra.mxu0 0.0
    %1759 = vmatprep.subr.mxu0 0.0
    %1760 = vmatpush1.msra.mxu0 0.0
    %1761 = vmatprep.subr.mxu0 0.0
    %1762 = vmatpush1.msra.mxu0 0.0
    %1763 = vmatprep.subr.mxu0 0.0
    %1764 = vmatpush1.msra.mxu0 0.0
    %1765 = vmatprep.subr.mxu0 0.0
    %1766 = vmatpush1.msra.mxu0 0.0
    %1767 = vmatprep.subr.mxu0 0.0
    %1768 = vmatpush1.msra.mxu0 0.0
    %1769 = vmatprep.subr.mxu0 0.0
    %1770 = vmatpush1.msra.mxu0 0.0
    %1771 = vmatprep.subr.mxu0 0.0
    %1772 = vmatpush1.msra.mxu0 0.0
    %1773 = vmatprep.subr.mxu0 0.0
    %1774 = vmatpush1.msra.mxu0 0.0
    %1775 = vmatprep.subr.mxu0 0.0
    %1776 = vmatpush1.msra.mxu0 0.0
    %1777 = vmatprep.subr.mxu0 0.0
    %1778 = vmatpush1.msra.mxu0 0.0
    %1779 = vmatprep.subr.mxu0 0.0
    %1780 = vmatpush1.msra.mxu0 0.0
    %1781 = vmatprep.subr.mxu0 0.0
    %1782 = vmatpush1.msra.mxu0 0.0
    %1783 = vmatprep.mubr.f32.mxu0 0.0
    %1784 = vmatmul.mubr.f32.gmra.mrb[0].mxu0 %v1714
    %v1785 = vpop.f32.mrb[0].mxu0
    %v1786 = vadd.f32 %v1695, %v1785
    %v1787 = vpop.f32.mrb[0].mxu0
    %1788 = vmatprep.mubr.f32.mxu0 0.0
    %1789 = vmatmul.mubr.f32.gmra.mrb[0].mxu0 %v1717
    %v1790 = vpop.f32.mrb[0].mxu0
    %v1791 = vadd.f32 %v1695, %v1790
    %v1792 = vpop.f32.mrb[0].mxu0
    %1793 = vdwg.mxu0
    %v1794 = vadd.f32 %v1786, %v186
    %v1795 = vadd.f32 %v1791, %v187
    %s1796 = scalar_lea.vmem %s6, 4
    %v1797 = vld [vmem:[%s1796] sm:$0x1]
    %s1798 = scalar_lea.vmem %s6, 5
    %v1799 = vld [vmem:[%s1798] sm:$0x1]
    %v1800 = vsel %vm144, %v1794, 0.0
    %1801 = vadd.xlane.f32.xlu0 %v1800
    %v1802 = vpop.xlane.xlu0 %1801
    %v1803 = vsel %vm144, %v1795, 0.0
    %1804 = vadd.xlane.f32.xlu0 %v1803
    %v1805 = vpop.xlane.xlu0 %1804
    %v1806 = vmul.f32 %v1802, %v151
    %v1807 = vmul.f32 %v1805, %v151
    %v1808 = vsub.f32 %v1794, %v1806
    %v1809 = vsub.f32 %v1795, %v1807
    %v1810 = vmul.f32 %v1808, %v1808
    %v1811 = vmul.f32 %v1809, %v1809
    %v1812 = vsel %vm144, %v1810, 0.0
    %1813 = vadd.xlane.f32.xlu0 %v1812
    %v1814 = vpop.xlane.xlu0 %1813
    %v1815 = vsel %vm144, %v1811, 0.0
    %1816 = vadd.xlane.f32.xlu0 %v1815
    %v1817 = vpop.xlane.xlu0 %1816
    %v1818 = vmul.f32 %v1814, %v151
    %v1819 = vmul.f32 %v1817, %v151
    %v1820 = vadd.f32 %v1818, 1e-12
    %v1821 = vadd.f32 %v1819, 1e-12
    %v1822 = vrsqrt.pop %v1820
    %v1823 = vrsqrt.pop %v1821
    %v1824 = vmul.f32 %v1808, %v1822
    %v1825 = vmul.f32 %v1809, %v1823
    %v1827 = vlaneseq
    %v1828 = vshrl.u32 %v1827, 7
    %v1829 = vsub.s32 0, %v1828
    %v1830 = vrot.slane %v1797, %v1829
    %v1832 = vmul.f32 %v1824, %v1830
    %v1833 = vmul.f32 %v1825, %v1830
    %v1835 = vlaneseq
    %v1836 = vshrl.u32 %v1835, 7
    %v1837 = vsub.s32 0, %v1836
    %v1838 = vrot.slane %v1799, %v1837
    %v1840 = vadd.f32 %v1832, %v1838
    %v1841 = vadd.f32 %v1833, %v1838
    %v1842 = vld [vmem:[%s3 + $0x8] sm:$0xff]
    %v1843 = vld [vmem:[%s3 + $0x18] sm:$0xff]
    %v1844 = vld [vmem:[%s3 + $0x28] sm:$0xff]
    %v1845 = vld [vmem:[%s3 + $0x38] sm:$0xff]
    %s1846 = scalar_lea.vmem %s6, 6
    %v1847 = vld [vmem:[%s1846] sm:$0x1]
    %v1849 = vlaneseq
    %v1850 = vshrl.u32 %v1849, 7
    %v1851 = vsub.s32 0, %v1850
    %v1852 = vrot.slane %v1847, %v1851
    %v1855 = vsel %vm144, %v1840, 0
    %v1858 = vsel %vm144, %v1841, 0
    %1860 = vmatprep.subr.mxu0 0.0
    %1861 = vmatpush1.msra.mxu0 %v1842
    %1862 = vmatprep.subr.mxu0 0.0
    %1863 = vmatpush1.msra.mxu0 %v1843
    %1864 = vmatprep.subr.mxu0 0.0
    %1865 = vmatpush1.msra.mxu0 %v1844
    %1866 = vmatprep.subr.mxu0 0.0
    %1867 = vmatpush1.msra.mxu0 %v1845
    %1868 = vmatprep.subr.mxu0 0.0
    %1869 = vmatpush1.msra.mxu0 0.0
    %1870 = vmatprep.subr.mxu0 0.0
    %1871 = vmatpush1.msra.mxu0 0.0
    %1872 = vmatprep.subr.mxu0 0.0
    %1873 = vmatpush1.msra.mxu0 0.0
    %1874 = vmatprep.subr.mxu0 0.0
    %1875 = vmatpush1.msra.mxu0 0.0
    %1876 = vmatprep.subr.mxu0 0.0
    %1877 = vmatpush1.msra.mxu0 0.0
    %1878 = vmatprep.subr.mxu0 0.0
    %1879 = vmatpush1.msra.mxu0 0.0
    %1880 = vmatprep.subr.mxu0 0.0
    %1881 = vmatpush1.msra.mxu0 0.0
    %1882 = vmatprep.subr.mxu0 0.0
    %1883 = vmatpush1.msra.mxu0 0.0
    %1884 = vmatprep.subr.mxu0 0.0
    %1885 = vmatpush1.msra.mxu0 0.0
    %1886 = vmatprep.subr.mxu0 0.0
    %1887 = vmatpush1.msra.mxu0 0.0
    %1888 = vmatprep.subr.mxu0 0.0
    %1889 = vmatpush1.msra.mxu0 0.0
    %1890 = vmatprep.subr.mxu0 0.0
    %1891 = vmatpush1.msra.mxu0 0.0
    %1892 = vmatprep.subr.mxu0 0.0
    %1893 = vmatpush1.msra.mxu0 0.0
    %1894 = vmatprep.subr.mxu0 0.0
    %1895 = vmatpush1.msra.mxu0 0.0
    %1896 = vmatprep.subr.mxu0 0.0
    %1897 = vmatpush1.msra.mxu0 0.0
    %1898 = vmatprep.subr.mxu0 0.0
    %1899 = vmatpush1.msra.mxu0 0.0
    %1900 = vmatprep.subr.mxu0 0.0
    %1901 = vmatpush1.msra.mxu0 0.0
    %1902 = vmatprep.subr.mxu0 0.0
    %1903 = vmatpush1.msra.mxu0 0.0
    %1904 = vmatprep.subr.mxu0 0.0
    %1905 = vmatpush1.msra.mxu0 0.0
    %1906 = vmatprep.subr.mxu0 0.0
    %1907 = vmatpush1.msra.mxu0 0.0
    %1908 = vmatprep.subr.mxu0 0.0
    %1909 = vmatpush1.msra.mxu0 0.0
    %1910 = vmatprep.subr.mxu0 0.0
    %1911 = vmatpush1.msra.mxu0 0.0
    %1912 = vmatprep.subr.mxu0 0.0
    %1913 = vmatpush1.msra.mxu0 0.0
    %1914 = vmatprep.subr.mxu0 0.0
    %1915 = vmatpush1.msra.mxu0 0.0
    %1916 = vmatprep.subr.mxu0 0.0
    %1917 = vmatpush1.msra.mxu0 0.0
    %1918 = vmatprep.subr.mxu0 0.0
    %1919 = vmatpush1.msra.mxu0 0.0
    %1920 = vmatprep.subr.mxu0 0.0
    %1921 = vmatpush1.msra.mxu0 0.0
    %1922 = vmatprep.subr.mxu0 0.0
    %1923 = vmatpush1.msra.mxu0 0.0
    %1924 = vmatprep.mubr.f32.mxu0 0.0
    %1925 = vmatmul.mubr.f32.gmra.mrb[0].mxu0 %v1855
    %v1926 = vpop.f32.mrb[0].mxu0
    %v1927 = vadd.f32 %v1852, %v1926
    %v1928 = vpop.f32.mrb[0].mxu0
    %1929 = vmatprep.mubr.f32.mxu0 0.0
    %1930 = vmatmul.mubr.f32.gmra.mrb[0].mxu0 %v1858
    %v1931 = vpop.f32.mrb[0].mxu0
    %v1932 = vadd.f32 %v1852, %v1931
    %v1933 = vpop.f32.mrb[0].mxu0
    %1934 = vdwg.mxu0
    %v1935 = vmul.f32 %v1927, %v1927
    %v1936 = vmul.f32 %v1932, %v1932
    %v1937 = vmul.f32 %v1927, %v1935
    %v1938 = vmul.f32 %v1932, %v1936
    %v1939 = vmul.f32 %v1937, 0.044715
    %v1940 = vmul.f32 %v1938, 0.044715
    %v1941 = vadd.f32 %v1927, %v1939
    %v1942 = vadd.f32 %v1932, %v1940
    %v1943 = vmul.f32 %v1941, 0.7978846
    %v1944 = vmul.f32 %v1942, 0.7978846
    %v1945 = vtanh.pop %v1943
    %v1946 = vtanh.pop %v1944
    %v1947 = vadd.f32 %v1945, 1.0
    %v1948 = vadd.f32 %v1946, 1.0
    %v1949 = vmul.f32 %v1947, 0.5
    %v1950 = vmul.f32 %v1948, 0.5
    %v1951 = vmul.f32 %v1927, %v1949
    %v1952 = vmul.f32 %v1932, %v1950
    %v1953 = vld [vmem:[%s4] sm:$0xff]
    %v1954 = vld [vmem:[%s4 + $0x8] sm:$0xff]
    %v1955 = vld [vmem:[%s4 + $0x10] sm:$0xff]
    %v1956 = vld [vmem:[%s4 + $0x18] sm:$0xff]
    %v1957 = vld [vmem:[%s4 + $0x20] sm:$0xff]
    %v1958 = vld [vmem:[%s4 + $0x28] sm:$0xff]
    %v1959 = vld [vmem:[%s4 + $0x30] sm:$0xff]
    %v1960 = vld [vmem:[%s4 + $0x38] sm:$0xff]
    %s1961 = scalar_lea.vmem %s6, 7
    %v1962 = vld [vmem:[%s1961] sm:$0x1]
    %v1964 = vlaneseq
    %v1965 = vshrl.u32 %v1964, 7
    %v1966 = vsub.s32 0, %v1965
    %v1967 = vrot.slane %v1962, %v1966
    %vm1969 = vcmask 523264
    %v1971 = vsel %vm1969, %v1951, 0
    %v1974 = vsel %vm1969, %v1952, 0
    %1976 = vmatprep.subr.mxu0 0.0
    %1977 = vmatpush1.msra.mxu0 %v1953
    %1978 = vmatprep.subr.mxu0 0.0
    %1979 = vmatpush1.msra.mxu0 %v1954
    %1980 = vmatprep.subr.mxu0 0.0
    %1981 = vmatpush1.msra.mxu0 %v1955
    %1982 = vmatprep.subr.mxu0 0.0
    %1983 = vmatpush1.msra.mxu0 %v1956
    %1984 = vmatprep.subr.mxu0 0.0
    %1985 = vmatpush1.msra.mxu0 %v1957
    %1986 = vmatprep.subr.mxu0 0.0
    %1987 = vmatpush1.msra.mxu0 %v1958
    %1988 = vmatprep.subr.mxu0 0.0
    %1989 = vmatpush1.msra.mxu0 %v1959
    %1990 = vmatprep.subr.mxu0 0.0
    %1991 = vmatpush1.msra.mxu0 %v1960
    %1992 = vmatprep.subr.mxu0 0.0
    %1993 = vmatpush1.msra.mxu0 0.0
    %1994 = vmatprep.subr.mxu0 0.0
    %1995 = vmatpush1.msra.mxu0 0.0
    %1996 = vmatprep.subr.mxu0 0.0
    %1997 = vmatpush1.msra.mxu0 0.0
    %1998 = vmatprep.subr.mxu0 0.0
    %1999 = vmatpush1.msra.mxu0 0.0
    %2000 = vmatprep.subr.mxu0 0.0
    %2001 = vmatpush1.msra.mxu0 0.0
    %2002 = vmatprep.subr.mxu0 0.0
    %2003 = vmatpush1.msra.mxu0 0.0
    %2004 = vmatprep.subr.mxu0 0.0
    %2005 = vmatpush1.msra.mxu0 0.0
    %2006 = vmatprep.subr.mxu0 0.0
    %2007 = vmatpush1.msra.mxu0 0.0
    %2008 = vmatprep.subr.mxu0 0.0
    %2009 = vmatpush1.msra.mxu0 0.0
    %2010 = vmatprep.subr.mxu0 0.0
    %2011 = vmatpush1.msra.mxu0 0.0
    %2012 = vmatprep.subr.mxu0 0.0
    %2013 = vmatpush1.msra.mxu0 0.0
    %2014 = vmatprep.subr.mxu0 0.0
    %2015 = vmatpush1.msra.mxu0 0.0
    %2016 = vmatprep.subr.mxu0 0.0
    %2017 = vmatpush1.msra.mxu0 0.0
    %2018 = vmatprep.subr.mxu0 0.0
    %2019 = vmatpush1.msra.mxu0 0.0
    %2020 = vmatprep.subr.mxu0 0.0
    %2021 = vmatpush1.msra.mxu0 0.0
    %2022 = vmatprep.subr.mxu0 0.0
    %2023 = vmatpush1.msra.mxu0 0.0
    %2024 = vmatprep.subr.mxu0 0.0
    %2025 = vmatpush1.msra.mxu0 0.0
    %2026 = vmatprep.subr.mxu0 0.0
    %2027 = vmatpush1.msra.mxu0 0.0
    %2028 = vmatprep.subr.mxu0 0.0
    %2029 = vmatpush1.msra.mxu0 0.0
    %2030 = vmatprep.subr.mxu0 0.0
    %2031 = vmatpush1.msra.mxu0 0.0
    %2032 = vmatprep.subr.mxu0 0.0
    %2033 = vmatpush1.msra.mxu0 0.0
    %2034 = vmatprep.subr.mxu0 0.0
    %2035 = vmatpush1.msra.mxu0 0.0
    %2036 = vmatprep.subr.mxu0 0.0
    %2037 = vmatpush1.msra.mxu0 0.0
    %2038 = vmatprep.subr.mxu0 0.0
    %2039 = vmatpush1.msra.mxu0 0.0
    %2040 = vmatprep.mubr.f32.mxu0 0.0
    %2041 = vmatmul.mubr.f32.gmra.mrb[0].mxu0 %v1971
    %v2042 = vpop.f32.mrb[0].mxu0
    %v2043 = vadd.f32 %v1967, %v2042
    %v2044 = vpop.f32.mrb[0].mxu0
    %2045 = vmatprep.mubr.f32.mxu0 0.0
    %2046 = vmatmul.mubr.f32.gmra.mrb[0].mxu0 %v1974
    %v2047 = vpop.f32.mrb[0].mxu0
    %v2048 = vadd.f32 %v1967, %v2047
    %v2049 = vpop.f32.mrb[0].mxu0
    %2050 = vdwg.mxu0
    %v2051 = vadd.f32 %v2043, %v1840
    %v2052 = vadd.f32 %v2048, %v1841
    %s2053 = scalar_lea.vmem %s6, 8
    %v2054 = vld [vmem:[%s2053] sm:$0x1]
    %s2055 = scalar_lea.vmem %s6, 9
    %v2056 = vld [vmem:[%s2055] sm:$0x1]
    %v2057 = vsel %vm144, %v2051, 0.0
    %2058 = vadd.xlane.f32.xlu0 %v2057
    %v2059 = vpop.xlane.xlu0 %2058
    %v2060 = vsel %vm144, %v2052, 0.0
    %2061 = vadd.xlane.f32.xlu0 %v2060
    %v2062 = vpop.xlane.xlu0 %2061
    %v2063 = vmul.f32 %v2059, %v151
    %v2064 = vmul.f32 %v2062, %v151
    %v2065 = vsub.f32 %v2051, %v2063
    %v2066 = vsub.f32 %v2052, %v2064
    %v2067 = vmul.f32 %v2065, %v2065
    %v2068 = vmul.f32 %v2066, %v2066
    %v2069 = vsel %vm144, %v2067, 0.0
    %2070 = vadd.xlane.f32.xlu0 %v2069
    %v2071 = vpop.xlane.xlu0 %2070
    %v2072 = vsel %vm144, %v2068, 0.0
    %2073 = vadd.xlane.f32.xlu0 %v2072
    %v2074 = vpop.xlane.xlu0 %2073
    %v2075 = vmul.f32 %v2071, %v151
    %v2076 = vmul.f32 %v2074, %v151
    %v2077 = vadd.f32 %v2075, 1e-12
    %v2078 = vadd.f32 %v2076, 1e-12
    %v2079 = vrsqrt.pop %v2077
    %v2080 = vrsqrt.pop %v2078
    %v2081 = vmul.f32 %v2065, %v2079
    %v2082 = vmul.f32 %v2066, %v2080
    %v2084 = vlaneseq
    %v2085 = vshrl.u32 %v2084, 7
    %v2086 = vsub.s32 0, %v2085
    %v2087 = vrot.slane %v2054, %v2086
    %v2089 = vmul.f32 %v2081, %v2087
    %v2090 = vmul.f32 %v2082, %v2087
    %v2092 = vlaneseq
    %v2093 = vshrl.u32 %v2092, 7
    %v2094 = vsub.s32 0, %v2093
    %v2095 = vrot.slane %v2056, %v2094
    %v2097 = vadd.f32 %v2089, %v2095
    %v2098 = vadd.f32 %v2090, %v2095
    %s2099 = scalar_lea.vmem %s3, 64
    %v2100 = vld [vmem:[%s2099] sm:$0xff]
    %v2101 = vld [vmem:[%s2099 + $0x10] sm:$0xff]
    %v2102 = vld [vmem:[%s2099 + $0x20] sm:$0xff]
    %v2103 = vld [vmem:[%s2099 + $0x30] sm:$0xff]
    %s2104 = scalar_lea.vmem %s6, 10
    %v2105 = vld [vmem:[%s2104] sm:$0x1]
    %v2107 = vlaneseq
    %v2108 = vshrl.u32 %v2107, 7
    %v2109 = vsub.s32 0, %v2108
    %v2110 = vrot.slane %v2105, %v2109
    %v2113 = vsel %vm144, %v2097, 0
    %v2116 = vsel %vm144, %v2098, 0
    %2118 = vmatprep.subr.mxu0 0.0
    %2119 = vmatpush1.msra.mxu0 %v2100
    %2120 = vmatprep.subr.mxu0 0.0
    %2121 = vmatpush1.msra.mxu0 %v2101
    %2122 = vmatprep.subr.mxu0 0.0
    %2123 = vmatpush1.msra.mxu0 %v2102
    %2124 = vmatprep.subr.mxu0 0.0
    %2125 = vmatpush1.msra.mxu0 %v2103
    %2126 = vmatprep.subr.mxu0 0.0
    %2127 = vmatpush1.msra.mxu0 0.0
    %2128 = vmatprep.subr.mxu0 0.0
    %2129 = vmatpush1.msra.mxu0 0.0
    %2130 = vmatprep.subr.mxu0 0.0
    %2131 = vmatpush1.msra.mxu0 0.0
    %2132 = vmatprep.subr.mxu0 0.0
    %2133 = vmatpush1.msra.mxu0 0.0
    %2134 = vmatprep.subr.mxu0 0.0
    %2135 = vmatpush1.msra.mxu0 0.0
    %2136 = vmatprep.subr.mxu0 0.0
    %2137 = vmatpush1.msra.mxu0 0.0
    %2138 = vmatprep.subr.mxu0 0.0
    %2139 = vmatpush1.msra.mxu0 0.0
    %2140 = vmatprep.subr.mxu0 0.0
    %2141 = vmatpush1.msra.mxu0 0.0
    %2142 = vmatprep.subr.mxu0 0.0
    %2143 = vmatpush1.msra.mxu0 0.0
    %2144 = vmatprep.subr.mxu0 0.0
    %2145 = vmatpush1.msra.mxu0 0.0
    %2146 = vmatprep.subr.mxu0 0.0
    %2147 = vmatpush1.msra.mxu0 0.0
    %2148 = vmatprep.subr.mxu0 0.0
    %2149 = vmatpush1.msra.mxu0 0.0
    %2150 = vmatprep.subr.mxu0 0.0
    %2151 = vmatpush1.msra.mxu0 0.0
    %2152 = vmatprep.subr.mxu0 0.0
    %2153 = vmatpush1.msra.mxu0 0.0
    %2154 = vmatprep.subr.mxu0 0.0
    %2155 = vmatpush1.msra.mxu0 0.0
    %2156 = vmatprep.subr.mxu0 0.0
    %2157 = vmatpush1.msra.mxu0 0.0
    %2158 = vmatprep.subr.mxu0 0.0
    %2159 = vmatpush1.msra.mxu0 0.0
    %2160 = vmatprep.subr.mxu0 0.0
    %2161 = vmatpush1.msra.mxu0 0.0
    %2162 = vmatprep.subr.mxu0 0.0
    %2163 = vmatpush1.msra.mxu0 0.0
    %2164 = vmatprep.subr.mxu0 0.0
    %2165 = vmatpush1.msra.mxu0 0.0
    %2166 = vmatprep.subr.mxu0 0.0
    %2167 = vmatpush1.msra.mxu0 0.0
    %2168 = vmatprep.subr.mxu0 0.0
    %2169 = vmatpush1.msra.mxu0 0.0
    %2170 = vmatprep.subr.mxu0 0.0
    %2171 = vmatpush1.msra.mxu0 0.0
    %2172 = vmatprep.subr.mxu0 0.0
    %2173 = vmatpush1.msra.mxu0 0.0
    %2174 = vmatprep.subr.mxu0 0.0
    %2175 = vmatpush1.msra.mxu0 0.0
    %2176 = vmatprep.subr.mxu0 0.0
    %2177 = vmatpush1.msra.mxu0 0.0
    %2178 = vmatprep.subr.mxu0 0.0
    %2179 = vmatpush1.msra.mxu0 0.0
    %2180 = vmatprep.subr.mxu0 0.0
    %2181 = vmatpush1.msra.mxu0 0.0
    %2182 = vmatprep.mubr.f32.mxu0 0.0
    %2183 = vmatmul.mubr.f32.gmra.mrb[0].mxu0 %v2113
    %v2184 = vpop.f32.mrb[0].mxu0
    %v2185 = vadd.f32 %v2110, %v2184
    %v2186 = vpop.f32.mrb[0].mxu0
    %2187 = vmatprep.mubr.f32.mxu0 0.0
    %2188 = vmatmul.mubr.f32.gmra.mrb[0].mxu0 %v2116
    %v2189 = vpop.f32.mrb[0].mxu0
    %v2190 = vadd.f32 %v2110, %v2189
    %v2191 = vpop.f32.mrb[0].mxu0
    %2192 = vdwg.mxu0
    %2195 = vrot.lane.b32.xlu0 %v2185, 120
    %v2196 = vpop.permute.xlu0 %2195
    %2197 = vrot.lane.b32.xlu0 %v2190, 120
    %v2198 = vpop.permute.xlu0 %2197
    %2199 = vrot.lane.b32.xlu0 %v2185, 112
    %v2200 = vpop.permute.xlu0 %2199
    %2201 = vrot.lane.b32.xlu0 %v2190, 112
    %v2202 = vpop.permute.xlu0 %2201
    %2203 = vrot.lane.b32.xlu0 %v2185, 104
    %v2204 = vpop.permute.xlu0 %2203
    %2205 = vrot.lane.b32.xlu0 %v2190, 104
    %v2206 = vpop.permute.xlu0 %2205
    %2207 = vrot.lane.b32.xlu0 %v2185, 96
    %v2208 = vpop.permute.xlu0 %2207
    %v2209 = vsel %vm334, %v2185, 0
    %v2211 = vsel %vm334, %v2208, 0
    %2213 = vmatprep.subr.mxu0 0.0
    %2214 = vmatpush1.xpose.msra.mxu0 %v2211
    %2215 = vmatprep.subr.mxu0 0.0
    %2216 = vmatpush1.xpose.msra.mxu0 0.0
    %2217 = vmatprep.subr.mxu0 0.0
    %2218 = vmatpush1.xpose.msra.mxu0 0.0
    %2219 = vmatprep.subr.mxu0 0.0
    %2220 = vmatpush1.xpose.msra.mxu0 0.0
    %2221 = vmatprep.subr.mxu0 0.0
    %2222 = vmatpush1.xpose.msra.mxu0 0.0
    %2223 = vmatprep.subr.mxu0 0.0
    %2224 = vmatpush1.xpose.msra.mxu0 0.0
    %2225 = vmatprep.subr.mxu0 0.0
    %2226 = vmatpush1.xpose.msra.mxu0 0.0
    %2227 = vmatprep.subr.mxu0 0.0
    %2228 = vmatpush1.xpose.msra.mxu0 0.0
    %2229 = vmatprep.subr.mxu0 0.0
    %2230 = vmatpush1.xpose.msra.mxu0 0.0
    %2231 = vmatprep.subr.mxu0 0.0
    %2232 = vmatpush1.xpose.msra.mxu0 0.0
    %2233 = vmatprep.subr.mxu0 0.0
    %2234 = vmatpush1.xpose.msra.mxu0 0.0
    %2235 = vmatprep.subr.mxu0 0.0
    %2236 = vmatpush1.xpose.msra.mxu0 0.0
    %2237 = vmatprep.subr.mxu0 0.0
    %2238 = vmatpush1.xpose.msra.mxu0 0.0
    %2239 = vmatprep.subr.mxu0 0.0
    %2240 = vmatpush1.xpose.msra.mxu0 0.0
    %2241 = vmatprep.subr.mxu0 0.0
    %2242 = vmatpush1.xpose.msra.mxu0 0.0
    %2243 = vmatprep.subr.mxu0 0.0
    %2244 = vmatpush1.xpose.msra.mxu0 0.0
    %2245 = vmatprep.subr.mxu0 0.0
    %2246 = vmatpush1.xpose.msra.mxu0 0.0
    %2247 = vmatprep.subr.mxu0 0.0
    %2248 = vmatpush1.xpose.msra.mxu0 0.0
    %2249 = vmatprep.subr.mxu0 0.0
    %2250 = vmatpush1.xpose.msra.mxu0 0.0
    %2251 = vmatprep.subr.mxu0 0.0
    %2252 = vmatpush1.xpose.msra.mxu0 0.0
    %2253 = vmatprep.subr.mxu0 0.0
    %2254 = vmatpush1.xpose.msra.mxu0 0.0
    %2255 = vmatprep.subr.mxu0 0.0
    %2256 = vmatpush1.xpose.msra.mxu0 0.0
    %2257 = vmatprep.subr.mxu0 0.0
    %2258 = vmatpush1.xpose.msra.mxu0 0.0
    %2259 = vmatprep.subr.mxu0 0.0
    %2260 = vmatpush1.xpose.msra.mxu0 0.0
    %2261 = vmatprep.subr.mxu0 0.0
    %2262 = vmatpush1.xpose.msra.mxu0 0.0
    %2263 = vmatprep.subr.mxu0 0.0
    %2264 = vmatpush1.xpose.msra.mxu0 0.0
    %2265 = vmatprep.subr.mxu0 0.0
    %2266 = vmatpush1.xpose.msra.mxu0 0.0
    %2267 = vmatprep.subr.mxu0 0.0
    %2268 = vmatpush1.xpose.msra.mxu0 0.0
    %2269 = vmatprep.subr.mxu0 0.0
    %2270 = vmatpush1.xpose.msra.mxu0 0.0
    %2271 = vmatprep.subr.mxu0 0.0
    %2272 = vmatpush1.xpose.msra.mxu0 0.0
    %2273 = vmatprep.subr.mxu0 0.0
    %2274 = vmatpush1.xpose.msra.mxu0 0.0
    %2275 = vmatprep.subr.mxu0 0.0
    %2276 = vmatpush1.xpose.msra.mxu0 0.0
    %2277 = vmatprep.mubr.f32.mxu0 0.0
    %2278 = vmatmul.mubr.f32.gmra.mrb[0].mxu0 %v2209
    %v2279 = vpop.f32.mrb[0].mxu0
    %v2280 = vadd.f32 0.0, %v2279
    %v2281 = vpop.f32.mrb[0].mxu0
    %2282 = vdwg.mxu0
    %2283 = vrot.lane.b32.xlu0 %v2190, 96
    %v2284 = vpop.permute.xlu0 %2283
    %v2285 = vsel %vm334, %v2190, 0
    %v2287 = vsel %vm334, %v2284, 0
    %2289 = vmatprep.subr.mxu0 0.0
    %2290 = vmatpush1.xpose.msra.mxu0 %v2287
    %2291 = vmatprep.subr.mxu0 0.0
    %2292 = vmatpush1.xpose.msra.mxu0 0.0
    %2293 = vmatprep.subr.mxu0 0.0
    %2294 = vmatpush1.xpose.msra.mxu0 0.0
    %2295 = vmatprep.subr.mxu0 0.0
    %2296 = vmatpush1.xpose.msra.mxu0 0.0
    %2297 = vmatprep.subr.mxu0 0.0
    %2298 = vmatpush1.xpose.msra.mxu0 0.0
    %2299 = vmatprep.subr.mxu0 0.0
    %2300 = vmatpush1.xpose.msra.mxu0 0.0
    %2301 = vmatprep.subr.mxu0 0.0
    %2302 = vmatpush1.xpose.msra.mxu0 0.0
    %2303 = vmatprep.subr.mxu0 0.0
    %2304 = vmatpush1.xpose.msra.mxu0 0.0
    %2305 = vmatprep.subr.mxu0 0.0
    %2306 = vmatpush1.xpose.msra.mxu0 0.0
    %2307 = vmatprep.subr.mxu0 0.0
    %2308 = vmatpush1.xpose.msra.mxu0 0.0
    %2309 = vmatprep.subr.mxu0 0.0
    %2310 = vmatpush1.xpose.msra.mxu0 0.0
    %2311 = vmatprep.subr.mxu0 0.0
    %2312 = vmatpush1.xpose.msra.mxu0 0.0
    %2313 = vmatprep.subr.mxu0 0.0
    %2314 = vmatpush1.xpose.msra.mxu0 0.0
    %2315 = vmatprep.subr.mxu0 0.0
    %2316 = vmatpush1.xpose.msra.mxu0 0.0
    %2317 = vmatprep.subr.mxu0 0.0
    %2318 = vmatpush1.xpose.msra.mxu0 0.0
    %2319 = vmatprep.subr.mxu0 0.0
    %2320 = vmatpush1.xpose.msra.mxu0 0.0
    %2321 = vmatprep.subr.mxu0 0.0
    %2322 = vmatpush1.xpose.msra.mxu0 0.0
    %2323 = vmatprep.subr.mxu0 0.0
    %2324 = vmatpush1.xpose.msra.mxu0 0.0
    %2325 = vmatprep.subr.mxu0 0.0
    %2326 = vmatpush1.xpose.msra.mxu0 0.0
    %2327 = vmatprep.subr.mxu0 0.0
    %2328 = vmatpush1.xpose.msra.mxu0 0.0
    %2329 = vmatprep.subr.mxu0 0.0
    %2330 = vmatpush1.xpose.msra.mxu0 0.0
    %2331 = vmatprep.subr.mxu0 0.0
    %2332 = vmatpush1.xpose.msra.mxu0 0.0
    %2333 = vmatprep.subr.mxu0 0.0
    %2334 = vmatpush1.xpose.msra.mxu0 0.0
    %2335 = vmatprep.subr.mxu0 0.0
    %2336 = vmatpush1.xpose.msra.mxu0 0.0
    %2337 = vmatprep.subr.mxu0 0.0
    %2338 = vmatpush1.xpose.msra.mxu0 0.0
    %2339 = vmatprep.subr.mxu0 0.0
    %2340 = vmatpush1.xpose.msra.mxu0 0.0
    %2341 = vmatprep.subr.mxu0 0.0
    %2342 = vmatpush1.xpose.msra.mxu0 0.0
    %2343 = vmatprep.subr.mxu0 0.0
    %2344 = vmatpush1.xpose.msra.mxu0 0.0
    %2345 = vmatprep.subr.mxu0 0.0
    %2346 = vmatpush1.xpose.msra.mxu0 0.0
    %2347 = vmatprep.subr.mxu0 0.0
    %2348 = vmatpush1.xpose.msra.mxu0 0.0
    %2349 = vmatprep.subr.mxu0 0.0
    %2350 = vmatpush1.xpose.msra.mxu0 0.0
    %2351 = vmatprep.subr.mxu0 0.0
    %2352 = vmatpush1.xpose.msra.mxu0 0.0
    %2353 = vmatprep.mubr.f32.mxu0 0.0
    %2354 = vmatmul.mubr.f32.gmra.mrb[0].mxu0 %v2285
    %v2355 = vpop.f32.mrb[0].mxu0
    %v2356 = vadd.f32 0.0, %v2355
    %v2357 = vpop.f32.mrb[0].mxu0
    %2358 = vdwg.mxu0
    %2359 = vrot.lane.b32.xlu0 %v2196, 96
    %v2360 = vpop.permute.xlu0 %2359
    %v2361 = vsel %vm334, %v2196, 0
    %v2363 = vsel %vm334, %v2360, 0
    %2365 = vmatprep.subr.mxu0 0.0
    %2366 = vmatpush1.xpose.msra.mxu0 %v2363
    %2367 = vmatprep.subr.mxu0 0.0
    %2368 = vmatpush1.xpose.msra.mxu0 0.0
    %2369 = vmatprep.subr.mxu0 0.0
    %2370 = vmatpush1.xpose.msra.mxu0 0.0
    %2371 = vmatprep.subr.mxu0 0.0
    %2372 = vmatpush1.xpose.msra.mxu0 0.0
    %2373 = vmatprep.subr.mxu0 0.0
    %2374 = vmatpush1.xpose.msra.mxu0 0.0
    %2375 = vmatprep.subr.mxu0 0.0
    %2376 = vmatpush1.xpose.msra.mxu0 0.0
    %2377 = vmatprep.subr.mxu0 0.0
    %2378 = vmatpush1.xpose.msra.mxu0 0.0
    %2379 = vmatprep.subr.mxu0 0.0
    %2380 = vmatpush1.xpose.msra.mxu0 0.0
    %2381 = vmatprep.subr.mxu0 0.0
    %2382 = vmatpush1.xpose.msra.mxu0 0.0
    %2383 = vmatprep.subr.mxu0 0.0
    %2384 = vmatpush1.xpose.msra.mxu0 0.0
    %2385 = vmatprep.subr.mxu0 0.0
    %2386 = vmatpush1.xpose.msra.mxu0 0.0
    %2387 = vmatprep.subr.mxu0 0.0
    %2388 = vmatpush1.xpose.msra.mxu0 0.0
    %2389 = vmatprep.subr.mxu0 0.0
    %2390 = vmatpush1.xpose.msra.mxu0 0.0
    %2391 = vmatprep.subr.mxu0 0.0
    %2392 = vmatpush1.xpose.msra.mxu0 0.0
    %2393 = vmatprep.subr.mxu0 0.0
    %2394 = vmatpush1.xpose.msra.mxu0 0.0
    %2395 = vmatprep.subr.mxu0 0.0
    %2396 = vmatpush1.xpose.msra.mxu0 0.0
    %2397 = vmatprep.subr.mxu0 0.0
    %2398 = vmatpush1.xpose.msra.mxu0 0.0
    %2399 = vmatprep.subr.mxu0 0.0
    %2400 = vmatpush1.xpose.msra.mxu0 0.0
    %2401 = vmatprep.subr.mxu0 0.0
    %2402 = vmatpush1.xpose.msra.mxu0 0.0
    %2403 = vmatprep.subr.mxu0 0.0
    %2404 = vmatpush1.xpose.msra.mxu0 0.0
    %2405 = vmatprep.subr.mxu0 0.0
    %2406 = vmatpush1.xpose.msra.mxu0 0.0
    %2407 = vmatprep.subr.mxu0 0.0
    %2408 = vmatpush1.xpose.msra.mxu0 0.0
    %2409 = vmatprep.subr.mxu0 0.0
    %2410 = vmatpush1.xpose.msra.mxu0 0.0
    %2411 = vmatprep.subr.mxu0 0.0
    %2412 = vmatpush1.xpose.msra.mxu0 0.0
    %2413 = vmatprep.subr.mxu0 0.0
    %2414 = vmatpush1.xpose.msra.mxu0 0.0
    %2415 = vmatprep.subr.mxu0 0.0
    %2416 = vmatpush1.xpose.msra.mxu0 0.0
    %2417 = vmatprep.subr.mxu0 0.0
    %2418 = vmatpush1.xpose.msra.mxu0 0.0
    %2419 = vmatprep.subr.mxu0 0.0
    %2420 = vmatpush1.xpose.msra.mxu0 0.0
    %2421 = vmatprep.subr.mxu0 0.0
    %2422 = vmatpush1.xpose.msra.mxu0 0.0
    %2423 = vmatprep.subr.mxu0 0.0
    %2424 = vmatpush1.xpose.msra.mxu0 0.0
    %2425 = vmatprep.subr.mxu0 0.0
    %2426 = vmatpush1.xpose.msra.mxu0 0.0
    %2427 = vmatprep.subr.mxu0 0.0
    %2428 = vmatpush1.xpose.msra.mxu0 0.0
    %2429 = vmatprep.mubr.f32.mxu0 0.0
    %2430 = vmatmul.mubr.f32.gmra.mrb[0].mxu0 %v2361
    %v2431 = vpop.f32.mrb[0].mxu0
    %v2432 = vadd.f32 0.0, %v2431
    %v2433 = vpop.f32.mrb[0].mxu0
    %2434 = vdwg.mxu0
    %2435 = vrot.lane.b32.xlu0 %v2198, 96
    %v2436 = vpop.permute.xlu0 %2435
    %v2437 = vsel %vm334, %v2198, 0
    %v2439 = vsel %vm334, %v2436, 0
    %2441 = vmatprep.subr.mxu0 0.0
    %2442 = vmatpush1.xpose.msra.mxu0 %v2439
    %2443 = vmatprep.subr.mxu0 0.0
    %2444 = vmatpush1.xpose.msra.mxu0 0.0
    %2445 = vmatprep.subr.mxu0 0.0
    %2446 = vmatpush1.xpose.msra.mxu0 0.0
    %2447 = vmatprep.subr.mxu0 0.0
    %2448 = vmatpush1.xpose.msra.mxu0 0.0
    %2449 = vmatprep.subr.mxu0 0.0
    %2450 = vmatpush1.xpose.msra.mxu0 0.0
    %2451 = vmatprep.subr.mxu0 0.0
    %2452 = vmatpush1.xpose.msra.mxu0 0.0
    %2453 = vmatprep.subr.mxu0 0.0
    %2454 = vmatpush1.xpose.msra.mxu0 0.0
    %2455 = vmatprep.subr.mxu0 0.0
    %2456 = vmatpush1.xpose.msra.mxu0 0.0
    %2457 = vmatprep.subr.mxu0 0.0
    %2458 = vmatpush1.xpose.msra.mxu0 0.0
    %2459 = vmatprep.subr.mxu0 0.0
    %2460 = vmatpush1.xpose.msra.mxu0 0.0
    %2461 = vmatprep.subr.mxu0 0.0
    %2462 = vmatpush1.xpose.msra.mxu0 0.0
    %2463 = vmatprep.subr.mxu0 0.0
    %2464 = vmatpush1.xpose.msra.mxu0 0.0
    %2465 = vmatprep.subr.mxu0 0.0
    %2466 = vmatpush1.xpose.msra.mxu0 0.0
    %2467 = vmatprep.subr.mxu0 0.0
    %2468 = vmatpush1.xpose.msra.mxu0 0.0
    %2469 = vmatprep.subr.mxu0 0.0
    %2470 = vmatpush1.xpose.msra.mxu0 0.0
    %2471 = vmatprep.subr.mxu0 0.0
    %2472 = vmatpush1.xpose.msra.mxu0 0.0
    %2473 = vmatprep.subr.mxu0 0.0
    %2474 = vmatpush1.xpose.msra.mxu0 0.0
    %2475 = vmatprep.subr.mxu0 0.0
    %2476 = vmatpush1.xpose.msra.mxu0 0.0
    %2477 = vmatprep.subr.mxu0 0.0
    %2478 = vmatpush1.xpose.msra.mxu0 0.0
    %2479 = vmatprep.subr.mxu0 0.0
    %2480 = vmatpush1.xpose.msra.mxu0 0.0
    %2481 = vmatprep.subr.mxu0 0.0
    %2482 = vmatpush1.xpose.msra.mxu0 0.0
    %2483 = vmatprep.subr.mxu0 0.0
    %2484 = vmatpush1.xpose.msra.mxu0 0.0
    %2485 = vmatprep.subr.mxu0 0.0
    %2486 = vmatpush1.xpose.msra.mxu0 0.0
    %2487 = vmatprep.subr.mxu0 0.0
    %2488 = vmatpush1.xpose.msra.mxu0 0.0
    %2489 = vmatprep.subr.mxu0 0.0
    %2490 = vmatpush1.xpose.msra.mxu0 0.0
    %2491 = vmatprep.subr.mxu0 0.0
    %2492 = vmatpush1.xpose.msra.mxu0 0.0
    %2493 = vmatprep.subr.mxu0 0.0
    %2494 = vmatpush1.xpose.msra.mxu0 0.0
    %2495 = vmatprep.subr.mxu0 0.0
    %2496 = vmatpush1.xpose.msra.mxu0 0.0
    %2497 = vmatprep.subr.mxu0 0.0
    %2498 = vmatpush1.xpose.msra.mxu0 0.0
    %2499 = vmatprep.subr.mxu0 0.0
    %2500 = vmatpush1.xpose.msra.mxu0 0.0
    %2501 = vmatprep.subr.mxu0 0.0
    %2502 = vmatpush1.xpose.msra.mxu0 0.0
    %2503 = vmatprep.subr.mxu0 0.0
    %2504 = vmatpush1.xpose.msra.mxu0 0.0
    %2505 = vmatprep.mubr.f32.mxu0 0.0
    %2506 = vmatmul.mubr.f32.gmra.mrb[0].mxu0 %v2437
    %v2507 = vpop.f32.mrb[0].mxu0
    %v2508 = vadd.f32 0.0, %v2507
    %v2509 = vpop.f32.mrb[0].mxu0
    %2510 = vdwg.mxu0
    %2511 = vrot.lane.b32.xlu0 %v2200, 96
    %v2512 = vpop.permute.xlu0 %2511
    %v2513 = vsel %vm334, %v2200, 0
    %v2515 = vsel %vm334, %v2512, 0
    %2517 = vmatprep.subr.mxu0 0.0
    %2518 = vmatpush1.xpose.msra.mxu0 %v2515
    %2519 = vmatprep.subr.mxu0 0.0
    %2520 = vmatpush1.xpose.msra.mxu0 0.0
    %2521 = vmatprep.subr.mxu0 0.0
    %2522 = vmatpush1.xpose.msra.mxu0 0.0
    %2523 = vmatprep.subr.mxu0 0.0
    %2524 = vmatpush1.xpose.msra.mxu0 0.0
    %2525 = vmatprep.subr.mxu0 0.0
    %2526 = vmatpush1.xpose.msra.mxu0 0.0
    %2527 = vmatprep.subr.mxu0 0.0
    %2528 = vmatpush1.xpose.msra.mxu0 0.0
    %2529 = vmatprep.subr.mxu0 0.0
    %2530 = vmatpush1.xpose.msra.mxu0 0.0
    %2531 = vmatprep.subr.mxu0 0.0
    %2532 = vmatpush1.xpose.msra.mxu0 0.0
    %2533 = vmatprep.subr.mxu0 0.0
    %2534 = vmatpush1.xpose.msra.mxu0 0.0
    %2535 = vmatprep.subr.mxu0 0.0
    %2536 = vmatpush1.xpose.msra.mxu0 0.0
    %2537 = vmatprep.subr.mxu0 0.0
    %2538 = vmatpush1.xpose.msra.mxu0 0.0
    %2539 = vmatprep.subr.mxu0 0.0
    %2540 = vmatpush1.xpose.msra.mxu0 0.0
    %2541 = vmatprep.subr.mxu0 0.0
    %2542 = vmatpush1.xpose.msra.mxu0 0.0
    %2543 = vmatprep.subr.mxu0 0.0
    %2544 = vmatpush1.xpose.msra.mxu0 0.0
    %2545 = vmatprep.subr.mxu0 0.0
    %2546 = vmatpush1.xpose.msra.mxu0 0.0
    %2547 = vmatprep.subr.mxu0 0.0
    %2548 = vmatpush1.xpose.msra.mxu0 0.0
    %2549 = vmatprep.subr.mxu0 0.0
    %2550 = vmatpush1.xpose.msra.mxu0 0.0
    %2551 = vmatprep.subr.mxu0 0.0
    %2552 = vmatpush1.xpose.msra.mxu0 0.0
    %2553 = vmatprep.subr.mxu0 0.0
    %2554 = vmatpush1.xpose.msra.mxu0 0.0
    %2555 = vmatprep.subr.mxu0 0.0
    %2556 = vmatpush1.xpose.msra.mxu0 0.0
    %2557 = vmatprep.subr.mxu0 0.0
    %2558 = vmatpush1.xpose.msra.mxu0 0.0
    %2559 = vmatprep.subr.mxu0 0.0
    %2560 = vmatpush1.xpose.msra.mxu0 0.0
    %2561 = vmatprep.subr.mxu0 0.0
    %2562 = vmatpush1.xpose.msra.mxu0 0.0
    %2563 = vmatprep.subr.mxu0 0.0
    %2564 = vmatpush1.xpose.msra.mxu0 0.0
    %2565 = vmatprep.subr.mxu0 0.0
    %2566 = vmatpush1.xpose.msra.mxu0 0.0
    %2567 = vmatprep.subr.mxu0 0.0
    %2568 = vmatpush1.xpose.msra.mxu0 0.0
    %2569 = vmatprep.subr.mxu0 0.0
    %2570 = vmatpush1.xpose.msra.mxu0 0.0
    %2571 = vmatprep.subr.mxu0 0.0
    %2572 = vmatpush1.xpose.msra.mxu0 0.0
    %2573 = vmatprep.subr.mxu0 0.0
    %2574 = vmatpush1.xpose.msra.mxu0 0.0
    %2575 = vmatprep.subr.mxu0 0.0
    %2576 = vmatpush1.xpose.msra.mxu0 0.0
    %2577 = vmatprep.subr.mxu0 0.0
    %2578 = vmatpush1.xpose.msra.mxu0 0.0
    %2579 = vmatprep.subr.mxu0 0.0
    %2580 = vmatpush1.xpose.msra.mxu0 0.0
    %2581 = vmatprep.mubr.f32.mxu0 0.0
    %2582 = vmatmul.mubr.f32.gmra.mrb[0].mxu0 %v2513
    %v2583 = vpop.f32.mrb[0].mxu0
    %v2584 = vadd.f32 0.0, %v2583
    %v2585 = vpop.f32.mrb[0].mxu0
    %2586 = vdwg.mxu0
    %2587 = vrot.lane.b32.xlu0 %v2202, 96
    %v2588 = vpop.permute.xlu0 %2587
    %v2589 = vsel %vm334, %v2202, 0
    %v2591 = vsel %vm334, %v2588, 0
    %2593 = vmatprep.subr.mxu0 0.0
    %2594 = vmatpush1.xpose.msra.mxu0 %v2591
    %2595 = vmatprep.subr.mxu0 0.0
    %2596 = vmatpush1.xpose.msra.mxu0 0.0
    %2597 = vmatprep.subr.mxu0 0.0
    %2598 = vmatpush1.xpose.msra.mxu0 0.0
    %2599 = vmatprep.subr.mxu0 0.0
    %2600 = vmatpush1.xpose.msra.mxu0 0.0
    %2601 = vmatprep.subr.mxu0 0.0
    %2602 = vmatpush1.xpose.msra.mxu0 0.0
    %2603 = vmatprep.subr.mxu0 0.0
    %2604 = vmatpush1.xpose.msra.mxu0 0.0
    %2605 = vmatprep.subr.mxu0 0.0
    %2606 = vmatpush1.xpose.msra.mxu0 0.0
    %2607 = vmatprep.subr.mxu0 0.0
    %2608 = vmatpush1.xpose.msra.mxu0 0.0
    %2609 = vmatprep.subr.mxu0 0.0
    %2610 = vmatpush1.xpose.msra.mxu0 0.0
    %2611 = vmatprep.subr.mxu0 0.0
    %2612 = vmatpush1.xpose.msra.mxu0 0.0
    %2613 = vmatprep.subr.mxu0 0.0
    %2614 = vmatpush1.xpose.msra.mxu0 0.0
    %2615 = vmatprep.subr.mxu0 0.0
    %2616 = vmatpush1.xpose.msra.mxu0 0.0
    %2617 = vmatprep.subr.mxu0 0.0
    %2618 = vmatpush1.xpose.msra.mxu0 0.0
    %2619 = vmatprep.subr.mxu0 0.0
    %2620 = vmatpush1.xpose.msra.mxu0 0.0
    %2621 = vmatprep.subr.mxu0 0.0
    %2622 = vmatpush1.xpose.msra.mxu0 0.0
    %2623 = vmatprep.subr.mxu0 0.0
    %2624 = vmatpush1.xpose.msra.mxu0 0.0
    %2625 = vmatprep.subr.mxu0 0.0
    %2626 = vmatpush1.xpose.msra.mxu0 0.0
    %2627 = vmatprep.subr.mxu0 0.0
    %2628 = vmatpush1.xpose.msra.mxu0 0.0
    %2629 = vmatprep.subr.mxu0 0.0
    %2630 = vmatpush1.xpose.msra.mxu0 0.0
    %2631 = vmatprep.subr.mxu0 0.0
    %2632 = vmatpush1.xpose.msra.mxu0 0.0
    %2633 = vmatprep.subr.mxu0 0.0
    %2634 = vmatpush1.xpose.msra.mxu0 0.0
    %2635 = vmatprep.subr.mxu0 0.0
    %2636 = vmatpush1.xpose.msra.mxu0 0.0
    %2637 = vmatprep.subr.mxu0 0.0
    %2638 = vmatpush1.xpose.msra.mxu0 0.0
    %2639 = vmatprep.subr.mxu0 0.0
    %2640 = vmatpush1.xpose.msra.mxu0 0.0
    %2641 = vmatprep.subr.mxu0 0.0
    %2642 = vmatpush1.xpose.msra.mxu0 0.0
    %2643 = vmatprep.subr.mxu0 0.0
    %2644 = vmatpush1.xpose.msra.mxu0 0.0
    %2645 = vmatprep.subr.mxu0 0.0
    %2646 = vmatpush1.xpose.msra.mxu0 0.0
    %2647 = vmatprep.subr.mxu0 0.0
    %2648 = vmatpush1.xpose.msra.mxu0 0.0
    %2649 = vmatprep.subr.mxu0 0.0
    %2650 = vmatpush1.xpose.msra.mxu0 0.0
    %2651 = vmatprep.subr.mxu0 0.0
    %2652 = vmatpush1.xpose.msra.mxu0 0.0
    %2653 = vmatprep.subr.mxu0 0.0
    %2654 = vmatpush1.xpose.msra.mxu0 0.0
    %2655 = vmatprep.subr.mxu0 0.0
    %2656 = vmatpush1.xpose.msra.mxu0 0.0
    %2657 = vmatprep.mubr.f32.mxu0 0.0
    %2658 = vmatmul.mubr.f32.gmra.mrb[0].mxu0 %v2589
    %v2659 = vpop.f32.mrb[0].mxu0
    %v2660 = vadd.f32 0.0, %v2659
    %v2661 = vpop.f32.mrb[0].mxu0
    %2662 = vdwg.mxu0
    %2663 = vrot.lane.b32.xlu0 %v2204, 96
    %v2664 = vpop.permute.xlu0 %2663
    %v2665 = vsel %vm334, %v2204, 0
    %v2667 = vsel %vm334, %v2664, 0
    %2669 = vmatprep.subr.mxu0 0.0
    %2670 = vmatpush1.xpose.msra.mxu0 %v2667
    %2671 = vmatprep.subr.mxu0 0.0
    %2672 = vmatpush1.xpose.msra.mxu0 0.0
    %2673 = vmatprep.subr.mxu0 0.0
    %2674 = vmatpush1.xpose.msra.mxu0 0.0
    %2675 = vmatprep.subr.mxu0 0.0
    %2676 = vmatpush1.xpose.msra.mxu0 0.0
    %2677 = vmatprep.subr.mxu0 0.0
    %2678 = vmatpush1.xpose.msra.mxu0 0.0
    %2679 = vmatprep.subr.mxu0 0.0
    %2680 = vmatpush1.xpose.msra.mxu0 0.0
    %2681 = vmatprep.subr.mxu0 0.0
    %2682 = vmatpush1.xpose.msra.mxu0 0.0
    %2683 = vmatprep.subr.mxu0 0.0
    %2684 = vmatpush1.xpose.msra.mxu0 0.0
    %2685 = vmatprep.subr.mxu0 0.0
    %2686 = vmatpush1.xpose.msra.mxu0 0.0
    %2687 = vmatprep.subr.mxu0 0.0
    %2688 = vmatpush1.xpose.msra.mxu0 0.0
    %2689 = vmatprep.subr.mxu0 0.0
    %2690 = vmatpush1.xpose.msra.mxu0 0.0
    %2691 = vmatprep.subr.mxu0 0.0
    %2692 = vmatpush1.xpose.msra.mxu0 0.0
    %2693 = vmatprep.subr.mxu0 0.0
    %2694 = vmatpush1.xpose.msra.mxu0 0.0
    %2695 = vmatprep.subr.mxu0 0.0
    %2696 = vmatpush1.xpose.msra.mxu0 0.0
    %2697 = vmatprep.subr.mxu0 0.0
    %2698 = vmatpush1.xpose.msra.mxu0 0.0
    %2699 = vmatprep.subr.mxu0 0.0
    %2700 = vmatpush1.xpose.msra.mxu0 0.0
    %2701 = vmatprep.subr.mxu0 0.0
    %2702 = vmatpush1.xpose.msra.mxu0 0.0
    %2703 = vmatprep.subr.mxu0 0.0
    %2704 = vmatpush1.xpose.msra.mxu0 0.0
    %2705 = vmatprep.subr.mxu0 0.0
    %2706 = vmatpush1.xpose.msra.mxu0 0.0
    %2707 = vmatprep.subr.mxu0 0.0
    %2708 = vmatpush1.xpose.msra.mxu0 0.0
    %2709 = vmatprep.subr.mxu0 0.0
    %2710 = vmatpush1.xpose.msra.mxu0 0.0
    %2711 = vmatprep.subr.mxu0 0.0
    %2712 = vmatpush1.xpose.msra.mxu0 0.0
    %2713 = vmatprep.subr.mxu0 0.0
    %2714 = vmatpush1.xpose.msra.mxu0 0.0
    %2715 = vmatprep.subr.mxu0 0.0
    %2716 = vmatpush1.xpose.msra.mxu0 0.0
    %2717 = vmatprep.subr.mxu0 0.0
    %2718 = vmatpush1.xpose.msra.mxu0 0.0
    %2719 = vmatprep.subr.mxu0 0.0
    %2720 = vmatpush1.xpose.msra.mxu0 0.0
    %2721 = vmatprep.subr.mxu0 0.0
    %2722 = vmatpush1.xpose.msra.mxu0 0.0
    %2723 = vmatprep.subr.mxu0 0.0
    %2724 = vmatpush1.xpose.msra.mxu0 0.0
    %2725 = vmatprep.subr.mxu0 0.0
    %2726 = vmatpush1.xpose.msra.mxu0 0.0
    %2727 = vmatprep.subr.mxu0 0.0
    %2728 = vmatpush1.xpose.msra.mxu0 0.0
    %2729 = vmatprep.subr.mxu0 0.0
    %2730 = vmatpush1.xpose.msra.mxu0 0.0
    %2731 = vmatprep.subr.mxu0 0.0
    %2732 = vmatpush1.xpose.msra.mxu0 0.0
    %2733 = vmatprep.mubr.f32.mxu0 0.0
    %2734 = vmatmul.mubr.f32.gmra.mrb[0].mxu0 %v2665
    %v2735 = vpop.f32.mrb[0].mxu0
    %v2736 = vadd.f32 0.0, %v2735
    %v2737 = vpop.f32.mrb[0].mxu0
    %2738 = vdwg.mxu0
    %2739 = vrot.lane.b32.xlu0 %v2206, 96
    %v2740 = vpop.permute.xlu0 %2739
    %v2741 = vsel %vm334, %v2206, 0
    %v2743 = vsel %vm334, %v2740, 0
    %2745 = vmatprep.subr.mxu0 0.0
    %2746 = vmatpush1.xpose.msra.mxu0 %v2743
    %2747 = vmatprep.subr.mxu0 0.0
    %2748 = vmatpush1.xpose.msra.mxu0 0.0
    %2749 = vmatprep.subr.mxu0 0.0
    %2750 = vmatpush1.xpose.msra.mxu0 0.0
    %2751 = vmatprep.subr.mxu0 0.0
    %2752 = vmatpush1.xpose.msra.mxu0 0.0
    %2753 = vmatprep.subr.mxu0 0.0
    %2754 = vmatpush1.xpose.msra.mxu0 0.0
    %2755 = vmatprep.subr.mxu0 0.0
    %2756 = vmatpush1.xpose.msra.mxu0 0.0
    %2757 = vmatprep.subr.mxu0 0.0
    %2758 = vmatpush1.xpose.msra.mxu0 0.0
    %2759 = vmatprep.subr.mxu0 0.0
    %2760 = vmatpush1.xpose.msra.mxu0 0.0
    %2761 = vmatprep.subr.mxu0 0.0
    %2762 = vmatpush1.xpose.msra.mxu0 0.0
    %2763 = vmatprep.subr.mxu0 0.0
    %2764 = vmatpush1.xpose.msra.mxu0 0.0
    %2765 = vmatprep.subr.mxu0 0.0
    %2766 = vmatpush1.xpose.msra.mxu0 0.0
    %2767 = vmatprep.subr.mxu0 0.0
    %2768 = vmatpush1.xpose.msra.mxu0 0.0
    %2769 = vmatprep.subr.mxu0 0.0
    %2770 = vmatpush1.xpose.msra.mxu0 0.0
    %2771 = vmatprep.subr.mxu0 0.0
    %2772 = vmatpush1.xpose.msra.mxu0 0.0
    %2773 = vmatprep.subr.mxu0 0.0
    %2774 = vmatpush1.xpose.msra.mxu0 0.0
    %2775 = vmatprep.subr.mxu0 0.0
    %2776 = vmatpush1.xpose.msra.mxu0 0.0
    %2777 = vmatprep.subr.mxu0 0.0
    %2778 = vmatpush1.xpose.msra.mxu0 0.0
    %2779 = vmatprep.subr.mxu0 0.0
    %2780 = vmatpush1.xpose.msra.mxu0 0.0
    %2781 = vmatprep.subr.mxu0 0.0
    %2782 = vmatpush1.xpose.msra.mxu0 0.0
    %2783 = vmatprep.subr.mxu0 0.0
    %2784 = vmatpush1.xpose.msra.mxu0 0.0
    %2785 = vmatprep.subr.mxu0 0.0
    %2786 = vmatpush1.xpose.msra.mxu0 0.0
    %2787 = vmatprep.subr.mxu0 0.0
    %2788 = vmatpush1.xpose.msra.mxu0 0.0
    %2789 = vmatprep.subr.mxu0 0.0
    %2790 = vmatpush1.xpose.msra.mxu0 0.0
    %2791 = vmatprep.subr.mxu0 0.0
    %2792 = vmatpush1.xpose.msra.mxu0 0.0
    %2793 = vmatprep.subr.mxu0 0.0
    %2794 = vmatpush1.xpose.msra.mxu0 0.0
    %2795 = vmatprep.subr.mxu0 0.0
    %2796 = vmatpush1.xpose.msra.mxu0 0.0
    %2797 = vmatprep.subr.mxu0 0.0
    %2798 = vmatpush1.xpose.msra.mxu0 0.0
    %2799 = vmatprep.subr.mxu0 0.0
    %2800 = vmatpush1.xpose.msra.mxu0 0.0
    %2801 = vmatprep.subr.mxu0 0.0
    %2802 = vmatpush1.xpose.msra.mxu0 0.0
    %2803 = vmatprep.subr.mxu0 0.0
    %2804 = vmatpush1.xpose.msra.mxu0 0.0
    %2805 = vmatprep.subr.mxu0 0.0
    %2806 = vmatpush1.xpose.msra.mxu0 0.0
    %2807 = vmatprep.subr.mxu0 0.0
    %2808 = vmatpush1.xpose.msra.mxu0 0.0
    %2809 = vmatprep.mubr.f32.mxu0 0.0
    %2810 = vmatmul.mubr.f32.gmra.mrb[0].mxu0 %v2741
    %v2811 = vpop.f32.mrb[0].mxu0
    %v2812 = vadd.f32 0.0, %v2811
    %v2813 = vpop.f32.mrb[0].mxu0
    %2814 = vdwg.mxu0
    %v2815 = vmul.f32 %v2280, 0.35355338
    %v2816 = vmul.f32 %v2356, 0.35355338
    %v2817 = vmul.f32 %v2432, 0.35355338
    %v2818 = vmul.f32 %v2508, 0.35355338
    %v2819 = vmul.f32 %v2584, 0.35355338
    %v2820 = vmul.f32 %v2660, 0.35355338
    %v2821 = vmul.f32 %v2736, 0.35355338
    %v2822 = vmul.f32 %v2812, 0.35355338
    %v2823 = vadd.f32 %v2815, %v218
    %v2824 = vadd.f32 %v2816, %v222
    %v2825 = vadd.f32 %v2817, %v218
    %v2826 = vadd.f32 %v2818, %v222
    %v2827 = vadd.f32 %v2819, %v218
    %v2828 = vadd.f32 %v2820, %v222
    %v2829 = vadd.f32 %v2821, %v218
    %v2830 = vadd.f32 %v2822, %v222
    %v2831 = vsel %vm334, %v2823, -inf
    %2832 = vmax.xlane.f32.xlu0 %v2831
    %v2833 = vpop.xlane.xlu0 %2832
    %v2834 = vsel %vm334, %v2824, -inf
    %2835 = vmax.xlane.f32.xlu0 %v2834
    %v2836 = vpop.xlane.xlu0 %2835
    %v2837 = vsel %vm334, %v2825, -inf
    %2838 = vmax.xlane.f32.xlu0 %v2837
    %v2839 = vpop.xlane.xlu0 %2838
    %v2840 = vsel %vm334, %v2826, -inf
    %2841 = vmax.xlane.f32.xlu0 %v2840
    %v2842 = vpop.xlane.xlu0 %2841
    %v2843 = vsel %vm334, %v2827, -inf
    %2844 = vmax.xlane.f32.xlu0 %v2843
    %v2845 = vpop.xlane.xlu0 %2844
    %v2846 = vsel %vm334, %v2828, -inf
    %2847 = vmax.xlane.f32.xlu0 %v2846
    %v2848 = vpop.xlane.xlu0 %2847
    %v2849 = vsel %vm334, %v2829, -inf
    %2850 = vmax.xlane.f32.xlu0 %v2849
    %v2851 = vpop.xlane.xlu0 %2850
    %v2852 = vsel %vm334, %v2830, -inf
    %2853 = vmax.xlane.f32.xlu0 %v2852
    %v2854 = vpop.xlane.xlu0 %2853
    %v2855 = vsub.f32 %v2823, %v2833
    %v2856 = vsub.f32 %v2824, %v2836
    %v2857 = vsub.f32 %v2825, %v2839
    %v2858 = vsub.f32 %v2826, %v2842
    %v2859 = vsub.f32 %v2827, %v2845
    %v2860 = vsub.f32 %v2828, %v2848
    %v2861 = vsub.f32 %v2829, %v2851
    %v2862 = vsub.f32 %v2830, %v2854
    %v2863 = vmul.f32 %v2855, 1.442695
    %v2864 = vpow.pop %v2863
    %v2865 = vmul.f32 %v2856, 1.442695
    %v2866 = vpow.pop %v2865
    %v2867 = vmul.f32 %v2857, 1.442695
    %v2868 = vpow.pop %v2867
    %v2869 = vmul.f32 %v2858, 1.442695
    %v2870 = vpow.pop %v2869
    %v2871 = vmul.f32 %v2859, 1.442695
    %v2872 = vpow.pop %v2871
    %v2873 = vmul.f32 %v2860, 1.442695
    %v2874 = vpow.pop %v2873
    %v2875 = vmul.f32 %v2861, 1.442695
    %v2876 = vpow.pop %v2875
    %v2877 = vmul.f32 %v2862, 1.442695
    %v2878 = vpow.pop %v2877
    %v2879 = vsel %vm334, %v2864, 0.0
    %2880 = vadd.xlane.f32.xlu0 %v2879
    %v2881 = vpop.xlane.xlu0 %2880
    %v2882 = vsel %vm334, %v2866, 0.0
    %2883 = vadd.xlane.f32.xlu0 %v2882
    %v2884 = vpop.xlane.xlu0 %2883
    %v2885 = vsel %vm334, %v2868, 0.0
    %2886 = vadd.xlane.f32.xlu0 %v2885
    %v2887 = vpop.xlane.xlu0 %2886
    %v2888 = vsel %vm334, %v2870, 0.0
    %2889 = vadd.xlane.f32.xlu0 %v2888
    %v2890 = vpop.xlane.xlu0 %2889
    %v2891 = vsel %vm334, %v2872, 0.0
    %2892 = vadd.xlane.f32.xlu0 %v2891
    %v2893 = vpop.xlane.xlu0 %2892
    %v2894 = vsel %vm334, %v2874, 0.0
    %2895 = vadd.xlane.f32.xlu0 %v2894
    %v2896 = vpop.xlane.xlu0 %2895
    %v2897 = vsel %vm334, %v2876, 0.0
    %2898 = vadd.xlane.f32.xlu0 %v2897
    %v2899 = vpop.xlane.xlu0 %2898
    %v2900 = vsel %vm334, %v2878, 0.0
    %2901 = vadd.xlane.f32.xlu0 %v2900
    %v2902 = vpop.xlane.xlu0 %2901
    %v2903 = vrcp.pop %v2881
    %v2904 = vrcp.pop %v2884
    %v2905 = vrcp.pop %v2887
    %v2906 = vrcp.pop %v2890
    %v2907 = vrcp.pop %v2893
    %v2908 = vrcp.pop %v2896
    %v2909 = vrcp.pop %v2899
    %v2910 = vrcp.pop %v2902
    %v2911 = vmul.f32 %v2864, %v2903
    %v2912 = vmul.f32 %v2866, %v2904
    %v2913 = vmul.f32 %v2868, %v2905
    %v2914 = vmul.f32 %v2870, %v2906
    %v2915 = vmul.f32 %v2872, %v2907
    %v2916 = vmul.f32 %v2874, %v2908
    %v2917 = vmul.f32 %v2876, %v2909
    %v2918 = vmul.f32 %v2878, %v2910
    %2919 = vrot.lane.b32.xlu0 %v2185, 64
    %v2920 = vpop.permute.xlu0 %2919
    %v2923 = vsel %vm334, %v2911, 0
    %2925 = vmatprep.subr.mxu0 0.0
    %2926 = vmatpush1.msra.mxu0 %v2920
    %2927 = vmatprep.subr.mxu0 0.0
    %2928 = vmatpush1.msra.mxu0 0.0
    %2929 = vmatprep.subr.mxu0 0.0
    %2930 = vmatpush1.msra.mxu0 0.0
    %2931 = vmatprep.subr.mxu0 0.0
    %2932 = vmatpush1.msra.mxu0 0.0
    %2933 = vmatprep.subr.mxu0 0.0
    %2934 = vmatpush1.msra.mxu0 0.0
    %2935 = vmatprep.subr.mxu0 0.0
    %2936 = vmatpush1.msra.mxu0 0.0
    %2937 = vmatprep.subr.mxu0 0.0
    %2938 = vmatpush1.msra.mxu0 0.0
    %2939 = vmatprep.subr.mxu0 0.0
    %2940 = vmatpush1.msra.mxu0 0.0
    %2941 = vmatprep.subr.mxu0 0.0
    %2942 = vmatpush1.msra.mxu0 0.0
    %2943 = vmatprep.subr.mxu0 0.0
    %2944 = vmatpush1.msra.mxu0 0.0
    %2945 = vmatprep.subr.mxu0 0.0
    %2946 = vmatpush1.msra.mxu0 0.0
    %2947 = vmatprep.subr.mxu0 0.0
    %2948 = vmatpush1.msra.mxu0 0.0
    %2949 = vmatprep.subr.mxu0 0.0
    %2950 = vmatpush1.msra.mxu0 0.0
    %2951 = vmatprep.subr.mxu0 0.0
    %2952 = vmatpush1.msra.mxu0 0.0
    %2953 = vmatprep.subr.mxu0 0.0
    %2954 = vmatpush1.msra.mxu0 0.0
    %2955 = vmatprep.subr.mxu0 0.0
    %2956 = vmatpush1.msra.mxu0 0.0
    %2957 = vmatprep.subr.mxu0 0.0
    %2958 = vmatpush1.msra.mxu0 0.0
    %2959 = vmatprep.subr.mxu0 0.0
    %2960 = vmatpush1.msra.mxu0 0.0
    %2961 = vmatprep.subr.mxu0 0.0
    %2962 = vmatpush1.msra.mxu0 0.0
    %2963 = vmatprep.subr.mxu0 0.0
    %2964 = vmatpush1.msra.mxu0 0.0
    %2965 = vmatprep.subr.mxu0 0.0
    %2966 = vmatpush1.msra.mxu0 0.0
    %2967 = vmatprep.subr.mxu0 0.0
    %2968 = vmatpush1.msra.mxu0 0.0
    %2969 = vmatprep.subr.mxu0 0.0
    %2970 = vmatpush1.msra.mxu0 0.0
    %2971 = vmatprep.subr.mxu0 0.0
    %2972 = vmatpush1.msra.mxu0 0.0
    %2973 = vmatprep.subr.mxu0 0.0
    %2974 = vmatpush1.msra.mxu0 0.0
    %2975 = vmatprep.subr.mxu0 0.0
    %2976 = vmatpush1.msra.mxu0 0.0
    %2977 = vmatprep.subr.mxu0 0.0
    %2978 = vmatpush1.msra.mxu0 0.0
    %2979 = vmatprep.subr.mxu0 0.0
    %2980 = vmatpush1.msra.mxu0 0.0
    %2981 = vmatprep.subr.mxu0 0.0
    %2982 = vmatpush1.msra.mxu0 0.0
    %2983 = vmatprep.subr.mxu0 0.0
    %2984 = vmatpush1.msra.mxu0 0.0
    %2985 = vmatprep.subr.mxu0 0.0
    %2986 = vmatpush1.msra.mxu0 0.0
    %2987 = vmatprep.subr.mxu0 0.0
    %2988 = vmatpush1.msra.mxu0 0.0
    %2989 = vmatprep.mubr.f32.mxu0 0.0
    %2990 = vmatmul.mubr.f32.gmra.mrb[0].mxu0 %v2923
    %v2991 = vpop.f32.mrb[0].mxu0
    %v2992 = vadd.f32 0.0, %v2991
    %v2993 = vpop.f32.mrb[0].mxu0
    %2994 = vdwg.mxu0
    %2995 = vrot.lane.b32.xlu0 %v2190, 64
    %v2996 = vpop.permute.xlu0 %2995
    %v2999 = vsel %vm334, %v2912, 0
    %3001 = vmatprep.subr.mxu0 0.0
    %3002 = vmatpush1.msra.mxu0 %v2996
    %3003 = vmatprep.subr.mxu0 0.0
    %3004 = vmatpush1.msra.mxu0 0.0
    %3005 = vmatprep.subr.mxu0 0.0
    %3006 = vmatpush1.msra.mxu0 0.0
    %3007 = vmatprep.subr.mxu0 0.0
    %3008 = vmatpush1.msra.mxu0 0.0
    %3009 = vmatprep.subr.mxu0 0.0
    %3010 = vmatpush1.msra.mxu0 0.0
    %3011 = vmatprep.subr.mxu0 0.0
    %3012 = vmatpush1.msra.mxu0 0.0
    %3013 = vmatprep.subr.mxu0 0.0
    %3014 = vmatpush1.msra.mxu0 0.0
    %3015 = vmatprep.subr.mxu0 0.0
    %3016 = vmatpush1.msra.mxu0 0.0
    %3017 = vmatprep.subr.mxu0 0.0
    %3018 = vmatpush1.msra.mxu0 0.0
    %3019 = vmatprep.subr.mxu0 0.0
    %3020 = vmatpush1.msra.mxu0 0.0
    %3021 = vmatprep.subr.mxu0 0.0
    %3022 = vmatpush1.msra.mxu0 0.0
    %3023 = vmatprep.subr.mxu0 0.0
    %3024 = vmatpush1.msra.mxu0 0.0
    %3025 = vmatprep.subr.mxu0 0.0
    %3026 = vmatpush1.msra.mxu0 0.0
    %3027 = vmatprep.subr.mxu0 0.0
    %3028 = vmatpush1.msra.mxu0 0.0
    %3029 = vmatprep.subr.mxu0 0.0
    %3030 = vmatpush1.msra.mxu0 0.0
    %3031 = vmatprep.subr.mxu0 0.0
    %3032 = vmatpush1.msra.mxu0 0.0
    %3033 = vmatprep.subr.mxu0 0.0
    %3034 = vmatpush1.msra.mxu0 0.0
    %3035 = vmatprep.subr.mxu0 0.0
    %3036 = vmatpush1.msra.mxu0 0.0
    %3037 = vmatprep.subr.mxu0 0.0
    %3038 = vmatpush1.msra.mxu0 0.0
    %3039 = vmatprep.subr.mxu0 0.0
    %3040 = vmatpush1.msra.mxu0 0.0
    %3041 = vmatprep.subr.mxu0 0.0
    %3042 = vmatpush1.msra.mxu0 0.0
    %3043 = vmatprep.subr.mxu0 0.0
    %3044 = vmatpush1.msra.mxu0 0.0
    %3045 = vmatprep.subr.mxu0 0.0
    %3046 = vmatpush1.msra.mxu0 0.0
    %3047 = vmatprep.subr.mxu0 0.0
    %3048 = vmatpush1.msra.mxu0 0.0
    %3049 = vmatprep.subr.mxu0 0.0
    %3050 = vmatpush1.msra.mxu0 0.0
    %3051 = vmatprep.subr.mxu0 0.0
    %3052 = vmatpush1.msra.mxu0 0.0
    %3053 = vmatprep.subr.mxu0 0.0
    %3054 = vmatpush1.msra.mxu0 0.0
    %3055 = vmatprep.subr.mxu0 0.0
    %3056 = vmatpush1.msra.mxu0 0.0
    %3057 = vmatprep.subr.mxu0 0.0
    %3058 = vmatpush1.msra.mxu0 0.0
    %3059 = vmatprep.subr.mxu0 0.0
    %3060 = vmatpush1.msra.mxu0 0.0
    %3061 = vmatprep.subr.mxu0 0.0
    %3062 = vmatpush1.msra.mxu0 0.0
    %3063 = vmatprep.subr.mxu0 0.0
    %3064 = vmatpush1.msra.mxu0 0.0
    %3065 = vmatprep.mubr.f32.mxu0 0.0
    %3066 = vmatmul.mubr.f32.gmra.mrb[0].mxu0 %v2999
    %v3067 = vpop.f32.mrb[0].mxu0
    %v3068 = vadd.f32 0.0, %v3067
    %v3069 = vpop.f32.mrb[0].mxu0
    %3070 = vdwg.mxu0
    %3071 = vrot.lane.b32.xlu0 %v2196, 64
    %v3072 = vpop.permute.xlu0 %3071
    %v3075 = vsel %vm334, %v2913, 0
    %3077 = vmatprep.subr.mxu0 0.0
    %3078 = vmatpush1.msra.mxu0 %v3072
    %3079 = vmatprep.subr.mxu0 0.0
    %3080 = vmatpush1.msra.mxu0 0.0
    %3081 = vmatprep.subr.mxu0 0.0
    %3082 = vmatpush1.msra.mxu0 0.0
    %3083 = vmatprep.subr.mxu0 0.0
    %3084 = vmatpush1.msra.mxu0 0.0
    %3085 = vmatprep.subr.mxu0 0.0
    %3086 = vmatpush1.msra.mxu0 0.0
    %3087 = vmatprep.subr.mxu0 0.0
    %3088 = vmatpush1.msra.mxu0 0.0
    %3089 = vmatprep.subr.mxu0 0.0
    %3090 = vmatpush1.msra.mxu0 0.0
    %3091 = vmatprep.subr.mxu0 0.0
    %3092 = vmatpush1.msra.mxu0 0.0
    %3093 = vmatprep.subr.mxu0 0.0
    %3094 = vmatpush1.msra.mxu0 0.0
    %3095 = vmatprep.subr.mxu0 0.0
    %3096 = vmatpush1.msra.mxu0 0.0
    %3097 = vmatprep.subr.mxu0 0.0
    %3098 = vmatpush1.msra.mxu0 0.0
    %3099 = vmatprep.subr.mxu0 0.0
    %3100 = vmatpush1.msra.mxu0 0.0
    %3101 = vmatprep.subr.mxu0 0.0
    %3102 = vmatpush1.msra.mxu0 0.0
    %3103 = vmatprep.subr.mxu0 0.0
    %3104 = vmatpush1.msra.mxu0 0.0
    %3105 = vmatprep.subr.mxu0 0.0
    %3106 = vmatpush1.msra.mxu0 0.0
    %3107 = vmatprep.subr.mxu0 0.0
    %3108 = vmatpush1.msra.mxu0 0.0
    %3109 = vmatprep.subr.mxu0 0.0
    %3110 = vmatpush1.msra.mxu0 0.0
    %3111 = vmatprep.subr.mxu0 0.0
    %3112 = vmatpush1.msra.mxu0 0.0
    %3113 = vmatprep.subr.mxu0 0.0
    %3114 = vmatpush1.msra.mxu0 0.0
    %3115 = vmatprep.subr.mxu0 0.0
    %3116 = vmatpush1.msra.mxu0 0.0
    %3117 = vmatprep.subr.mxu0 0.0
    %3118 = vmatpush1.msra.mxu0 0.0
    %3119 = vmatprep.subr.mxu0 0.0
    %3120 = vmatpush1.msra.mxu0 0.0
    %3121 = vmatprep.subr.mxu0 0.0
    %3122 = vmatpush1.msra.mxu0 0.0
    %3123 = vmatprep.subr.mxu0 0.0
    %3124 = vmatpush1.msra.mxu0 0.0
    %3125 = vmatprep.subr.mxu0 0.0
    %3126 = vmatpush1.msra.mxu0 0.0
    %3127 = vmatprep.subr.mxu0 0.0
    %3128 = vmatpush1.msra.mxu0 0.0
    %3129 = vmatprep.subr.mxu0 0.0
    %3130 = vmatpush1.msra.mxu0 0.0
    %3131 = vmatprep.subr.mxu0 0.0
    %3132 = vmatpush1.msra.mxu0 0.0
    %3133 = vmatprep.subr.mxu0 0.0
    %3134 = vmatpush1.msra.mxu0 0.0
    %3135 = vmatprep.subr.mxu0 0.0
    %3136 = vmatpush1.msra.mxu0 0.0
    %3137 = vmatprep.subr.mxu0 0.0
    %3138 = vmatpush1.msra.mxu0 0.0
    %3139 = vmatprep.subr.mxu0 0.0
    %3140 = vmatpush1.msra.mxu0 0.0
    %3141 = vmatprep.mubr.f32.mxu0 0.0
    %3142 = vmatmul.mubr.f32.gmra.mrb[0].mxu0 %v3075
    %v3143 = vpop.f32.mrb[0].mxu0
    %v3144 = vadd.f32 0.0, %v3143
    %v3145 = vpop.f32.mrb[0].mxu0
    %3146 = vdwg.mxu0
    %3147 = vrot.lane.b32.xlu0 %v2198, 64
    %v3148 = vpop.permute.xlu0 %3147
    %v3151 = vsel %vm334, %v2914, 0
    %3153 = vmatprep.subr.mxu0 0.0
    %3154 = vmatpush1.msra.mxu0 %v3148
    %3155 = vmatprep.subr.mxu0 0.0
    %3156 = vmatpush1.msra.mxu0 0.0
    %3157 = vmatprep.subr.mxu0 0.0
    %3158 = vmatpush1.msra.mxu0 0.0
    %3159 = vmatprep.subr.mxu0 0.0
    %3160 = vmatpush1.msra.mxu0 0.0
    %3161 = vmatprep.subr.mxu0 0.0
    %3162 = vmatpush1.msra.mxu0 0.0
    %3163 = vmatprep.subr.mxu0 0.0
    %3164 = vmatpush1.msra.mxu0 0.0
    %3165 = vmatprep.subr.mxu0 0.0
    %3166 = vmatpush1.msra.mxu0 0.0
    %3167 = vmatprep.subr.mxu0 0.0
    %3168 = vmatpush1.msra.mxu0 0.0
    %3169 = vmatprep.subr.mxu0 0.0
    %3170 = vmatpush1.msra.mxu0 0.0
    %3171 = vmatprep.subr.mxu0 0.0
    %3172 = vmatpush1.msra.mxu0 0.0
    %3173 = vmatprep.subr.mxu0 0.0
    %3174 = vmatpush1.msra.mxu0 0.0
    %3175 = vmatprep.subr.mxu0 0.0
    %3176 = vmatpush1.msra.mxu0 0.0
    %3177 = vmatprep.subr.mxu0 0.0
    %3178 = vmatpush1.msra.mxu0 0.0
    %3179 = vmatprep.subr.mxu0 0.0
    %3180 = vmatpush1.msra.mxu0 0.0
    %3181 = vmatprep.subr.mxu0 0.0
    %3182 = vmatpush1.msra.mxu0 0.0
    %3183 = vmatprep.subr.mxu0 0.0
    %3184 = vmatpush1.msra.mxu0 0.0
    %3185 = vmatprep.subr.mxu0 0.0
    %3186 = vmatpush1.msra.mxu0 0.0
    %3187 = vmatprep.subr.mxu0 0.0
    %3188 = vmatpush1.msra.mxu0 0.0
    %3189 = vmatprep.subr.mxu0 0.0
    %3190 = vmatpush1.msra.mxu0 0.0
    %3191 = vmatprep.subr.mxu0 0.0
    %3192 = vmatpush1.msra.mxu0 0.0
    %3193 = vmatprep.subr.mxu0 0.0
    %3194 = vmatpush1.msra.mxu0 0.0
    %3195 = vmatprep.subr.mxu0 0.0
    %3196 = vmatpush1.msra.mxu0 0.0
    %3197 = vmatprep.subr.mxu0 0.0
    %3198 = vmatpush1.msra.mxu0 0.0
    %3199 = vmatprep.subr.mxu0 0.0
    %3200 = vmatpush1.msra.mxu0 0.0
    %3201 = vmatprep.subr.mxu0 0.0
    %3202 = vmatpush1.msra.mxu0 0.0
    %3203 = vmatprep.subr.mxu0 0.0
    %3204 = vmatpush1.msra.mxu0 0.0
    %3205 = vmatprep.subr.mxu0 0.0
    %3206 = vmatpush1.msra.mxu0 0.0
    %3207 = vmatprep.subr.mxu0 0.0
    %3208 = vmatpush1.msra.mxu0 0.0
    %3209 = vmatprep.subr.mxu0 0.0
    %3210 = vmatpush1.msra.mxu0 0.0
    %3211 = vmatprep.subr.mxu0 0.0
    %3212 = vmatpush1.msra.mxu0 0.0
    %3213 = vmatprep.subr.mxu0 0.0
    %3214 = vmatpush1.msra.mxu0 0.0
    %3215 = vmatprep.subr.mxu0 0.0
    %3216 = vmatpush1.msra.mxu0 0.0
    %3217 = vmatprep.mubr.f32.mxu0 0.0
    %3218 = vmatmul.mubr.f32.gmra.mrb[0].mxu0 %v3151
    %v3219 = vpop.f32.mrb[0].mxu0
    %v3220 = vadd.f32 0.0, %v3219
    %v3221 = vpop.f32.mrb[0].mxu0
    %3222 = vdwg.mxu0
    %3223 = vrot.lane.b32.xlu0 %v2200, 64
    %v3224 = vpop.permute.xlu0 %3223
    %v3227 = vsel %vm334, %v2915, 0
    %3229 = vmatprep.subr.mxu0 0.0
    %3230 = vmatpush1.msra.mxu0 %v3224
    %3231 = vmatprep.subr.mxu0 0.0
    %3232 = vmatpush1.msra.mxu0 0.0
    %3233 = vmatprep.subr.mxu0 0.0
    %3234 = vmatpush1.msra.mxu0 0.0
    %3235 = vmatprep.subr.mxu0 0.0
    %3236 = vmatpush1.msra.mxu0 0.0
    %3237 = vmatprep.subr.mxu0 0.0
    %3238 = vmatpush1.msra.mxu0 0.0
    %3239 = vmatprep.subr.mxu0 0.0
    %3240 = vmatpush1.msra.mxu0 0.0
    %3241 = vmatprep.subr.mxu0 0.0
    %3242 = vmatpush1.msra.mxu0 0.0
    %3243 = vmatprep.subr.mxu0 0.0
    %3244 = vmatpush1.msra.mxu0 0.0
    %3245 = vmatprep.subr.mxu0 0.0
    %3246 = vmatpush1.msra.mxu0 0.0
    %3247 = vmatprep.subr.mxu0 0.0
    %3248 = vmatpush1.msra.mxu0 0.0
    %3249 = vmatprep.subr.mxu0 0.0
    %3250 = vmatpush1.msra.mxu0 0.0
    %3251 = vmatprep.subr.mxu0 0.0
    %3252 = vmatpush1.msra.mxu0 0.0
    %3253 = vmatprep.subr.mxu0 0.0
    %3254 = vmatpush1.msra.mxu0 0.0
    %3255 = vmatprep.subr.mxu0 0.0
    %3256 = vmatpush1.msra.mxu0 0.0
    %3257 = vmatprep.subr.mxu0 0.0
    %3258 = vmatpush1.msra.mxu0 0.0
    %3259 = vmatprep.subr.mxu0 0.0
    %3260 = vmatpush1.msra.mxu0 0.0
    %3261 = vmatprep.subr.mxu0 0.0
    %3262 = vmatpush1.msra.mxu0 0.0
    %3263 = vmatprep.subr.mxu0 0.0
    %3264 = vmatpush1.msra.mxu0 0.0
    %3265 = vmatprep.subr.mxu0 0.0
    %3266 = vmatpush1.msra.mxu0 0.0
    %3267 = vmatprep.subr.mxu0 0.0
    %3268 = vmatpush1.msra.mxu0 0.0
    %3269 = vmatprep.subr.mxu0 0.0
    %3270 = vmatpush1.msra.mxu0 0.0
    %3271 = vmatprep.subr.mxu0 0.0
    %3272 = vmatpush1.msra.mxu0 0.0
    %3273 = vmatprep.subr.mxu0 0.0
    %3274 = vmatpush1.msra.mxu0 0.0
    %3275 = vmatprep.subr.mxu0 0.0
    %3276 = vmatpush1.msra.mxu0 0.0
    %3277 = vmatprep.subr.mxu0 0.0
    %3278 = vmatpush1.msra.mxu0 0.0
    %3279 = vmatprep.subr.mxu0 0.0
    %3280 = vmatpush1.msra.mxu0 0.0
    %3281 = vmatprep.subr.mxu0 0.0
    %3282 = vmatpush1.msra.mxu0 0.0
    %3283 = vmatprep.subr.mxu0 0.0
    %3284 = vmatpush1.msra.mxu0 0.0
    %3285 = vmatprep.subr.mxu0 0.0
    %3286 = vmatpush1.msra.mxu0 0.0
    %3287 = vmatprep.subr.mxu0 0.0
    %3288 = vmatpush1.msra.mxu0 0.0
    %3289 = vmatprep.subr.mxu0 0.0
    %3290 = vmatpush1.msra.mxu0 0.0
    %3291 = vmatprep.subr.mxu0 0.0
    %3292 = vmatpush1.msra.mxu0 0.0
    %3293 = vmatprep.mubr.f32.mxu0 0.0
    %3294 = vmatmul.mubr.f32.gmra.mrb[0].mxu0 %v3227
    %v3295 = vpop.f32.mrb[0].mxu0
    %v3296 = vadd.f32 0.0, %v3295
    %v3297 = vpop.f32.mrb[0].mxu0
    %3298 = vdwg.mxu0
    %3299 = vrot.lane.b32.xlu0 %v2202, 64
    %v3300 = vpop.permute.xlu0 %3299
    %v3303 = vsel %vm334, %v2916, 0
    %3305 = vmatprep.subr.mxu0 0.0
    %3306 = vmatpush1.msra.mxu0 %v3300
    %3307 = vmatprep.subr.mxu0 0.0
    %3308 = vmatpush1.msra.mxu0 0.0
    %3309 = vmatprep.subr.mxu0 0.0
    %3310 = vmatpush1.msra.mxu0 0.0
    %3311 = vmatprep.subr.mxu0 0.0
    %3312 = vmatpush1.msra.mxu0 0.0
    %3313 = vmatprep.subr.mxu0 0.0
    %3314 = vmatpush1.msra.mxu0 0.0
    %3315 = vmatprep.subr.mxu0 0.0
    %3316 = vmatpush1.msra.mxu0 0.0
    %3317 = vmatprep.subr.mxu0 0.0
    %3318 = vmatpush1.msra.mxu0 0.0
    %3319 = vmatprep.subr.mxu0 0.0
    %3320 = vmatpush1.msra.mxu0 0.0
    %3321 = vmatprep.subr.mxu0 0.0
    %3322 = vmatpush1.msra.mxu0 0.0
    %3323 = vmatprep.subr.mxu0 0.0
    %3324 = vmatpush1.msra.mxu0 0.0
    %3325 = vmatprep.subr.mxu0 0.0
    %3326 = vmatpush1.msra.mxu0 0.0
    %3327 = vmatprep.subr.mxu0 0.0
    %3328 = vmatpush1.msra.mxu0 0.0
    %3329 = vmatprep.subr.mxu0 0.0
    %3330 = vmatpush1.msra.mxu0 0.0
    %3331 = vmatprep.subr.mxu0 0.0
    %3332 = vmatpush1.msra.mxu0 0.0
    %3333 = vmatprep.subr.mxu0 0.0
    %3334 = vmatpush1.msra.mxu0 0.0
    %3335 = vmatprep.subr.mxu0 0.0
    %3336 = vmatpush1.msra.mxu0 0.0
    %3337 = vmatprep.subr.mxu0 0.0
    %3338 = vmatpush1.msra.mxu0 0.0
    %3339 = vmatprep.subr.mxu0 0.0
    %3340 = vmatpush1.msra.mxu0 0.0
    %3341 = vmatprep.subr.mxu0 0.0
    %3342 = vmatpush1.msra.mxu0 0.0
    %3343 = vmatprep.subr.mxu0 0.0
    %3344 = vmatpush1.msra.mxu0 0.0
    %3345 = vmatprep.subr.mxu0 0.0
    %3346 = vmatpush1.msra.mxu0 0.0
    %3347 = vmatprep.subr.mxu0 0.0
    %3348 = vmatpush1.msra.mxu0 0.0
    %3349 = vmatprep.subr.mxu0 0.0
    %3350 = vmatpush1.msra.mxu0 0.0
    %3351 = vmatprep.subr.mxu0 0.0
    %3352 = vmatpush1.msra.mxu0 0.0
    %3353 = vmatprep.subr.mxu0 0.0
    %3354 = vmatpush1.msra.mxu0 0.0
    %3355 = vmatprep.subr.mxu0 0.0
    %3356 = vmatpush1.msra.mxu0 0.0
    %3357 = vmatprep.subr.mxu0 0.0
    %3358 = vmatpush1.msra.mxu0 0.0
    %3359 = vmatprep.subr.mxu0 0.0
    %3360 = vmatpush1.msra.mxu0 0.0
    %3361 = vmatprep.subr.mxu0 0.0
    %3362 = vmatpush1.msra.mxu0 0.0
    %3363 = vmatprep.subr.mxu0 0.0
    %3364 = vmatpush1.msra.mxu0 0.0
    %3365 = vmatprep.subr.mxu0 0.0
    %3366 = vmatpush1.msra.mxu0 0.0
    %3367 = vmatprep.subr.mxu0 0.0
    %3368 = vmatpush1.msra.mxu0 0.0
    %3369 = vmatprep.mubr.f32.mxu0 0.0
    %3370 = vmatmul.mubr.f32.gmra.mrb[0].mxu0 %v3303
    %v3371 = vpop.f32.mrb[0].mxu0
    %v3372 = vadd.f32 0.0, %v3371
    %v3373 = vpop.f32.mrb[0].mxu0
    %3374 = vdwg.mxu0
    %3375 = vrot.lane.b32.xlu0 %v2204, 64
    %v3376 = vpop.permute.xlu0 %3375
    %v3379 = vsel %vm334, %v2917, 0
    %3381 = vmatprep.subr.mxu0 0.0
    %3382 = vmatpush1.msra.mxu0 %v3376
    %3383 = vmatprep.subr.mxu0 0.0
    %3384 = vmatpush1.msra.mxu0 0.0
    %3385 = vmatprep.subr.mxu0 0.0
    %3386 = vmatpush1.msra.mxu0 0.0
    %3387 = vmatprep.subr.mxu0 0.0
    %3388 = vmatpush1.msra.mxu0 0.0
    %3389 = vmatprep.subr.mxu0 0.0
    %3390 = vmatpush1.msra.mxu0 0.0
    %3391 = vmatprep.subr.mxu0 0.0
    %3392 = vmatpush1.msra.mxu0 0.0
    %3393 = vmatprep.subr.mxu0 0.0
    %3394 = vmatpush1.msra.mxu0 0.0
    %3395 = vmatprep.subr.mxu0 0.0
    %3396 = vmatpush1.msra.mxu0 0.0
    %3397 = vmatprep.subr.mxu0 0.0
    %3398 = vmatpush1.msra.mxu0 0.0
    %3399 = vmatprep.subr.mxu0 0.0
    %3400 = vmatpush1.msra.mxu0 0.0
    %3401 = vmatprep.subr.mxu0 0.0
    %3402 = vmatpush1.msra.mxu0 0.0
    %3403 = vmatprep.subr.mxu0 0.0
    %3404 = vmatpush1.msra.mxu0 0.0
    %3405 = vmatprep.subr.mxu0 0.0
    %3406 = vmatpush1.msra.mxu0 0.0
    %3407 = vmatprep.subr.mxu0 0.0
    %3408 = vmatpush1.msra.mxu0 0.0
    %3409 = vmatprep.subr.mxu0 0.0
    %3410 = vmatpush1.msra.mxu0 0.0
    %3411 = vmatprep.subr.mxu0 0.0
    %3412 = vmatpush1.msra.mxu0 0.0
    %3413 = vmatprep.subr.mxu0 0.0
    %3414 = vmatpush1.msra.mxu0 0.0
    %3415 = vmatprep.subr.mxu0 0.0
    %3416 = vmatpush1.msra.mxu0 0.0
    %3417 = vmatprep.subr.mxu0 0.0
    %3418 = vmatpush1.msra.mxu0 0.0
    %3419 = vmatprep.subr.mxu0 0.0
    %3420 = vmatpush1.msra.mxu0 0.0
    %3421 = vmatprep.subr.mxu0 0.0
    %3422 = vmatpush1.msra.mxu0 0.0
    %3423 = vmatprep.subr.mxu0 0.0
    %3424 = vmatpush1.msra.mxu0 0.0
    %3425 = vmatprep.subr.mxu0 0.0
    %3426 = vmatpush1.msra.mxu0 0.0
    %3427 = vmatprep.subr.mxu0 0.0
    %3428 = vmatpush1.msra.mxu0 0.0
    %3429 = vmatprep.subr.mxu0 0.0
    %3430 = vmatpush1.msra.mxu0 0.0
    %3431 = vmatprep.subr.mxu0 0.0
    %3432 = vmatpush1.msra.mxu0 0.0
    %3433 = vmatprep.subr.mxu0 0.0
    %3434 = vmatpush1.msra.mxu0 0.0
    %3435 = vmatprep.subr.mxu0 0.0
    %3436 = vmatpush1.msra.mxu0 0.0
    %3437 = vmatprep.subr.mxu0 0.0
    %3438 = vmatpush1.msra.mxu0 0.0
    %3439 = vmatprep.subr.mxu0 0.0
    %3440 = vmatpush1.msra.mxu0 0.0
    %3441 = vmatprep.subr.mxu0 0.0
    %3442 = vmatpush1.msra.mxu0 0.0
    %3443 = vmatprep.subr.mxu0 0.0
    %3444 = vmatpush1.msra.mxu0 0.0
    %3445 = vmatprep.mubr.f32.mxu0 0.0
    %3446 = vmatmul.mubr.f32.gmra.mrb[0].mxu0 %v3379
    %v3447 = vpop.f32.mrb[0].mxu0
    %v3448 = vadd.f32 0.0, %v3447
    %v3449 = vpop.f32.mrb[0].mxu0
    %3450 = vdwg.mxu0
    %3451 = vrot.lane.b32.xlu0 %v2206, 64
    %v3452 = vpop.permute.xlu0 %3451
    %v3455 = vsel %vm334, %v2918, 0
    %3457 = vmatprep.subr.mxu0 0.0
    %3458 = vmatpush1.msra.mxu0 %v3452
    %3459 = vmatprep.subr.mxu0 0.0
    %3460 = vmatpush1.msra.mxu0 0.0
    %3461 = vmatprep.subr.mxu0 0.0
    %3462 = vmatpush1.msra.mxu0 0.0
    %3463 = vmatprep.subr.mxu0 0.0
    %3464 = vmatpush1.msra.mxu0 0.0
    %3465 = vmatprep.subr.mxu0 0.0
    %3466 = vmatpush1.msra.mxu0 0.0
    %3467 = vmatprep.subr.mxu0 0.0
    %3468 = vmatpush1.msra.mxu0 0.0
    %3469 = vmatprep.subr.mxu0 0.0
    %3470 = vmatpush1.msra.mxu0 0.0
    %3471 = vmatprep.subr.mxu0 0.0
    %3472 = vmatpush1.msra.mxu0 0.0
    %3473 = vmatprep.subr.mxu0 0.0
    %3474 = vmatpush1.msra.mxu0 0.0
    %3475 = vmatprep.subr.mxu0 0.0
    %3476 = vmatpush1.msra.mxu0 0.0
    %3477 = vmatprep.subr.mxu0 0.0
    %3478 = vmatpush1.msra.mxu0 0.0
    %3479 = vmatprep.subr.mxu0 0.0
    %3480 = vmatpush1.msra.mxu0 0.0
    %3481 = vmatprep.subr.mxu0 0.0
    %3482 = vmatpush1.msra.mxu0 0.0
    %3483 = vmatprep.subr.mxu0 0.0
    %3484 = vmatpush1.msra.mxu0 0.0
    %3485 = vmatprep.subr.mxu0 0.0
    %3486 = vmatpush1.msra.mxu0 0.0
    %3487 = vmatprep.subr.mxu0 0.0
    %3488 = vmatpush1.msra.mxu0 0.0
    %3489 = vmatprep.subr.mxu0 0.0
    %3490 = vmatpush1.msra.mxu0 0.0
    %3491 = vmatprep.subr.mxu0 0.0
    %3492 = vmatpush1.msra.mxu0 0.0
    %3493 = vmatprep.subr.mxu0 0.0
    %3494 = vmatpush1.msra.mxu0 0.0
    %3495 = vmatprep.subr.mxu0 0.0
    %3496 = vmatpush1.msra.mxu0 0.0
    %3497 = vmatprep.subr.mxu0 0.0
    %3498 = vmatpush1.msra.mxu0 0.0
    %3499 = vmatprep.subr.mxu0 0.0
    %3500 = vmatpush1.msra.mxu0 0.0
    %3501 = vmatprep.subr.mxu0 0.0
    %3502 = vmatpush1.msra.mxu0 0.0
    %3503 = vmatprep.subr.mxu0 0.0
    %3504 = vmatpush1.msra.mxu0 0.0
    %3505 = vmatprep.subr.mxu0 0.0
    %3506 = vmatpush1.msra.mxu0 0.0
    %3507 = vmatprep.subr.mxu0 0.0
    %3508 = vmatpush1.msra.mxu0 0.0
    %3509 = vmatprep.subr.mxu0 0.0
    %3510 = vmatpush1.msra.mxu0 0.0
    %3511 = vmatprep.subr.mxu0 0.0
    %3512 = vmatpush1.msra.mxu0 0.0
    %3513 = vmatprep.subr.mxu0 0.0
    %3514 = vmatpush1.msra.mxu0 0.0
    %3515 = vmatprep.subr.mxu0 0.0
    %3516 = vmatpush1.msra.mxu0 0.0
    %3517 = vmatprep.subr.mxu0 0.0
    %3518 = vmatpush1.msra.mxu0 0.0
    %3519 = vmatprep.subr.mxu0 0.0
    %3520 = vmatpush1.msra.mxu0 0.0
    %3521 = vmatprep.mubr.f32.mxu0 0.0
    %3522 = vmatmul.mubr.f32.gmra.mrb[0].mxu0 %v3455
    %v3523 = vpop.f32.mrb[0].mxu0
    %v3524 = vadd.f32 0.0, %v3523
    %v3525 = vpop.f32.mrb[0].mxu0
    %3526 = vdwg.mxu0
    %3529 = vrot.lane.b32.xlu0 %v3144, 8
    %v3530 = vpop.permute.xlu0 %3529
    %3531 = vrot.lane.b32.xlu0 %v3220, 8
    %v3532 = vpop.permute.xlu0 %3531
    %3537 = vrot.lane.b32.xlu0 %v3296, 16
    %v3538 = vpop.permute.xlu0 %3537
    %3539 = vrot.lane.b32.xlu0 %v3372, 16
    %v3540 = vpop.permute.xlu0 %3539
    %3545 = vrot.lane.b32.xlu0 %v3448, 24
    %v3546 = vpop.permute.xlu0 %3545
    %3547 = vrot.lane.b32.xlu0 %v3524, 24
    %v3548 = vpop.permute.xlu0 %3547
    %v3551 = vsel %vm334, %v2992, %v3530
    %v3552 = vsel %vm334, %v3068, %v3532
    %v3553 = vsel %vm1679, %v3551, %v3538
    %v3554 = vsel %vm1679, %v3552, %v3540
    %v3555 = vsel %vm1682, %v3553, %v3546
    %v3556 = vsel %vm1682, %v3554, %v3548
    %v3557 = vld [vmem:[%s2099] sm:$0xff]
    %v3558 = vld [vmem:[%s2099 + $0x10] sm:$0xff]
    %v3559 = vld [vmem:[%s2099 + $0x20] sm:$0xff]
    %v3560 = vld [vmem:[%s2099 + $0x30] sm:$0xff]
    %s3561 = scalar_lea.vmem %s6, 11
    %v3562 = vld [vmem:[%s3561] sm:$0x1]
    %v3564 = vlaneseq
    %v3565 = vshrl.u32 %v3564, 7
    %v3566 = vsub.s32 0, %v3565
    %v3567 = vrot.slane %v3562, %v3566
    %3573 = vrot.lane.b32.xlu0 %v3557, 32
    %v3574 = vpop.permute.xlu0 %3573
    %3575 = vrot.lane.b32.xlu0 %v3558, 32
    %v3576 = vpop.permute.xlu0 %3575
    %3577 = vrot.lane.b32.xlu0 %v3559, 32
    %v3578 = vpop.permute.xlu0 %3577
    %3579 = vrot.lane.b32.xlu0 %v3560, 32
    %v3580 = vpop.permute.xlu0 %3579
    %v3586 = vsel %vm144, %v3555, 0
    %v3589 = vsel %vm144, %v3556, 0
    %3591 = vmatprep.subr.mxu0 0.0
    %3592 = vmatpush1.msra.mxu0 %v3574
    %3593 = vmatprep.subr.mxu0 0.0
    %3594 = vmatpush1.msra.mxu0 %v3576
    %3595 = vmatprep.subr.mxu0 0.0
    %3596 = vmatpush1.msra.mxu0 %v3578
    %3597 = vmatprep.subr.mxu0 0.0
    %3598 = vmatpush1.msra.mxu0 %v3580
    %3599 = vmatprep.subr.mxu0 0.0
    %3600 = vmatpush1.msra.mxu0 0.0
    %3601 = vmatprep.subr.mxu0 0.0
    %3602 = vmatpush1.msra.mxu0 0.0
    %3603 = vmatprep.subr.mxu0 0.0
    %3604 = vmatpush1.msra.mxu0 0.0
    %3605 = vmatprep.subr.mxu0 0.0
    %3606 = vmatpush1.msra.mxu0 0.0
    %3607 = vmatprep.subr.mxu0 0.0
    %3608 = vmatpush1.msra.mxu0 0.0
    %3609 = vmatprep.subr.mxu0 0.0
    %3610 = vmatpush1.msra.mxu0 0.0
    %3611 = vmatprep.subr.mxu0 0.0
    %3612 = vmatpush1.msra.mxu0 0.0
    %3613 = vmatprep.subr.mxu0 0.0
    %3614 = vmatpush1.msra.mxu0 0.0
    %3615 = vmatprep.subr.mxu0 0.0
    %3616 = vmatpush1.msra.mxu0 0.0
    %3617 = vmatprep.subr.mxu0 0.0
    %3618 = vmatpush1.msra.mxu0 0.0
    %3619 = vmatprep.subr.mxu0 0.0
    %3620 = vmatpush1.msra.mxu0 0.0
    %3621 = vmatprep.subr.mxu0 0.0
    %3622 = vmatpush1.msra.mxu0 0.0
    %3623 = vmatprep.subr.mxu0 0.0
    %3624 = vmatpush1.msra.mxu0 0.0
    %3625 = vmatprep.subr.mxu0 0.0
    %3626 = vmatpush1.msra.mxu0 0.0
    %3627 = vmatprep.subr.mxu0 0.0
    %3628 = vmatpush1.msra.mxu0 0.0
    %3629 = vmatprep.subr.mxu0 0.0
    %3630 = vmatpush1.msra.mxu0 0.0
    %3631 = vmatprep.subr.mxu0 0.0
    %3632 = vmatpush1.msra.mxu0 0.0
    %3633 = vmatprep.subr.mxu0 0.0
    %3634 = vmatpush1.msra.mxu0 0.0
    %3635 = vmatprep.subr.mxu0 0.0
    %3636 = vmatpush1.msra.mxu0 0.0
    %3637 = vmatprep.subr.mxu0 0.0
    %3638 = vmatpush1.msra.mxu0 0.0
    %3639 = vmatprep.subr.mxu0 0.0
    %3640 = vmatpush1.msra.mxu0 0.0
    %3641 = vmatprep.subr.mxu0 0.0
    %3642 = vmatpush1.msra.mxu0 0.0
    %3643 = vmatprep.subr.mxu0 0.0
    %3644 = vmatpush1.msra.mxu0 0.0
    %3645 = vmatprep.subr.mxu0 0.0
    %3646 = vmatpush1.msra.mxu0 0.0
    %3647 = vmatprep.subr.mxu0 0.0
    %3648 = vmatpush1.msra.mxu0 0.0
    %3649 = vmatprep.subr.mxu0 0.0
    %3650 = vmatpush1.msra.mxu0 0.0
    %3651 = vmatprep.subr.mxu0 0.0
    %3652 = vmatpush1.msra.mxu0 0.0
    %3653 = vmatprep.subr.mxu0 0.0
    %3654 = vmatpush1.msra.mxu0 0.0
    %3655 = vmatprep.mubr.f32.mxu0 0.0
    %3656 = vmatmul.mubr.f32.gmra.mrb[0].mxu0 %v3586
    %v3657 = vpop.f32.mrb[0].mxu0
    %v3658 = vadd.f32 %v3567, %v3657
    %v3659 = vpop.f32.mrb[0].mxu0
    %3660 = vmatprep.mubr.f32.mxu0 0.0
    %3661 = vmatmul.mubr.f32.gmra.mrb[0].mxu0 %v3589
    %v3662 = vpop.f32.mrb[0].mxu0
    %v3663 = vadd.f32 %v3567, %v3662
    %v3664 = vpop.f32.mrb[0].mxu0
    %3665 = vdwg.mxu0
    %v3666 = vadd.f32 %v3658, %v2097
    %v3667 = vadd.f32 %v3663, %v2098
    %s3668 = scalar_lea.vmem %s6, 12
    %v3669 = vld [vmem:[%s3668] sm:$0x1]
    %s3670 = scalar_lea.vmem %s6, 13
    %v3671 = vld [vmem:[%s3670] sm:$0x1]
    %v3672 = vsel %vm144, %v3666, 0.0
    %3673 = vadd.xlane.f32.xlu0 %v3672
    %v3674 = vpop.xlane.xlu0 %3673
    %v3675 = vsel %vm144, %v3667, 0.0
    %3676 = vadd.xlane.f32.xlu0 %v3675
    %v3677 = vpop.xlane.xlu0 %3676
    %v3678 = vmul.f32 %v3674, %v151
    %v3679 = vmul.f32 %v3677, %v151
    %v3680 = vsub.f32 %v3666, %v3678
    %v3681 = vsub.f32 %v3667, %v3679
    %v3682 = vmul.f32 %v3680, %v3680
    %v3683 = vmul.f32 %v3681, %v3681
    %v3684 = vsel %vm144, %v3682, 0.0
    %3685 = vadd.xlane.f32.xlu0 %v3684
    %v3686 = vpop.xlane.xlu0 %3685
    %v3687 = vsel %vm144, %v3683, 0.0
    %3688 = vadd.xlane.f32.xlu0 %v3687
    %v3689 = vpop.xlane.xlu0 %3688
    %v3690 = vmul.f32 %v3686, %v151
    %v3691 = vmul.f32 %v3689, %v151
    %v3692 = vadd.f32 %v3690, 1e-12
    %v3693 = vadd.f32 %v3691, 1e-12
    %v3694 = vrsqrt.pop %v3692
    %v3695 = vrsqrt.pop %v3693
    %v3696 = vmul.f32 %v3680, %v3694
    %v3697 = vmul.f32 %v3681, %v3695
    %v3699 = vlaneseq
    %v3700 = vshrl.u32 %v3699, 7
    %v3701 = vsub.s32 0, %v3700
    %v3702 = vrot.slane %v3669, %v3701
    %v3704 = vmul.f32 %v3696, %v3702
    %v3705 = vmul.f32 %v3697, %v3702
    %v3707 = vlaneseq
    %v3708 = vshrl.u32 %v3707, 7
    %v3709 = vsub.s32 0, %v3708
    %v3710 = vrot.slane %v3671, %v3709
    %v3712 = vadd.f32 %v3704, %v3710
    %v3713 = vadd.f32 %v3705, %v3710
    %v3714 = vld [vmem:[%s2099 + $0x8] sm:$0xff]
    %v3715 = vld [vmem:[%s2099 + $0x18] sm:$0xff]
    %v3716 = vld [vmem:[%s2099 + $0x28] sm:$0xff]
    %v3717 = vld [vmem:[%s2099 + $0x38] sm:$0xff]
    %s3718 = scalar_lea.vmem %s6, 14
    %v3719 = vld [vmem:[%s3718] sm:$0x1]
    %v3721 = vlaneseq
    %v3722 = vshrl.u32 %v3721, 7
    %v3723 = vsub.s32 0, %v3722
    %v3724 = vrot.slane %v3719, %v3723
    %v3727 = vsel %vm144, %v3712, 0
    %v3730 = vsel %vm144, %v3713, 0
    %3732 = vmatprep.subr.mxu0 0.0
    %3733 = vmatpush1.msra.mxu0 %v3714
    %3734 = vmatprep.subr.mxu0 0.0
    %3735 = vmatpush1.msra.mxu0 %v3715
    %3736 = vmatprep.subr.mxu0 0.0
    %3737 = vmatpush1.msra.mxu0 %v3716
    %3738 = vmatprep.subr.mxu0 0.0
    %3739 = vmatpush1.msra.mxu0 %v3717
    %3740 = vmatprep.subr.mxu0 0.0
    %3741 = vmatpush1.msra.mxu0 0.0
    %3742 = vmatprep.subr.mxu0 0.0
    %3743 = vmatpush1.msra.mxu0 0.0
    %3744 = vmatprep.subr.mxu0 0.0
    %3745 = vmatpush1.msra.mxu0 0.0
    %3746 = vmatprep.subr.mxu0 0.0
    %3747 = vmatpush1.msra.mxu0 0.0
    %3748 = vmatprep.subr.mxu0 0.0
    %3749 = vmatpush1.msra.mxu0 0.0
    %3750 = vmatprep.subr.mxu0 0.0
    %3751 = vmatpush1.msra.mxu0 0.0
    %3752 = vmatprep.subr.mxu0 0.0
    %3753 = vmatpush1.msra.mxu0 0.0
    %3754 = vmatprep.subr.mxu0 0.0
    %3755 = vmatpush1.msra.mxu0 0.0
    %3756 = vmatprep.subr.mxu0 0.0
    %3757 = vmatpush1.msra.mxu0 0.0
    %3758 = vmatprep.subr.mxu0 0.0
    %3759 = vmatpush1.msra.mxu0 0.0
    %3760 = vmatprep.subr.mxu0 0.0
    %3761 = vmatpush1.msra.mxu0 0.0
    %3762 = vmatprep.subr.mxu0 0.0
    %3763 = vmatpush1.msra.mxu0 0.0
    %3764 = vmatprep.subr.mxu0 0.0
    %3765 = vmatpush1.msra.mxu0 0.0
    %3766 = vmatprep.subr.mxu0 0.0
    %3767 = vmatpush1.msra.mxu0 0.0
    %3768 = vmatprep.subr.mxu0 0.0
    %3769 = vmatpush1.msra.mxu0 0.0
    %3770 = vmatprep.subr.mxu0 0.0
    %3771 = vmatpush1.msra.mxu0 0.0
    %3772 = vmatprep.subr.mxu0 0.0
    %3773 = vmatpush1.msra.mxu0 0.0
    %3774 = vmatprep.subr.mxu0 0.0
    %3775 = vmatpush1.msra.mxu0 0.0
    %3776 = vmatprep.subr.mxu0 0.0
    %3777 = vmatpush1.msra.mxu0 0.0
    %3778 = vmatprep.subr.mxu0 0.0
    %3779 = vmatpush1.msra.mxu0 0.0
    %3780 = vmatprep.subr.mxu0 0.0
    %3781 = vmatpush1.msra.mxu0 0.0
    %3782 = vmatprep.subr.mxu0 0.0
    %3783 = vmatpush1.msra.mxu0 0.0
    %3784 = vmatprep.subr.mxu0 0.0
    %3785 = vmatpush1.msra.mxu0 0.0
    %3786 = vmatprep.subr.mxu0 0.0
    %3787 = vmatpush1.msra.mxu0 0.0
    %3788 = vmatprep.subr.mxu0 0.0
    %3789 = vmatpush1.msra.mxu0 0.0
    %3790 = vmatprep.subr.mxu0 0.0
    %3791 = vmatpush1.msra.mxu0 0.0
    %3792 = vmatprep.subr.mxu0 0.0
    %3793 = vmatpush1.msra.mxu0 0.0
    %3794 = vmatprep.subr.mxu0 0.0
    %3795 = vmatpush1.msra.mxu0 0.0
    %3796 = vmatprep.mubr.f32.mxu0 0.0
    %3797 = vmatmul.mubr.f32.gmra.mrb[0].mxu0 %v3727
    %v3798 = vpop.f32.mrb[0].mxu0
    %v3799 = vadd.f32 %v3724, %v3798
    %v3800 = vpop.f32.mrb[0].mxu0
    %3801 = vmatprep.mubr.f32.mxu0 0.0
    %3802 = vmatmul.mubr.f32.gmra.mrb[0].mxu0 %v3730
    %v3803 = vpop.f32.mrb[0].mxu0
    %v3804 = vadd.f32 %v3724, %v3803
    %v3805 = vpop.f32.mrb[0].mxu0
    %3806 = vdwg.mxu0
    %v3807 = vmul.f32 %v3799, %v3799
    %v3808 = vmul.f32 %v3804, %v3804
    %v3809 = vmul.f32 %v3799, %v3807
    %v3810 = vmul.f32 %v3804, %v3808
    %v3811 = vmul.f32 %v3809, 0.044715
    %v3812 = vmul.f32 %v3810, 0.044715
    %v3813 = vadd.f32 %v3799, %v3811
    %v3814 = vadd.f32 %v3804, %v3812
    %v3815 = vmul.f32 %v3813, 0.7978846
    %v3816 = vmul.f32 %v3814, 0.7978846
    %v3817 = vtanh.pop %v3815
    %v3818 = vtanh.pop %v3816
    %v3819 = vadd.f32 %v3817, 1.0
    %v3820 = vadd.f32 %v3818, 1.0
    %v3821 = vmul.f32 %v3819, 0.5
    %v3822 = vmul.f32 %v3820, 0.5
    %v3823 = vmul.f32 %v3799, %v3821
    %v3824 = vmul.f32 %v3804, %v3822
    %s3825 = scalar_lea.vmem %s4, 64
    %v3826 = vld [vmem:[%s3825] sm:$0xff]
    %v3827 = vld [vmem:[%s3825 + $0x8] sm:$0xff]
    %v3828 = vld [vmem:[%s3825 + $0x10] sm:$0xff]
    %v3829 = vld [vmem:[%s3825 + $0x18] sm:$0xff]
    %v3830 = vld [vmem:[%s3825 + $0x20] sm:$0xff]
    %v3831 = vld [vmem:[%s3825 + $0x28] sm:$0xff]
    %v3832 = vld [vmem:[%s3825 + $0x30] sm:$0xff]
    %v3833 = vld [vmem:[%s3825 + $0x38] sm:$0xff]
    %s3834 = scalar_lea.vmem %s6, 15
    %v3835 = vld [vmem:[%s3834] sm:$0x1]
    %v3837 = vlaneseq
    %v3838 = vshrl.u32 %v3837, 7
    %v3839 = vsub.s32 0, %v3838
    %v3840 = vrot.slane %v3835, %v3839
    %v3843 = vsel %vm1969, %v3823, 0
    %v3846 = vsel %vm1969, %v3824, 0
    %3848 = vmatprep.subr.mxu0 0.0
    %3849 = vmatpush1.msra.mxu0 %v3826
    %3850 = vmatprep.subr.mxu0 0.0
    %3851 = vmatpush1.msra.mxu0 %v3827
    %3852 = vmatprep.subr.mxu0 0.0
    %3853 = vmatpush1.msra.mxu0 %v3828
    %3854 = vmatprep.subr.mxu0 0.0
    %3855 = vmatpush1.msra.mxu0 %v3829
    %3856 = vmatprep.subr.mxu0 0.0
    %3857 = vmatpush1.msra.mxu0 %v3830
    %3858 = vmatprep.subr.mxu0 0.0
    %3859 = vmatpush1.msra.mxu0 %v3831
    %3860 = vmatprep.subr.mxu0 0.0
    %3861 = vmatpush1.msra.mxu0 %v3832
    %3862 = vmatprep.subr.mxu0 0.0
    %3863 = vmatpush1.msra.mxu0 %v3833
    %3864 = vmatprep.subr.mxu0 0.0
    %3865 = vmatpush1.msra.mxu0 0.0
    %3866 = vmatprep.subr.mxu0 0.0
    %3867 = vmatpush1.msra.mxu0 0.0
    %3868 = vmatprep.subr.mxu0 0.0
    %3869 = vmatpush1.msra.mxu0 0.0
    %3870 = vmatprep.subr.mxu0 0.0
    %3871 = vmatpush1.msra.mxu0 0.0
    %3872 = vmatprep.subr.mxu0 0.0
    %3873 = vmatpush1.msra.mxu0 0.0
    %3874 = vmatprep.subr.mxu0 0.0
    %3875 = vmatpush1.msra.mxu0 0.0
    %3876 = vmatprep.subr.mxu0 0.0
    %3877 = vmatpush1.msra.mxu0 0.0
    %3878 = vmatprep.subr.mxu0 0.0
    %3879 = vmatpush1.msra.mxu0 0.0
    %3880 = vmatprep.subr.mxu0 0.0
    %3881 = vmatpush1.msra.mxu0 0.0
    %3882 = vmatprep.subr.mxu0 0.0
    %3883 = vmatpush1.msra.mxu0 0.0
    %3884 = vmatprep.subr.mxu0 0.0
    %3885 = vmatpush1.msra.mxu0 0.0
    %3886 = vmatprep.subr.mxu0 0.0
    %3887 = vmatpush1.msra.mxu0 0.0
    %3888 = vmatprep.subr.mxu0 0.0
    %3889 = vmatpush1.msra.mxu0 0.0
    %3890 = vmatprep.subr.mxu0 0.0
    %3891 = vmatpush1.msra.mxu0 0.0
    %3892 = vmatprep.subr.mxu0 0.0
    %3893 = vmatpush1.msra.mxu0 0.0
    %3894 = vmatprep.subr.mxu0 0.0
    %3895 = vmatpush1.msra.mxu0 0.0
    %3896 = vmatprep.subr.mxu0 0.0
    %3897 = vmatpush1.msra.mxu0 0.0
    %3898 = vmatprep.subr.mxu0 0.0
    %3899 = vmatpush1.msra.mxu0 0.0
    %3900 = vmatprep.subr.mxu0 0.0
    %3901 = vmatpush1.msra.mxu0 0.0
    %3902 = vmatprep.subr.mxu0 0.0
    %3903 = vmatpush1.msra.mxu0 0.0
    %3904 = vmatprep.subr.mxu0 0.0
    %3905 = vmatpush1.msra.mxu0 0.0
    %3906 = vmatprep.subr.mxu0 0.0
    %3907 = vmatpush1.msra.mxu0 0.0
    %3908 = vmatprep.subr.mxu0 0.0
    %3909 = vmatpush1.msra.mxu0 0.0
    %3910 = vmatprep.subr.mxu0 0.0
    %3911 = vmatpush1.msra.mxu0 0.0
    %3912 = vmatprep.mubr.f32.mxu0 0.0
    %3913 = vmatmul.mubr.f32.gmra.mrb[0].mxu0 %v3843
    %v3914 = vpop.f32.mrb[0].mxu0
    %v3915 = vadd.f32 %v3840, %v3914
    %v3916 = vpop.f32.mrb[0].mxu0
    %3917 = vmatprep.mubr.f32.mxu0 0.0
    %3918 = vmatmul.mubr.f32.gmra.mrb[0].mxu0 %v3846
    %v3919 = vpop.f32.mrb[0].mxu0
    %v3920 = vadd.f32 %v3840, %v3919
    %v3921 = vpop.f32.mrb[0].mxu0
    %3922 = vdwg.mxu0
    %v3923 = vadd.f32 %v3915, %v3712
    %v3924 = vadd.f32 %v3920, %v3713
    %s3925 = scalar_lea.vmem %s6, 16
    %v3926 = vld [vmem:[%s3925] sm:$0x1]
    %s3927 = scalar_lea.vmem %s6, 17
    %v3928 = vld [vmem:[%s3927] sm:$0x1]
    %v3929 = vsel %vm144, %v3923, 0.0
    %3930 = vadd.xlane.f32.xlu0 %v3929
    %v3931 = vpop.xlane.xlu0 %3930
    %v3932 = vsel %vm144, %v3924, 0.0
    %3933 = vadd.xlane.f32.xlu0 %v3932
    %v3934 = vpop.xlane.xlu0 %3933
    %v3935 = vmul.f32 %v3931, %v151
    %v3936 = vmul.f32 %v3934, %v151
    %v3937 = vsub.f32 %v3923, %v3935
    %v3938 = vsub.f32 %v3924, %v3936
    %v3939 = vmul.f32 %v3937, %v3937
    %v3940 = vmul.f32 %v3938, %v3938
    %v3941 = vsel %vm144, %v3939, 0.0
    %3942 = vadd.xlane.f32.xlu0 %v3941
    %v3943 = vpop.xlane.xlu0 %3942
    %v3944 = vsel %vm144, %v3940, 0.0
    %3945 = vadd.xlane.f32.xlu0 %v3944
    %v3946 = vpop.xlane.xlu0 %3945
    %v3947 = vmul.f32 %v3943, %v151
    %v3948 = vmul.f32 %v3946, %v151
    %v3949 = vadd.f32 %v3947, 1e-12
    %v3950 = vadd.f32 %v3948, 1e-12
    %v3951 = vrsqrt.pop %v3949
    %v3952 = vrsqrt.pop %v3950
    %v3953 = vmul.f32 %v3937, %v3951
    %v3954 = vmul.f32 %v3938, %v3952
    %v3956 = vlaneseq
    %v3957 = vshrl.u32 %v3956, 7
    %v3958 = vsub.s32 0, %v3957
    %v3959 = vrot.slane %v3926, %v3958
    %v3961 = vmul.f32 %v3953, %v3959
    %v3962 = vmul.f32 %v3954, %v3959
    %v3964 = vlaneseq
    %v3965 = vshrl.u32 %v3964, 7
    %v3966 = vsub.s32 0, %v3965
    %v3967 = vrot.slane %v3928, %v3966
    %v3969 = vadd.f32 %v3961, %v3967
    %v3970 = vadd.f32 %v3962, %v3967
    %v3971 = vld [vmem:[%s5] sm:$0xff]
    %v3972 = vld [vmem:[%s5 + $0x8] sm:$0xff]
    %v3973 = vld [vmem:[%s5 + $0x10] sm:$0xff]
    %v3974 = vld [vmem:[%s5 + $0x18] sm:$0xff]
    %s3975 = scalar_lea.vmem %s6, 18
    %v3976 = vld [vmem:[%s3975] sm:$0x1]
    %v3978 = vlaneseq
    %v3979 = vshrl.u32 %v3978, 7
    %v3980 = vsub.s32 0, %v3979
    %v3981 = vrot.slane %v3976, %v3980
    %v3985 = vrot.slane %v3970, 7
    %vm3986 = vcmask 1041409
    %v3987 = vsel %vm3986, %v3985, %v3969
    %v3988 = vsel %vm144, %v3987, 0
    %3990 = vmatprep.subr.mxu0 0.0
    %3991 = vmatpush1.msra.mxu0 %v3971
    %3992 = vmatprep.subr.mxu0 0.0
    %3993 = vmatpush1.msra.mxu0 %v3972
    %3994 = vmatprep.subr.mxu0 0.0
    %3995 = vmatpush1.msra.mxu0 %v3973
    %3996 = vmatprep.subr.mxu0 0.0
    %3997 = vmatpush1.msra.mxu0 %v3974
    %3998 = vmatprep.subr.mxu0 0.0
    %3999 = vmatpush1.msra.mxu0 0.0
    %4000 = vmatprep.subr.mxu0 0.0
    %4001 = vmatpush1.msra.mxu0 0.0
    %4002 = vmatprep.subr.mxu0 0.0
    %4003 = vmatpush1.msra.mxu0 0.0
    %4004 = vmatprep.subr.mxu0 0.0
    %4005 = vmatpush1.msra.mxu0 0.0
    %4006 = vmatprep.subr.mxu0 0.0
    %4007 = vmatpush1.msra.mxu0 0.0
    %4008 = vmatprep.subr.mxu0 0.0
    %4009 = vmatpush1.msra.mxu0 0.0
    %4010 = vmatprep.subr.mxu0 0.0
    %4011 = vmatpush1.msra.mxu0 0.0
    %4012 = vmatprep.subr.mxu0 0.0
    %4013 = vmatpush1.msra.mxu0 0.0
    %4014 = vmatprep.subr.mxu0 0.0
    %4015 = vmatpush1.msra.mxu0 0.0
    %4016 = vmatprep.subr.mxu0 0.0
    %4017 = vmatpush1.msra.mxu0 0.0
    %4018 = vmatprep.subr.mxu0 0.0
    %4019 = vmatpush1.msra.mxu0 0.0
    %4020 = vmatprep.subr.mxu0 0.0
    %4021 = vmatpush1.msra.mxu0 0.0
    %4022 = vmatprep.subr.mxu0 0.0
    %4023 = vmatpush1.msra.mxu0 0.0
    %4024 = vmatprep.subr.mxu0 0.0
    %4025 = vmatpush1.msra.mxu0 0.0
    %4026 = vmatprep.subr.mxu0 0.0
    %4027 = vmatpush1.msra.mxu0 0.0
    %4028 = vmatprep.subr.mxu0 0.0
    %4029 = vmatpush1.msra.mxu0 0.0
    %4030 = vmatprep.subr.mxu0 0.0
    %4031 = vmatpush1.msra.mxu0 0.0
    %4032 = vmatprep.subr.mxu0 0.0
    %4033 = vmatpush1.msra.mxu0 0.0
    %4034 = vmatprep.subr.mxu0 0.0
    %4035 = vmatpush1.msra.mxu0 0.0
    %4036 = vmatprep.subr.mxu0 0.0
    %4037 = vmatpush1.msra.mxu0 0.0
    %4038 = vmatprep.subr.mxu0 0.0
    %4039 = vmatpush1.msra.mxu0 0.0
    %4040 = vmatprep.subr.mxu0 0.0
    %4041 = vmatpush1.msra.mxu0 0.0
    %4042 = vmatprep.subr.mxu0 0.0
    %4043 = vmatpush1.msra.mxu0 0.0
    %4044 = vmatprep.subr.mxu0 0.0
    %4045 = vmatpush1.msra.mxu0 0.0
    %4046 = vmatprep.subr.mxu0 0.0
    %4047 = vmatpush1.msra.mxu0 0.0
    %4048 = vmatprep.subr.mxu0 0.0
    %4049 = vmatpush1.msra.mxu0 0.0
    %4050 = vmatprep.subr.mxu0 0.0
    %4051 = vmatpush1.msra.mxu0 0.0
    %4052 = vmatprep.subr.mxu0 0.0
    %4053 = vmatpush1.msra.mxu0 0.0
    %4054 = vmatprep.mubr.f32.mxu0 0.0
    %4055 = vmatmul.mubr.f32.gmra.mrb[0].mxu0 %v3988
    %v4056 = vpop.f32.mrb[0].mxu0
    %v4057 = vadd.f32 %v3981, %v4056
    %v4058 = vpop.f32.mrb[0].mxu0
    %4059 = vdwg.mxu0
    %v4060 = vtanh.pop %v4057
    %s4061 = scalar_lea.vmem %s6, 19
    %v4062 = vld [vmem:[%s4061] sm:$0x1]
    %v4064 = vlaneseq
    %v4065 = vshrl.u32 %v4064, 7
    %v4066 = vsub.s32 0, %v4065
    %v4067 = vrot.slane %v4062, %v4066
    %4073 = vrot.lane.b32.xlu0 %v3971, 96
    %v4074 = vpop.permute.xlu0 %4073
    %4075 = vrot.lane.b32.xlu0 %v3972, 96
    %v4076 = vpop.permute.xlu0 %4075
    %4077 = vrot.lane.b32.xlu0 %v3973, 96
    %v4078 = vpop.permute.xlu0 %4077
    %4079 = vrot.lane.b32.xlu0 %v3974, 96
    %v4080 = vpop.permute.xlu0 %4079
    %v4086 = vsel %vm144, %v4060, 0
    %4088 = vmatprep.subr.mxu0 0.0
    %4089 = vmatpush1.msra.mxu0 %v4074
    %4090 = vmatprep.subr.mxu0 0.0
    %4091 = vmatpush1.msra.mxu0 %v4076
    %4092 = vmatprep.subr.mxu0 0.0
    %4093 = vmatpush1.msra.mxu0 %v4078
    %4094 = vmatprep.subr.mxu0 0.0
    %4095 = vmatpush1.msra.mxu0 %v4080
    %4096 = vmatprep.subr.mxu0 0.0
    %4097 = vmatpush1.msra.mxu0 0.0
    %4098 = vmatprep.subr.mxu0 0.0
    %4099 = vmatpush1.msra.mxu0 0.0
    %4100 = vmatprep.subr.mxu0 0.0
    %4101 = vmatpush1.msra.mxu0 0.0
    %4102 = vmatprep.subr.mxu0 0.0
    %4103 = vmatpush1.msra.mxu0 0.0
    %4104 = vmatprep.subr.mxu0 0.0
    %4105 = vmatpush1.msra.mxu0 0.0
    %4106 = vmatprep.subr.mxu0 0.0
    %4107 = vmatpush1.msra.mxu0 0.0
    %4108 = vmatprep.subr.mxu0 0.0
    %4109 = vmatpush1.msra.mxu0 0.0
    %4110 = vmatprep.subr.mxu0 0.0
    %4111 = vmatpush1.msra.mxu0 0.0
    %4112 = vmatprep.subr.mxu0 0.0
    %4113 = vmatpush1.msra.mxu0 0.0
    %4114 = vmatprep.subr.mxu0 0.0
    %4115 = vmatpush1.msra.mxu0 0.0
    %4116 = vmatprep.subr.mxu0 0.0
    %4117 = vmatpush1.msra.mxu0 0.0
    %4118 = vmatprep.subr.mxu0 0.0
    %4119 = vmatpush1.msra.mxu0 0.0
    %4120 = vmatprep.subr.mxu0 0.0
    %4121 = vmatpush1.msra.mxu0 0.0
    %4122 = vmatprep.subr.mxu0 0.0
    %4123 = vmatpush1.msra.mxu0 0.0
    %4124 = vmatprep.subr.mxu0 0.0
    %4125 = vmatpush1.msra.mxu0 0.0
    %4126 = vmatprep.subr.mxu0 0.0
    %4127 = vmatpush1.msra.mxu0 0.0
    %4128 = vmatprep.subr.mxu0 0.0
    %4129 = vmatpush1.msra.mxu0 0.0
    %4130 = vmatprep.subr.mxu0 0.0
    %4131 = vmatpush1.msra.mxu0 0.0
    %4132 = vmatprep.subr.mxu0 0.0
    %4133 = vmatpush1.msra.mxu0 0.0
    %4134 = vmatprep.subr.mxu0 0.0
    %4135 = vmatpush1.msra.mxu0 0.0
    %4136 = vmatprep.subr.mxu0 0.0
    %4137 = vmatpush1.msra.mxu0 0.0
    %4138 = vmatprep.subr.mxu0 0.0
    %4139 = vmatpush1.msra.mxu0 0.0
    %4140 = vmatprep.subr.mxu0 0.0
    %4141 = vmatpush1.msra.mxu0 0.0
    %4142 = vmatprep.subr.mxu0 0.0
    %4143 = vmatpush1.msra.mxu0 0.0
    %4144 = vmatprep.subr.mxu0 0.0
    %4145 = vmatpush1.msra.mxu0 0.0
    %4146 = vmatprep.subr.mxu0 0.0
    %4147 = vmatpush1.msra.mxu0 0.0
    %4148 = vmatprep.subr.mxu0 0.0
    %4149 = vmatpush1.msra.mxu0 0.0
    %4150 = vmatprep.subr.mxu0 0.0
    %4151 = vmatpush1.msra.mxu0 0.0
    %4152 = vmatprep.mubr.f32.mxu0 0.0
    %4153 = vmatmul.mubr.f32.gmra.mrb[0].mxu0 %v4086
    %v4154 = vpop.f32.mrb[0].mxu0
    %v4155 = vadd.f32 %v4067, %v4154
    %v4156 = vpop.f32.mrb[0].mxu0
    %4157 = vdwg.mxu0
    %vm4158 = vcmask 17408
    %4159 = vst.msk [vmem:[#allocation2] sm:$0x3] %vm4158, %v4155
    // Predicated region
    $region30: #{sentiment_classifier_forward.1} parent=1 // pred_check
      _
    $region31: #{sentiment_classifier_forward.1} parent=1 // pred_check_branch
      %4161 = sbr.rel (0) target = $region33
    $region32: #{sentiment_classifier_forward.1} parent=1 // pred_region
      %s4163 = ssub.s32 32, 32
      %4164 = vsyncadd [#allocation3], %s4163
      %s4166 = sshll.u32 [#allocation2], 4
      %s4167 = int_to_ptr.vmem [resolvable:$true] %s4166
      %4169 = dma.vmem_to_hbm [thread:$0]  %s4167, 32, %s7, [#allocation3]
    $region33: #{sentiment_classifier_forward.1} parent=1 // pred_fallthru
      _
    // Predicated region
    $region34: #{sentiment_classifier_forward.1} parent=1 // pred_check
      _
    $region35: #{sentiment_classifier_forward.1} parent=1 // pred_check_branch
      %4171 = sbr.rel (0) target = $region37
    $region36: #{sentiment_classifier_forward.1} parent=1 // pred_region
      %4172 = dma.done [#allocation3], 32
    $region37: #{sentiment_classifier_forward.1} parent=1 // pred_fallthru
      _
    %4173 = vsyncpa [#allocation3], 1

</llo_original>
